<compile_context>
chip_gen: v7x
topology: tpu7x:2x2x1
jax: 0.10.0
libtpu: 0.0.40
codegen_flags: <defaults>
</compile_context>

<pallas_src>
import functools

import jax
import jax.numpy as jnp
from jax import lax
from jax.experimental import pallas as pl
from jax.experimental.pallas import tpu as pltpu


_LPAD = 8   # left-halo columns so the interior store starts sublane-aligned


# ---------------------------------------------------------------------------
# Kernel
# ---------------------------------------------------------------------------
def _bottleneck_kernel(x_ref, w1_ref, b1_ref, w2_ref, b2_ref, w3_ref, b3_ref,
                       o_ref, pbuf):
    # x_ref : (Bt, H, W, Cp)     o_ref : (Bt, H, W, Cp)   (Cp = padded Cin = Cout)
    # w1_ref: (Cp, Wp)           w3_ref: (Wp, Cp)         (Wp = padded width)
    # w2_ref: (9, Wp, Wp)        [ky*3+kx, ci, co], block-diagonal over groups
    # b*_ref: (1, Wp|Cp)         folded BatchNorm biases (scales in the weights)
    # pbuf  : (Bt, H+2, _LPAD+W+1, Wp) scratch in compute dtype; zero halo around
    #         the conv2 input, interior starting at column _LPAD.
    Bt, H, W, Cp = x_ref.shape
    Wp = w1_ref.shape[1]
    cdt = w1_ref.dtype                      # matmul compute dtype (f32 or bf16)
    HW = Bt * H * W
    WTOT = _LPAD + W + 1

    # ---- conv1 (1x1, BN1 scale folded) + bias + relu -------------------------
    h1 = jnp.dot(x_ref[...].reshape(HW, Cp).astype(cdt), w1_ref[...],
                 preferred_element_type=jnp.float32)
    h1 = jnp.maximum(h1 + b1_ref[...], 0.0)

    # ---- stage conv2 input: re-zero only the 1-px halo, overwrite interior ---
    pbuf[:, 0:1, :, :] = jnp.zeros((Bt, 1, WTOT, Wp), cdt)
    pbuf[:, H + 1:H + 2, :, :] = jnp.zeros((Bt, 1, WTOT, Wp), cdt)
    pbuf[:, :, 0:_LPAD, :] = jnp.zeros((Bt, H + 2, _LPAD, Wp), cdt)
    pbuf[:, :, _LPAD + W:WTOT, :] = jnp.zeros((Bt, H + 2, 1, Wp), cdt)
    pbuf[:, 1:H + 1, _LPAD:_LPAD + W, :] = h1.astype(cdt).reshape(Bt, H, W, Wp)

    # ---- conv2 (3x3 grouped realised as block-diag dense) + bias + relu ------
    # Nine K=Wp matmuls accumulated in f32; no concatenate / pre-cast copies.
    acc = None
    for ky in range(3):
        for kx in range(3):
            c0 = _LPAD - 1 + kx
            patch = pbuf[:, ky:ky + H, c0:c0 + W, :]
            tap = jnp.dot(patch.reshape(HW, Wp), w2_ref[ky * 3 + kx],
                          preferred_element_type=jnp.float32)
            acc = tap if acc is None else acc + tap
    h2 = jnp.maximum(acc + b2_ref[...], 0.0)

    # ---- conv3 (1x1, BN3 scale folded) + bias --------------------------------
    h3 = jnp.dot(h2.astype(cdt), w3_ref[...],
                 preferred_element_type=jnp.float32) + b3_ref[...]

    # ---- residual add (downsample=None -> identity) + relu -------------------
    res = x_ref[...].reshape(HW, Cp).astype(jnp.float32)
    out = jnp.maximum(h3 + res, 0.0)
    o_ref[...] = out.reshape(Bt, H, W, Cp).astype(o_ref.dtype)


# ---------------------------------------------------------------------------
# pallas_call wrapper
# ---------------------------------------------------------------------------
def _batch_index_map(n):
    return (n, 0, 0, 0)


def _const_index_map(rank):
    zeros = (0,) * rank

    def idx(n):
        return zeros

    return idx


def bottleneck_pallas(x_nhwc, w1, b1, w2f, b2, w3, b3, *, block_n,
                      vmem_limit_bytes, single_buffer_weights=True):
    N, H, W, Cp = x_nhwc.shape
    Wp = w1.shape[1]
    assert N % block_n == 0
    cdt = w1.dtype

    def const_spec(arr):
        idx = _const_index_map(arr.ndim)
        if single_buffer_weights:
            # Grid-invariant inputs: DMA'd once, single VMEM buffer.
            return pl.BlockSpec(arr.shape, idx, pipeline_mode=pl.Buffered(1))
        return pl.BlockSpec(arr.shape, idx)

    grid_spec = pltpu.PrefetchScalarGridSpec(
        num_scalar_prefetch=0,
        grid=(N // block_n,),
        in_specs=[
            pl.BlockSpec((block_n, H, W, Cp), _batch_index_map),
            const_spec(w1), const_spec(b1),
            const_spec(w2f), const_spec(b2),
            const_spec(w3), const_spec(b3),
        ],
        out_specs=pl.BlockSpec((block_n, H, W, Cp), _batch_index_map),
        scratch_shapes=[pltpu.VMEM((block_n, H + 2, _LPAD + W + 1, Wp), cdt)],
    )
    return pl.pallas_call(
        _bottleneck_kernel,
        out_shape=jax.ShapeDtypeStruct((N, H, W, Cp), x_nhwc.dtype),
        grid_spec=grid_spec,
        compiler_params=pltpu.CompilerParams(
            # Batch steps are fully independent -> shard across TCs on v7x.
            dimension_semantics=("parallel",),
            vmem_limit_bytes=int(vmem_limit_bytes)),
    )(x_nhwc, w1, b1, w2f, b2, w3, b3)


# ---------------------------------------------------------------------------
# Parameter preparation (one-time, wrapper-side)
# ---------------------------------------------------------------------------
def _round_up(x, m):
    return ((x + m - 1) // m) * m


def _fold_bn(gamma, beta, mean, var, eps=1e-5):
    scale = gamma / jnp.sqrt(var + eps)
    bias = beta - mean * scale
    return scale, bias


def _prepare_params(w1_pt, bn1, w2_pt, bn2, w3_pt, bn3, groups, compute_dtype):
    width, inplanes = w1_pt.shape[0], w1_pt.shape[1]
    cout = w3_pt.shape[0]
    gci = width // groups
    gco = width // groups

    s1, b1 = _fold_bn(*bn1)
    s2, b2 = _fold_bn(*bn2)
    s3, b3 = _fold_bn(*bn3)

    Cp = _round_up(max(inplanes, cout), 128)   # lane-dense channels
    Wp = _round_up(width, 128)

    # conv1: (Cin, width) with BN1 scale folded into output channels, padded.
    w1_k = (w1_pt[:, :, 0, 0] * s1[:, None]).T                      # (Cin, width)
    w1_k = jnp.zeros((Cp, Wp), jnp.float32).at[:inplanes, :width].set(w1_k)
    b1_k = jnp.zeros((1, Wp), jnp.float32).at[0, :width].set(b1)

    # conv2: block-diagonal dense taps (BN2 folded), (9, Wp, Wp) [ky*3+kx, ci, co].
    w2_dense = jnp.zeros((3, 3, width, width), jnp.float32)         # [ky,kx,ci,co]
    for g in range(groups):
        blk = jnp.transpose(w2_pt[g * gco:(g + 1) * gco], (2, 3, 1, 0))  # (3,3,gci,gco)
        w2_dense = w2_dense.at[:, :, g * gci:(g + 1) * gci,
                               g * gco:(g + 1) * gco].set(blk)
    w2_dense = w2_dense * s2[None, None, None, :]
    w2_p = jnp.zeros((3, 3, Wp, Wp), jnp.float32).at[:, :, :width, :width].set(w2_dense)
    w2f = w2_p.reshape(9, Wp, Wp)
    b2_k = jnp.zeros((1, Wp), jnp.float32).at[0, :width].set(b2)

    # conv3: (width, Cout) with BN3 scale folded, padded.
    w3_k = (w3_pt[:, :, 0, 0] * s3[:, None]).T                      # (width, cout)
    w3_k = jnp.zeros((Wp, Cp), jnp.float32).at[:width, :cout].set(w3_k)
    b3_k = jnp.zeros((1, Cp), jnp.float32).at[0, :cout].set(b3)

    cast = lambda w: w.astype(compute_dtype)
    return cast(w1_k), b1_k, cast(w2f), b2_k, cast(w3_k), b3_k, Cp, Wp


# ---------------------------------------------------------------------------
# VMEM budgeting / block size selection (generation-aware)
# ---------------------------------------------------------------------------
def _vmem_limit_bytes():
    cap = None
    try:
        info = pltpu.get_tpu_info()
        cap = getattr(info, "vmem_capacity_bytes", None)
    except Exception:
        cap = None
    if not cap:
        cap = 64 * 1024 * 1024        # assume v7x-sized per-core VMEM if unknown
    # ~45% of physical: ~57 MiB on v5e/v6e (128 MiB), ~29 MiB on v7x (64 MiB/TC).
    return max(16 * 1024 * 1024, int(cap * 0.45))


def _estimate_vmem_bytes(bt, H, W, Cp, Wp, csz, iosz):
    plane_c = bt * H * W * Cp
    plane_w = bt * H * W * Wp
    # weights/biases (single-buffered); double it anyway as safety margin for
    # the fallback (default double-buffered) path.
    weights = 2 * ((Cp * Wp + 9 * Wp * Wp + Wp * Cp) * csz + (2 * Wp + Cp) * 4)
    io = 2 * plane_c * iosz + 2 * plane_c * iosz          # in + out, double-buffered
    pbuf = bt * (H + 2) * (_LPAD + W + 1) * Wp * csz
    # conv2 patch copy + f32 accumulator + f32 h1/h2 temps + f32 h3/residual.
    temps = plane_w * (2 * csz + 3 * 4) + plane_c * (2 * 4)
    return weights + io + pbuf + temps


def _pick_block_n(N, H, W, Cp, Wp, csz, iosz, budget, min_steps):
    best = 1
    for d in range(1, N + 1):
        if N % d:
            continue
        if N // d < min_steps:
            continue
        if _estimate_vmem_bytes(d, H, W, Cp, Wp, csz, iosz) <= budget:
            best = max(best, d)
    return best


# ---------------------------------------------------------------------------
# Full forward (eval-mode BN), NCHW in / NCHW out
# ---------------------------------------------------------------------------
def bottleneck_forward(x_nchw, w1_pt, bn1, w2_pt, bn2, w3_pt, bn3, *,
                       groups, compute_dtype=jnp.float32):
    N, Cin, H, W = x_nchw.shape
    cout = w3_pt.shape[0]
    assert Cin == cout, "identity path requires inplanes == planes * expansion"

    w1k, b1k, w2f, b2k, w3k, b3k, Cp, Wp = _prepare_params(
        w1_pt, bn1, w2_pt, bn2, w3_pt, bn3, groups, compute_dtype)

    x_nhwc = jnp.transpose(x_nchw, (0, 2, 3, 1))
    if Cp != Cin:
        x_nhwc = jnp.pad(x_nhwc, ((0, 0), (0, 0), (0, 0), (0, Cp - Cin)))

    vmem_limit = _vmem_limit_bytes()
    budget = int(vmem_limit * 0.85)
    csz = jnp.dtype(compute_dtype).itemsize
    iosz = jnp.dtype(x_nhwc.dtype).itemsize
    min_steps = min(N, 4)                      # >=2 for overlap, >=4 for v7x TCs
    block_n = _pick_block_n(N, H, W, Cp, Wp, csz, iosz, budget, min_steps)

    run = functools.partial(bottleneck_pallas, x_nhwc, w1k, b1k, w2f, b2k, w3k,
                            b3k, block_n=block_n, vmem_limit_bytes=vmem_limit)
    try:
        out = jax.block_until_ready(run(single_buffer_weights=True))
    except Exception:
        # Fallback if this JAX build rejects pl.Buffered(1) single-buffering.
        out = run(single_buffer_weights=False)

    out = out[..., :cout]
    return jnp.transpose(out, (0, 3, 1, 2))


# ---------------------------------------------------------------------------
# Pure-JAX reference (eval-mode BN), NCHW
# ---------------------------------------------------------------------------
def _reference_nchw(x, w1_pt, bn1, w2_pt, bn2, w3_pt, bn3, groups):
    dn = ('NCHW', 'OIHW', 'NCHW')

    def bn(o, params):
        s, b = _fold_bn(*params)
        return o * s[None, :, None, None] + b[None, :, None, None]

    out = lax.conv_general_dilated(x, w1_pt, (1, 1), 'VALID', dimension_numbers=dn)
    out = jnp.maximum(bn(out, bn1), 0.0)
    out = lax.conv_general_dilated(out, w2_pt, (1, 1), ((1, 1), (1, 1)),
                                   dimension_numbers=dn, feature_group_count=groups)
    out = jnp.maximum(bn(out, bn2), 0.0)
    out = lax.conv_general_dilated(out, w3_pt, (1, 1), 'VALID', dimension_numbers=dn)
    out = bn(out, bn3)
    return jnp.maximum(out + x, 0.0)


# ---------------------------------------------------------------------------
# Test driver
# ---------------------------------------------------------------------------
if __name__ == "__main__":
    # Module hyperparameters (small, but exercise the grouped / ResNeXt path).
    inplanes, planes, groups, base_width = 16, 4, 2, 64
    expansion = 4
    width = int(planes * (base_width / 64.0)) * groups      # = 8
    cout = planes * expansion                                # = 16 (== inplanes)
    N, H, W = 2, 8, 8

    key = jax.random.PRNGKey(0)
    keys = jax.random.split(key, 16)

    # PyTorch-layout conv weights (OIHW), bias=False everywhere.
    w1_pt = 0.1 * jax.random.normal(keys[0], (width, inplanes, 1, 1), jnp.float32)
    w2_pt = 0.1 * jax.random.normal(keys[1], (width, width // groups, 3, 3), jnp.float32)
    w3_pt = 0.1 * jax.random.normal(keys[2], (cout, width, 1, 1), jnp.float32)

    def bn_params(k, c):
        k1, k2, k3, k4 = jax.random.split(k, 4)
        gamma = 1.0 + 0.1 * jax.random.normal(k1, (c,), jnp.float32)
        beta = 0.1 * jax.random.normal(k2, (c,), jnp.float32)
        mean = 0.1 * jax.random.normal(k3, (c,), jnp.float32)
        var = jax.random.uniform(k4, (c,), jnp.float32, 0.5, 1.5)
        return gamma, beta, mean, var

    bn1 = bn_params(keys[3], width)
    bn2 = bn_params(keys[4], width)
    bn3 = bn_params(keys[5], cout)

    # Input in PyTorch NCHW layout.
    x_nchw = jax.random.normal(keys[6], (N, inplanes, H, W), jnp.float32)

    ref = jax.block_until_ready(
        _reference_nchw(x_nchw, w1_pt, bn1, w2_pt, bn2, w3_pt, bn3, groups))

    # f32 matmul path (exact check vs reference).
    out_f32 = jax.block_until_ready(
        bottleneck_forward(x_nchw, w1_pt, bn1, w2_pt, bn2, w3_pt, bn3,
                           groups=groups, compute_dtype=jnp.float32))
    assert out_f32.shape == (N, cout, H, W)
    if not jnp.allclose(out_f32, ref, atol=1e-4, rtol=1e-4):
        raise AssertionError("Pallas Bottleneck (f32) does not match reference")

    # bf16 matmul operands / f32 accumulation path (loose check).
    out_bf16 = jax.block_until_ready(
        bottleneck_forward(x_nchw, w1_pt, bn1, w2_pt, bn2, w3_pt, bn3,
                           groups=groups, compute_dtype=jnp.bfloat16))
    if not jnp.allclose(out_bf16, ref, atol=2e-2, rtol=2e-2):
        raise AssertionError("Pallas Bottleneck (bf16) does not match reference")

    print("KERNEL_OK")
</pallas_src>

<mosaic_0001>
module attributes {stable_mosaic.version = 11 : i64} {
  func.func @_bottleneck_kernel(%arg0: i32, %arg1: memref<1x8x8x128xf32, #tpu.memory_space<vmem>>, %arg2: memref<128x128xf32, #tpu.memory_space<vmem>>, %arg3: memref<1x128xf32, #tpu.memory_space<vmem>>, %arg4: memref<9x128x128xf32, #tpu.memory_space<vmem>>, %arg5: memref<1x128xf32, #tpu.memory_space<vmem>>, %arg6: memref<128x128xf32, #tpu.memory_space<vmem>>, %arg7: memref<1x128xf32, #tpu.memory_space<vmem>>, %arg8: memref<1x8x8x128xf32, #tpu.memory_space<vmem>>, %arg9: memref<1x10x17x128xf32, #tpu.memory_space<vmem>>) attributes {dimension_semantics = [#tpu.dimension_semantics<parallel>], iteration_bounds = array<i64: 2>, scalar_prefetch = 0 : i64, scratch_operands = 1 : i64, tpu.core_type = #tpu.core_type<tc>, window_params = [{transform_indices = @transform_0, window_bounds = array<i64: 1, 8, 8, 128>}, {pipeline_mode = #tpu.pipeline_mode<synchronous>, transform_indices = @transform_1, window_bounds = array<i64: 128, 128>}, {pipeline_mode = #tpu.pipeline_mode<synchronous>, transform_indices = @transform_2, window_bounds = array<i64: 1, 128>}, {pipeline_mode = #tpu.pipeline_mode<synchronous>, transform_indices = @transform_3, window_bounds = array<i64: 9, 128, 128>}, {pipeline_mode = #tpu.pipeline_mode<synchronous>, transform_indices = @transform_4, window_bounds = array<i64: 1, 128>}, {pipeline_mode = #tpu.pipeline_mode<synchronous>, transform_indices = @transform_5, window_bounds = array<i64: 128, 128>}, {pipeline_mode = #tpu.pipeline_mode<synchronous>, transform_indices = @transform_6, window_bounds = array<i64: 1, 128>}, {transform_indices = @transform_7, window_bounds = array<i64: 1, 8, 8, 128>}]} {
    %c0 = arith.constant 0 : index
    %c0_0 = arith.constant 0 : index
    %c0_1 = arith.constant 0 : index
    %c0_2 = arith.constant 0 : index
    %0 = vector.load %arg1[%c0, %c0_0, %c0_1, %c0_2] : memref<1x8x8x128xf32, #tpu.memory_space<vmem>>, vector<1x8x8x128xf32>
    %1 = vector.shape_cast %0 : vector<1x8x8x128xf32> to vector<64x128xf32>
    %c0_3 = arith.constant 0 : index
    %c0_4 = arith.constant 0 : index
    %2 = vector.load %arg2[%c0_3, %c0_4] : memref<128x128xf32, #tpu.memory_space<vmem>>, vector<128x128xf32>
    %cst = arith.constant dense<0.000000e+00> : vector<64x128xf32>
    %3 = tpu.matmul %1, %2, %cst {dimension_numbers = #tpu.dot_dimension_numbers<[1], [0], [0], [1], [0, 0, 1, 1], [], []>} : vector<64x128xf32>, vector<128x128xf32>, vector<64x128xf32> -> vector<64x128xf32>
    %c0_5 = arith.constant 0 : index
    %c0_6 = arith.constant 0 : index
    %4 = vector.load %arg3[%c0_5, %c0_6] : memref<1x128xf32, #tpu.memory_space<vmem>>, vector<1x128xf32>
    %5 = vector.broadcast %4 : vector<1x128xf32> to vector<64x128xf32>
    %6 = arith.addf %3, %5 : vector<64x128xf32>
    %cst_7 = arith.constant 0.000000e+00 : f32
    %7 = vector.broadcast %cst_7 : f32 to vector<64x128xf32>
    %8 = arith.maximumf %6, %7 : vector<64x128xf32>
    %cst_8 = arith.constant 0.000000e+00 : f32
    %9 = vector.broadcast %cst_8 : f32 to vector<1x1x17x128xf32>
    %c0_9 = arith.constant 0 : index
    %c0_10 = arith.constant 0 : index
    %c0_11 = arith.constant 0 : index
    %c0_12 = arith.constant 0 : index
    %10 = vector.load %arg9[%c0_9, %c0_10, %c0_11, %c0_12] : memref<1x10x17x128xf32, #tpu.memory_space<vmem>>, vector<1x1x17x128xf32>
    tpu.vector_store %arg9[%c0_9, %c0_10, %c0_11, %c0_12], %9 {strides = array<i32>} : memref<1x10x17x128xf32, #tpu.memory_space<vmem>>, vector<1x1x17x128xf32>,
    %cst_13 = arith.constant 0.000000e+00 : f32
    %11 = vector.broadcast %cst_13 : f32 to vector<1x1x17x128xf32>
    %c0_14 = arith.constant 0 : index
    %c9 = arith.constant 9 : index
    %c0_15 = arith.constant 0 : index
    %c0_16 = arith.constant 0 : index
    %12 = vector.load %arg9[%c0_14, %c9, %c0_15, %c0_16] : memref<1x10x17x128xf32, #tpu.memory_space<vmem>>, vector<1x1x17x128xf32>
    tpu.vector_store %arg9[%c0_14, %c9, %c0_15, %c0_16], %11 {strides = array<i32>} : memref<1x10x17x128xf32, #tpu.memory_space<vmem>>, vector<1x1x17x128xf32>,
    %cst_17 = arith.constant 0.000000e+00 : f32
    %13 = vector.broadcast %cst_17 : f32 to vector<1x10x8x128xf32>
    %c0_18 = arith.constant 0 : index
    %c0_19 = arith.constant 0 : index
    %c0_20 = arith.constant 0 : index
    %c0_21 = arith.constant 0 : index
    %14 = vector.load %arg9[%c0_18, %c0_19, %c0_20, %c0_21] : memref<1x10x17x128xf32, #tpu.memory_space<vmem>>, vector<1x10x8x128xf32>
    tpu.vector_store %arg9[%c0_18, %c0_19, %c0_20, %c0_21], %13 {strides = array<i32>} : memref<1x10x17x128xf32, #tpu.memory_space<vmem>>, vector<1x10x8x128xf32>,
    %cst_22 = arith.constant 0.000000e+00 : f32
    %15 = vector.broadcast %cst_22 : f32 to vector<1x10x1x128xf32>
    %c0_23 = arith.constant 0 : index
    %c0_24 = arith.constant 0 : index
    %c16 = arith.constant 16 : index
    %c0_25 = arith.constant 0 : index
    %16 = vector.load %arg9[%c0_23, %c0_24, %c16, %c0_25] : memref<1x10x17x128xf32, #tpu.memory_space<vmem>>, vector<1x10x1x128xf32>
    tpu.vector_store %arg9[%c0_23, %c0_24, %c16, %c0_25], %15 {strides = array<i32>} : memref<1x10x17x128xf32, #tpu.memory_space<vmem>>, vector<1x10x1x128xf32>,
    %17 = vector.shape_cast %8 : vector<64x128xf32> to vector<1x8x8x128xf32>
    %c0_26 = arith.constant 0 : index
    %c1 = arith.constant 1 : index
    %c8 = arith.constant 8 : index
    %c0_27 = arith.constant 0 : index
    %18 = vector.load %arg9[%c0_26, %c1, %c8, %c0_27] : memref<1x10x17x128xf32, #tpu.memory_space<vmem>>, vector<1x8x8x128xf32>
    tpu.vector_store %arg9[%c0_26, %c1, %c8, %c0_27], %17 {strides = array<i32>} : memref<1x10x17x128xf32, #tpu.memory_space<vmem>>, vector<1x8x8x128xf32>,
    %c0_28 = arith.constant 0 : index
    %c0_29 = arith.constant 0 : index
    %c7 = arith.constant 7 : index
    %c0_30 = arith.constant 0 : index
    %19 = vector.load %arg9[%c0_28, %c0_29, %c7, %c0_30] : memref<1x10x17x128xf32, #tpu.memory_space<vmem>>, vector<1x8x8x128xf32>
    %20 = vector.shape_cast %19 : vector<1x8x8x128xf32> to vector<64x128xf32>
    %c0_31 = arith.constant 0 : index
    %c0_32 = arith.constant 0 : index
    %c0_33 = arith.constant 0 : index
    %21 = vector.load %arg4[%c0_31, %c0_32, %c0_33] : memref<9x128x128xf32, #tpu.memory_space<vmem>>, vector<1x128x128xf32>
    %22 = vector.shape_cast %21 : vector<1x128x128xf32> to vector<128x128xf32>
    %cst_34 = arith.constant dense<0.000000e+00> : vector<64x128xf32>
    %23 = tpu.matmul %20, %22, %cst_34 {dimension_numbers = #tpu.dot_dimension_numbers<[1], [0], [0], [1], [0, 0, 1, 1], [], []>} : vector<64x128xf32>, vector<128x128xf32>, vector<64x128xf32> -> vector<64x128xf32>
    %c0_35 = arith.constant 0 : index
    %c0_36 = arith.constant 0 : index
    %c8_37 = arith.constant 8 : index
    %c0_38 = arith.constant 0 : index
    %24 = vector.load %arg9[%c0_35, %c0_36, %c8_37, %c0_38] : memref<1x10x17x128xf32, #tpu.memory_space<vmem>>, vector<1x8x8x128xf32>
    %25 = vector.shape_cast %24 : vector<1x8x8x128xf32> to vector<64x128xf32>
    %c1_39 = arith.constant 1 : index
    %c0_40 = arith.constant 0 : index
    %c0_41 = arith.constant 0 : index
    %26 = vector.load %arg4[%c1_39, %c0_40, %c0_41] : memref<9x128x128xf32, #tpu.memory_space<vmem>>, vector<1x128x128xf32>
    %27 = vector.shape_cast %26 : vector<1x128x128xf32> to vector<128x128xf32>
    %cst_42 = arith.constant dense<0.000000e+00> : vector<64x128xf32>
    %28 = tpu.matmul %25, %27, %cst_42 {dimension_numbers = #tpu.dot_dimension_numbers<[1], [0], [0], [1], [0, 0, 1, 1], [], []>} : vector<64x128xf32>, vector<128x128xf32>, vector<64x128xf32> -> vector<64x128xf32>
    %29 = arith.addf %23, %28 : vector<64x128xf32>
    %c0_43 = arith.constant 0 : index
    %c0_44 = arith.constant 0 : index
    %c9_45 = arith.constant 9 : index
    %c0_46 = arith.constant 0 : index
    %30 = vector.load %arg9[%c0_43, %c0_44, %c9_45, %c0_46] : memref<1x10x17x128xf32, #tpu.memory_space<vmem>>, vector<1x8x8x128xf32>
    %31 = vector.shape_cast %30 : vector<1x8x8x128xf32> to vector<64x128xf32>
    %c2 = arith.constant 2 : index
    %c0_47 = arith.constant 0 : index
    %c0_48 = arith.constant 0 : index
    %32 = vector.load %arg4[%c2, %c0_47, %c0_48] : memref<9x128x128xf32, #tpu.memory_space<vmem>>, vector<1x128x128xf32>
    %33 = vector.shape_cast %32 : vector<1x128x128xf32> to vector<128x128xf32>
    %cst_49 = arith.constant dense<0.000000e+00> : vector<64x128xf32>
    %34 = tpu.matmul %31, %33, %cst_49 {dimension_numbers = #tpu.dot_dimension_numbers<[1], [0], [0], [1], [0, 0, 1, 1], [], []>} : vector<64x128xf32>, vector<128x128xf32>, vector<64x128xf32> -> vector<64x128xf32>
    %35 = arith.addf %29, %34 : vector<64x128xf32>
    %c0_50 = arith.constant 0 : index
    %c1_51 = arith.constant 1 : index
    %c7_52 = arith.constant 7 : index
    %c0_53 = arith.constant 0 : index
    %36 = vector.load %arg9[%c0_50, %c1_51, %c7_52, %c0_53] : memref<1x10x17x128xf32, #tpu.memory_space<vmem>>, vector<1x8x8x128xf32>
    %37 = vector.shape_cast %36 : vector<1x8x8x128xf32> to vector<64x128xf32>
    %c3 = arith.constant 3 : index
    %c0_54 = arith.constant 0 : index
    %c0_55 = arith.constant 0 : index
    %38 = vector.load %arg4[%c3, %c0_54, %c0_55] : memref<9x128x128xf32, #tpu.memory_space<vmem>>, vector<1x128x128xf32>
    %39 = vector.shape_cast %38 : vector<1x128x128xf32> to vector<128x128xf32>
    %cst_56 = arith.constant dense<0.000000e+00> : vector<64x128xf32>
    %40 = tpu.matmul %37, %39, %cst_56 {dimension_numbers = #tpu.dot_dimension_numbers<[1], [0], [0], [1], [0, 0, 1, 1], [], []>} : vector<64x128xf32>, vector<128x128xf32>, vector<64x128xf32> -> vector<64x128xf32>
    %41 = arith.addf %35, %40 : vector<64x128xf32>
    %c0_57 = arith.constant 0 : index
    %c1_58 = arith.constant 1 : index
    %c8_59 = arith.constant 8 : index
    %c0_60 = arith.constant 0 : index
    %42 = vector.load %arg9[%c0_57, %c1_58, %c8_59, %c0_60] : memref<1x10x17x128xf32, #tpu.memory_space<vmem>>, vector<1x8x8x128xf32>
    %43 = vector.shape_cast %42 : vector<1x8x8x128xf32> to vector<64x128xf32>
    %c4 = arith.constant 4 : index
    %c0_61 = arith.constant 0 : index
    %c0_62 = arith.constant 0 : index
    %44 = vector.load %arg4[%c4, %c0_61, %c0_62] : memref<9x128x128xf32, #tpu.memory_space<vmem>>, vector<1x128x128xf32>
    %45 = vector.shape_cast %44 : vector<1x128x128xf32> to vector<128x128xf32>
    %cst_63 = arith.constant dense<0.000000e+00> : vector<64x128xf32>
    %46 = tpu.matmul %43, %45, %cst_63 {dimension_numbers = #tpu.dot_dimension_numbers<[1], [0], [0], [1], [0, 0, 1, 1], [], []>} : vector<64x128xf32>, vector<128x128xf32>, vector<64x128xf32> -> vector<64x128xf32>
    %47 = arith.addf %41, %46 : vector<64x128xf32>
    %c0_64 = arith.constant 0 : index
    %c1_65 = arith.constant 1 : index
    %c9_66 = arith.constant 9 : index
    %c0_67 = arith.constant 0 : index
    %48 = vector.load %arg9[%c0_64, %c1_65, %c9_66, %c0_67] : memref<1x10x17x128xf32, #tpu.memory_space<vmem>>, vector<1x8x8x128xf32>
    %49 = vector.shape_cast %48 : vector<1x8x8x128xf32> to vector<64x128xf32>
    %c5 = arith.constant 5 : index
    %c0_68 = arith.constant 0 : index
    %c0_69 = arith.constant 0 : index
    %50 = vector.load %arg4[%c5, %c0_68, %c0_69] : memref<9x128x128xf32, #tpu.memory_space<vmem>>, vector<1x128x128xf32>
    %51 = vector.shape_cast %50 : vector<1x128x128xf32> to vector<128x128xf32>
    %cst_70 = arith.constant dense<0.000000e+00> : vector<64x128xf32>
    %52 = tpu.matmul %49, %51, %cst_70 {dimension_numbers = #tpu.dot_dimension_numbers<[1], [0], [0], [1], [0, 0, 1, 1], [], []>} : vector<64x128xf32>, vector<128x128xf32>, vector<64x128xf32> -> vector<64x128xf32>
    %53 = arith.addf %47, %52 : vector<64x128xf32>
    %c0_71 = arith.constant 0 : index
    %c2_72 = arith.constant 2 : index
    %c7_73 = arith.constant 7 : index
    %c0_74 = arith.constant 0 : index
    %54 = vector.load %arg9[%c0_71, %c2_72, %c7_73, %c0_74] : memref<1x10x17x128xf32, #tpu.memory_space<vmem>>, vector<1x8x8x128xf32>
    %55 = vector.shape_cast %54 : vector<1x8x8x128xf32> to vector<64x128xf32>
    %c6 = arith.constant 6 : index
    %c0_75 = arith.constant 0 : index
    %c0_76 = arith.constant 0 : index
    %56 = vector.load %arg4[%c6, %c0_75, %c0_76] : memref<9x128x128xf32, #tpu.memory_space<vmem>>, vector<1x128x128xf32>
    %57 = vector.shape_cast %56 : vector<1x128x128xf32> to vector<128x128xf32>
    %cst_77 = arith.constant dense<0.000000e+00> : vector<64x128xf32>
    %58 = tpu.matmul %55, %57, %cst_77 {dimension_numbers = #tpu.dot_dimension_numbers<[1], [0], [0], [1], [0, 0, 1, 1], [], []>} : vector<64x128xf32>, vector<128x128xf32>, vector<64x128xf32> -> vector<64x128xf32>
    %59 = arith.addf %53, %58 : vector<64x128xf32>
    %c0_78 = arith.constant 0 : index
    %c2_79 = arith.constant 2 : index
    %c8_80 = arith.constant 8 : index
    %c0_81 = arith.constant 0 : index
    %60 = vector.load %arg9[%c0_78, %c2_79, %c8_80, %c0_81] : memref<1x10x17x128xf32, #tpu.memory_space<vmem>>, vector<1x8x8x128xf32>
    %61 = vector.shape_cast %60 : vector<1x8x8x128xf32> to vector<64x128xf32>
    %c7_82 = arith.constant 7 : index
    %c0_83 = arith.constant 0 : index
    %c0_84 = arith.constant 0 : index
    %62 = vector.load %arg4[%c7_82, %c0_83, %c0_84] : memref<9x128x128xf32, #tpu.memory_space<vmem>>, vector<1x128x128xf32>
    %63 = vector.shape_cast %62 : vector<1x128x128xf32> to vector<128x128xf32>
    %cst_85 = arith.constant dense<0.000000e+00> : vector<64x128xf32>
    %64 = tpu.matmul %61, %63, %cst_85 {dimension_numbers = #tpu.dot_dimension_numbers<[1], [0], [0], [1], [0, 0, 1, 1], [], []>} : vector<64x128xf32>, vector<128x128xf32>, vector<64x128xf32> -> vector<64x128xf32>
    %65 = arith.addf %59, %64 : vector<64x128xf32>
    %c0_86 = arith.constant 0 : index
    %c2_87 = arith.constant 2 : index
    %c9_88 = arith.constant 9 : index
    %c0_89 = arith.constant 0 : index
    %66 = vector.load %arg9[%c0_86, %c2_87, %c9_88, %c0_89] : memref<1x10x17x128xf32, #tpu.memory_space<vmem>>, vector<1x8x8x128xf32>
    %67 = vector.shape_cast %66 : vector<1x8x8x128xf32> to vector<64x128xf32>
    %c8_90 = arith.constant 8 : index
    %c0_91 = arith.constant 0 : index
    %c0_92 = arith.constant 0 : index
    %68 = vector.load %arg4[%c8_90, %c0_91, %c0_92] : memref<9x128x128xf32, #tpu.memory_space<vmem>>, vector<1x128x128xf32>
    %69 = vector.shape_cast %68 : vector<1x128x128xf32> to vector<128x128xf32>
    %cst_93 = arith.constant dense<0.000000e+00> : vector<64x128xf32>
    %70 = tpu.matmul %67, %69, %cst_93 {dimension_numbers = #tpu.dot_dimension_numbers<[1], [0], [0], [1], [0, 0, 1, 1], [], []>} : vector<64x128xf32>, vector<128x128xf32>, vector<64x128xf32> -> vector<64x128xf32>
    %71 = arith.addf %65, %70 : vector<64x128xf32>
    %c0_94 = arith.constant 0 : index
    %c0_95 = arith.constant 0 : index
    %72 = vector.load %arg5[%c0_94, %c0_95] : memref<1x128xf32, #tpu.memory_space<vmem>>, vector<1x128xf32>
    %73 = vector.broadcast %72 : vector<1x128xf32> to vector<64x128xf32>
    %74 = arith.addf %71, %73 : vector<64x128xf32>
    %cst_96 = arith.constant 0.000000e+00 : f32
    %75 = vector.broadcast %cst_96 : f32 to vector<64x128xf32>
    %76 = arith.maximumf %74, %75 : vector<64x128xf32>
    %c0_97 = arith.constant 0 : index
    %c0_98 = arith.constant 0 : index
    %77 = vector.load %arg6[%c0_97, %c0_98] : memref<128x128xf32, #tpu.memory_space<vmem>>, vector<128x128xf32>
    %cst_99 = arith.constant dense<0.000000e+00> : vector<64x128xf32>
    %78 = tpu.matmul %76, %77, %cst_99 {dimension_numbers = #tpu.dot_dimension_numbers<[1], [0], [0], [1], [0, 0, 1, 1], [], []>} : vector<64x128xf32>, vector<128x128xf32>, vector<64x128xf32> -> vector<64x128xf32>
    %c0_100 = arith.constant 0 : index
    %c0_101 = arith.constant 0 : index
    %79 = vector.load %arg7[%c0_100, %c0_101] : memref<1x128xf32, #tpu.memory_space<vmem>>, vector<1x128xf32>
    %80 = vector.broadcast %79 : vector<1x128xf32> to vector<64x128xf32>
    %81 = arith.addf %78, %80 : vector<64x128xf32>
    %c0_102 = arith.constant 0 : index
    %c0_103 = arith.constant 0 : index
    %c0_104 = arith.constant 0 : index
    %c0_105 = arith.constant 0 : index
    %82 = vector.load %arg1[%c0_102, %c0_103, %c0_104, %c0_105] : memref<1x8x8x128xf32, #tpu.memory_space<vmem>>, vector<1x8x8x128xf32>
    %83 = vector.shape_cast %82 : vector<1x8x8x128xf32> to vector<64x128xf32>
    %84 = arith.addf %81, %83 : vector<64x128xf32>
    %cst_106 = arith.constant 0.000000e+00 : f32
    %85 = vector.broadcast %cst_106 : f32 to vector<64x128xf32>
    %86 = arith.maximumf %84, %85 : vector<64x128xf32>
    %87 = vector.shape_cast %86 : vector<64x128xf32> to vector<1x8x8x128xf32>
    %c0_107 = arith.constant 0 : index
    %c0_108 = arith.constant 0 : index
    %c0_109 = arith.constant 0 : index
    %c0_110 = arith.constant 0 : index
    %88 = vector.load %arg8[%c0_107, %c0_108, %c0_109, %c0_110] : memref<1x8x8x128xf32, #tpu.memory_space<vmem>>, vector<1x8x8x128xf32>
    tpu.vector_store %arg8[%c0_107, %c0_108, %c0_109, %c0_110], %87 {strides = array<i32>} : memref<1x8x8x128xf32, #tpu.memory_space<vmem>>, vector<1x8x8x128xf32>,
    return
  }
  func.func @transform_0(%arg0: i32) -> (i32, i32, i32, i32) {
    %c0_i32 = arith.constant 0 : i32
    %c0_i32_0 = arith.constant 0 : i32
    %c0_i32_1 = arith.constant 0 : i32
    %c0_i32_2 = arith.constant 0 : i32
    return %arg0, %c0_i32, %c0_i32_0, %c0_i32_1 : i32, i32, i32, i32
  }
  func.func @transform_1(%arg0: i32) -> (i32, i32) {
    %c0_i32 = arith.constant 0 : i32
    %c0_i32_0 = arith.constant 0 : i32
    %c0_i32_1 = arith.constant 0 : i32
    return %c0_i32, %c0_i32_0 : i32, i32
  }
  func.func @transform_2(%arg0: i32) -> (i32, i32) {
    %c0_i32 = arith.constant 0 : i32
    %c0_i32_0 = arith.constant 0 : i32
    %c0_i32_1 = arith.constant 0 : i32
    return %c0_i32, %c0_i32_0 : i32, i32
  }
  func.func @transform_3(%arg0: i32) -> (i32, i32, i32) {
    %c0_i32 = arith.constant 0 : i32
    %c0_i32_0 = arith.constant 0 : i32
    %c0_i32_1 = arith.constant 0 : i32
    %c0_i32_2 = arith.constant 0 : i32
    return %c0_i32, %c0_i32_0, %c0_i32_1 : i32, i32, i32
  }
  func.func @transform_4(%arg0: i32) -> (i32, i32) {
    %c0_i32 = arith.constant 0 : i32
    %c0_i32_0 = arith.constant 0 : i32
    %c0_i32_1 = arith.constant 0 : i32
    return %c0_i32, %c0_i32_0 : i32, i32
  }
  func.func @transform_5(%arg0: i32) -> (i32, i32) {
    %c0_i32 = arith.constant 0 : i32
    %c0_i32_0 = arith.constant 0 : i32
    %c0_i32_1 = arith.constant 0 : i32
    return %c0_i32, %c0_i32_0 : i32, i32
  }
  func.func @transform_6(%arg0: i32) -> (i32, i32) {
    %c0_i32 = arith.constant 0 : i32
    %c0_i32_0 = arith.constant 0 : i32
    %c0_i32_1 = arith.constant 0 : i32
    return %c0_i32, %c0_i32_0 : i32, i32
  }
  func.func @transform_7(%arg0: i32) -> (i32, i32, i32, i32) {
    %c0_i32 = arith.constant 0 : i32
    %c0_i32_0 = arith.constant 0 : i32
    %c0_i32_1 = arith.constant 0 : i32
    %c0_i32_2 = arith.constant 0 : i32
    return %arg0, %c0_i32, %c0_i32_0, %c0_i32_1 : i32, i32, i32, i32
  }
}

module attributes {stable_mosaic.version = 11 : i64} {
  func.func @_bottleneck_kernel(%arg0: i32, %arg1: memref<1x8x8x128xf32, #tpu.memory_space<vmem>>, %arg2: memref<128x128xf32, #tpu.memory_space<vmem>>, %arg3: memref<1x128xf32, #tpu.memory_space<vmem>>, %arg4: memref<9x128x128xf32, #tpu.memory_space<vmem>>, %arg5: memref<1x128xf32, #tpu.memory_space<vmem>>, %arg6: memref<128x128xf32, #tpu.memory_space<vmem>>, %arg7: memref<1x128xf32, #tpu.memory_space<vmem>>, %arg8: memref<1x8x8x128xf32, #tpu.memory_space<vmem>>, %arg9: memref<1x10x17x128xf32, #tpu.memory_space<vmem>>) attributes {dimension_semantics = [#tpu.dimension_semantics<parallel>], iteration_bounds = array<i64: 2>, scalar_prefetch = 0 : i64, scratch_operands = 1 : i64, tpu.core_type = #tpu.core_type<tc>, window_params = [{transform_indices = @transform_0, window_bounds = array<i64: 1, 8, 8, 128>}, {pipeline_mode = #tpu.pipeline_mode<synchronous>, transform_indices = @transform_1, window_bounds = array<i64: 128, 128>}, {pipeline_mode = #tpu.pipeline_mode<synchronous>, transform_indices = @transform_2, window_bounds = array<i64: 1, 128>}, {pipeline_mode = #tpu.pipeline_mode<synchronous>, transform_indices = @transform_3, window_bounds = array<i64: 9, 128, 128>}, {pipeline_mode = #tpu.pipeline_mode<synchronous>, transform_indices = @transform_4, window_bounds = array<i64: 1, 128>}, {pipeline_mode = #tpu.pipeline_mode<synchronous>, transform_indices = @transform_5, window_bounds = array<i64: 128, 128>}, {pipeline_mode = #tpu.pipeline_mode<synchronous>, transform_indices = @transform_6, window_bounds = array<i64: 1, 128>}, {transform_indices = @transform_7, window_bounds = array<i64: 1, 8, 8, 128>}]} {
    %c0 = arith.constant 0 : index
    %c0_0 = arith.constant 0 : index
    %c0_1 = arith.constant 0 : index
    %c0_2 = arith.constant 0 : index
    %0 = vector.load %arg1[%c0, %c0_0, %c0_1, %c0_2] : memref<1x8x8x128xf32, #tpu.memory_space<vmem>>, vector<1x8x8x128xf32>
    %1 = vector.shape_cast %0 : vector<1x8x8x128xf32> to vector<64x128xf32>
    %c0_3 = arith.constant 0 : index
    %c0_4 = arith.constant 0 : index
    %2 = vector.load %arg2[%c0_3, %c0_4] : memref<128x128xf32, #tpu.memory_space<vmem>>, vector<128x128xf32>
    %cst = arith.constant dense<0.000000e+00> : vector<64x128xf32>
    %3 = tpu.matmul %1, %2, %cst {dimension_numbers = #tpu.dot_dimension_numbers<[1], [0], [0], [1], [0, 0, 1, 1], [], []>} : vector<64x128xf32>, vector<128x128xf32>, vector<64x128xf32> -> vector<64x128xf32>
    %c0_5 = arith.constant 0 : index
    %c0_6 = arith.constant 0 : index
    %4 = vector.load %arg3[%c0_5, %c0_6] : memref<1x128xf32, #tpu.memory_space<vmem>>, vector<1x128xf32>
    %5 = vector.broadcast %4 : vector<1x128xf32> to vector<64x128xf32>
    %6 = arith.addf %3, %5 : vector<64x128xf32>
    %cst_7 = arith.constant 0.000000e+00 : f32
    %7 = vector.broadcast %cst_7 : f32 to vector<64x128xf32>
    %8 = arith.maximumf %6, %7 : vector<64x128xf32>
    %cst_8 = arith.constant 0.000000e+00 : f32
    %9 = vector.broadcast %cst_8 : f32 to vector<1x1x17x128xf32>
    %c0_9 = arith.constant 0 : index
    %c0_10 = arith.constant 0 : index
    %c0_11 = arith.constant 0 : index
    %c0_12 = arith.constant 0 : index
    %10 = vector.load %arg9[%c0_9, %c0_10, %c0_11, %c0_12] : memref<1x10x17x128xf32, #tpu.memory_space<vmem>>, vector<1x1x17x128xf32>
    tpu.vector_store %arg9[%c0_9, %c0_10, %c0_11, %c0_12], %9 {strides = array<i32>} : memref<1x10x17x128xf32, #tpu.memory_space<vmem>>, vector<1x1x17x128xf32>,
    %cst_13 = arith.constant 0.000000e+00 : f32
    %11 = vector.broadcast %cst_13 : f32 to vector<1x1x17x128xf32>
    %c0_14 = arith.constant 0 : index
    %c9 = arith.constant 9 : index
    %c0_15 = arith.constant 0 : index
    %c0_16 = arith.constant 0 : index
    %12 = vector.load %arg9[%c0_14, %c9, %c0_15, %c0_16] : memref<1x10x17x128xf32, #tpu.memory_space<vmem>>, vector<1x1x17x128xf32>
    tpu.vector_store %arg9[%c0_14, %c9, %c0_15, %c0_16], %11 {strides = array<i32>} : memref<1x10x17x128xf32, #tpu.memory_space<vmem>>, vector<1x1x17x128xf32>,
    %cst_17 = arith.constant 0.000000e+00 : f32
    %13 = vector.broadcast %cst_17 : f32 to vector<1x10x8x128xf32>
    %c0_18 = arith.constant 0 : index
    %c0_19 = arith.constant 0 : index
    %c0_20 = arith.constant 0 : index
    %c0_21 = arith.constant 0 : index
    %14 = vector.load %arg9[%c0_18, %c0_19, %c0_20, %c0_21] : memref<1x10x17x128xf32, #tpu.memory_space<vmem>>, vector<1x10x8x128xf32>
    tpu.vector_store %arg9[%c0_18, %c0_19, %c0_20, %c0_21], %13 {strides = array<i32>} : memref<1x10x17x128xf32, #tpu.memory_space<vmem>>, vector<1x10x8x128xf32>,
    %cst_22 = arith.constant 0.000000e+00 : f32
    %15 = vector.broadcast %cst_22 : f32 to vector<1x10x1x128xf32>
    %c0_23 = arith.constant 0 : index
    %c0_24 = arith.constant 0 : index
    %c16 = arith.constant 16 : index
    %c0_25 = arith.constant 0 : index
    %16 = vector.load %arg9[%c0_23, %c0_24, %c16, %c0_25] : memref<1x10x17x128xf32, #tpu.memory_space<vmem>>, vector<1x10x1x128xf32>
    tpu.vector_store %arg9[%c0_23, %c0_24, %c16, %c0_25], %15 {strides = array<i32>} : memref<1x10x17x128xf32, #tpu.memory_space<vmem>>, vector<1x10x1x128xf32>,
    %17 = vector.shape_cast %8 : vector<64x128xf32> to vector<1x8x8x128xf32>
    %c0_26 = arith.constant 0 : index
    %c1 = arith.constant 1 : index
    %c8 = arith.constant 8 : index
    %c0_27 = arith.constant 0 : index
    %18 = vector.load %arg9[%c0_26, %c1, %c8, %c0_27] : memref<1x10x17x128xf32, #tpu.memory_space<vmem>>, vector<1x8x8x128xf32>
    tpu.vector_store %arg9[%c0_26, %c1, %c8, %c0_27], %17 {strides = array<i32>} : memref<1x10x17x128xf32, #tpu.memory_space<vmem>>, vector<1x8x8x128xf32>,
    %c0_28 = arith.constant 0 : index
    %c0_29 = arith.constant 0 : index
    %c7 = arith.constant 7 : index
    %c0_30 = arith.constant 0 : index
    %19 = vector.load %arg9[%c0_28, %c0_29, %c7, %c0_30] : memref<1x10x17x128xf32, #tpu.memory_space<vmem>>, vector<1x8x8x128xf32>
    %20 = vector.shape_cast %19 : vector<1x8x8x128xf32> to vector<64x128xf32>
    %c0_31 = arith.constant 0 : index
    %c0_32 = arith.constant 0 : index
    %c0_33 = arith.constant 0 : index
    %21 = vector.load %arg4[%c0_31, %c0_32, %c0_33] : memref<9x128x128xf32, #tpu.memory_space<vmem>>, vector<1x128x128xf32>
    %22 = vector.shape_cast %21 : vector<1x128x128xf32> to vector<128x128xf32>
    %cst_34 = arith.constant dense<0.000000e+00> : vector<64x128xf32>
    %23 = tpu.matmul %20, %22, %cst_34 {dimension_numbers = #tpu.dot_dimension_numbers<[1], [0], [0], [1], [0, 0, 1, 1], [], []>} : vector<64x128xf32>, vector<128x128xf32>, vector<64x128xf32> -> vector<64x128xf32>
    %c0_35 = arith.constant 0 : index
    %c0_36 = arith.constant 0 : index
    %c8_37 = arith.constant 8 : index
    %c0_38 = arith.constant 0 : index
    %24 = vector.load %arg9[%c0_35, %c0_36, %c8_37, %c0_38] : memref<1x10x17x128xf32, #tpu.memory_space<vmem>>, vector<1x8x8x128xf32>
    %25 = vector.shape_cast %24 : vector<1x8x8x128xf32> to vector<64x128xf32>
    %c1_39 = arith.constant 1 : index
    %c0_40 = arith.constant 0 : index
    %c0_41 = arith.constant 0 : index
    %26 = vector.load %arg4[%c1_39, %c0_40, %c0_41] : memref<9x128x128xf32, #tpu.memory_space<vmem>>, vector<1x128x128xf32>
    %27 = vector.shape_cast %26 : vector<1x128x128xf32> to vector<128x128xf32>
    %cst_42 = arith.constant dense<0.000000e+00> : vector<64x128xf32>
    %28 = tpu.matmul %25, %27, %cst_42 {dimension_numbers = #tpu.dot_dimension_numbers<[1], [0], [0], [1], [0, 0, 1, 1], [], []>} : vector<64x128xf32>, vector<128x128xf32>, vector<64x128xf32> -> vector<64x128xf32>
    %29 = arith.addf %23, %28 : vector<64x128xf32>
    %c0_43 = arith.constant 0 : index
    %c0_44 = arith.constant 0 : index
    %c9_45 = arith.constant 9 : index
    %c0_46 = arith.constant 0 : index
    %30 = vector.load %arg9[%c0_43, %c0_44, %c9_45, %c0_46] : memref<1x10x17x128xf32, #tpu.memory_space<vmem>>, vector<1x8x8x128xf32>
    %31 = vector.shape_cast %30 : vector<1x8x8x128xf32> to vector<64x128xf32>
    %c2 = arith.constant 2 : index
    %c0_47 = arith.constant 0 : index
    %c0_48 = arith.constant 0 : index
    %32 = vector.load %arg4[%c2, %c0_47, %c0_48] : memref<9x128x128xf32, #tpu.memory_space<vmem>>, vector<1x128x128xf32>
    %33 = vector.shape_cast %32 : vector<1x128x128xf32> to vector<128x128xf32>
    %cst_49 = arith.constant dense<0.000000e+00> : vector<64x128xf32>
    %34 = tpu.matmul %31, %33, %cst_49 {dimension_numbers = #tpu.dot_dimension_numbers<[1], [0], [0], [1], [0, 0, 1, 1], [], []>} : vector<64x128xf32>, vector<128x128xf32>, vector<64x128xf32> -> vector<64x128xf32>
    %35 = arith.addf %29, %34 : vector<64x128xf32>
    %c0_50 = arith.constant 0 : index
    %c1_51 = arith.constant 1 : index
    %c7_52 = arith.constant 7 : index
    %c0_53 = arith.constant 0 : index
    %36 = vector.load %arg9[%c0_50, %c1_51, %c7_52, %c0_53] : memref<1x10x17x128xf32, #tpu.memory_space<vmem>>, vector<1x8x8x128xf32>
    %37 = vector.shape_cast %36 : vector<1x8x8x128xf32> to vector<64x128xf32>
    %c3 = arith.constant 3 : index
    %c0_54 = arith.constant 0 : index
    %c0_55 = arith.constant 0 : index
    %38 = vector.load %arg4[%c3, %c0_54, %c0_55] : memref<9x128x128xf32, #tpu.memory_space<vmem>>, vector<1x128x128xf32>
    %39 = vector.shape_cast %38 : vector<1x128x128xf32> to vector<128x128xf32>
    %cst_56 = arith.constant dense<0.000000e+00> : vector<64x128xf32>
    %40 = tpu.matmul %37, %39, %cst_56 {dimension_numbers = #tpu.dot_dimension_numbers<[1], [0], [0], [1], [0, 0, 1, 1], [], []>} : vector<64x128xf32>, vector<128x128xf32>, vector<64x128xf32> -> vector<64x128xf32>
    %41 = arith.addf %35, %40 : vector<64x128xf32>
    %c0_57 = arith.constant 0 : index
    %c1_58 = arith.constant 1 : index
    %c8_59 = arith.constant 8 : index
    %c0_60 = arith.constant 0 : index
    %42 = vector.load %arg9[%c0_57, %c1_58, %c8_59, %c0_60] : memref<1x10x17x128xf32, #tpu.memory_space<vmem>>, vector<1x8x8x128xf32>
    %43 = vector.shape_cast %42 : vector<1x8x8x128xf32> to vector<64x128xf32>
    %c4 = arith.constant 4 : index
    %c0_61 = arith.constant 0 : index
    %c0_62 = arith.constant 0 : index
    %44 = vector.load %arg4[%c4, %c0_61, %c0_62] : memref<9x128x128xf32, #tpu.memory_space<vmem>>, vector<1x128x128xf32>
    %45 = vector.shape_cast %44 : vector<1x128x128xf32> to vector<128x128xf32>
    %cst_63 = arith.constant dense<0.000000e+00> : vector<64x128xf32>
    %46 = tpu.matmul %43, %45, %cst_63 {dimension_numbers = #tpu.dot_dimension_numbers<[1], [0], [0], [1], [0, 0, 1, 1], [], []>} : vector<64x128xf32>, vector<128x128xf32>, vector<64x128xf32> -> vector<64x128xf32>
    %47 = arith.addf %41, %46 : vector<64x128xf32>
    %c0_64 = arith.constant 0 : index
    %c1_65 = arith.constant 1 : index
    %c9_66 = arith.constant 9 : index
    %c0_67 = arith.constant 0 : index
    %48 = vector.load %arg9[%c0_64, %c1_65, %c9_66, %c0_67] : memref<1x10x17x128xf32, #tpu.memory_space<vmem>>, vector<1x8x8x128xf32>
    %49 = vector.shape_cast %48 : vector<1x8x8x128xf32> to vector<64x128xf32>
    %c5 = arith.constant 5 : index
    %c0_68 = arith.constant 0 : index
    %c0_69 = arith.constant 0 : index
    %50 = vector.load %arg4[%c5, %c0_68, %c0_69] : memref<9x128x128xf32, #tpu.memory_space<vmem>>, vector<1x128x128xf32>
    %51 = vector.shape_cast %50 : vector<1x128x128xf32> to vector<128x128xf32>
    %cst_70 = arith.constant dense<0.000000e+00> : vector<64x128xf32>
    %52 = tpu.matmul %49, %51, %cst_70 {dimension_numbers = #tpu.dot_dimension_numbers<[1], [0], [0], [1], [0, 0, 1, 1], [], []>} : vector<64x128xf32>, vector<128x128xf32>, vector<64x128xf32> -> vector<64x128xf32>
    %53 = arith.addf %47, %52 : vector<64x128xf32>
    %c0_71 = arith.constant 0 : index
    %c2_72 = arith.constant 2 : index
    %c7_73 = arith.constant 7 : index
    %c0_74 = arith.constant 0 : index
    %54 = vector.load %arg9[%c0_71, %c2_72, %c7_73, %c0_74] : memref<1x10x17x128xf32, #tpu.memory_space<vmem>>, vector<1x8x8x128xf32>
    %55 = vector.shape_cast %54 : vector<1x8x8x128xf32> to vector<64x128xf32>
    %c6 = arith.constant 6 : index
    %c0_75 = arith.constant 0 : index
    %c0_76 = arith.constant 0 : index
    %56 = vector.load %arg4[%c6, %c0_75, %c0_76] : memref<9x128x128xf32, #tpu.memory_space<vmem>>, vector<1x128x128xf32>
    %57 = vector.shape_cast %56 : vector<1x128x128xf32> to vector<128x128xf32>
    %cst_77 = arith.constant dense<0.000000e+00> : vector<64x128xf32>
    %58 = tpu.matmul %55, %57, %cst_77 {dimension_numbers = #tpu.dot_dimension_numbers<[1], [0], [0], [1], [0, 0, 1, 1], [], []>} : vector<64x128xf32>, vector<128x128xf32>, vector<64x128xf32> -> vector<64x128xf32>
    %59 = arith.addf %53, %58 : vector<64x128xf32>
    %c0_78 = arith.constant 0 : index
    %c2_79 = arith.constant 2 : index
    %c8_80 = arith.constant 8 : index
    %c0_81 = arith.constant 0 : index
    %60 = vector.load %arg9[%c0_78, %c2_79, %c8_80, %c0_81] : memref<1x10x17x128xf32, #tpu.memory_space<vmem>>, vector<1x8x8x128xf32>
    %61 = vector.shape_cast %60 : vector<1x8x8x128xf32> to vector<64x128xf32>
    %c7_82 = arith.constant 7 : index
    %c0_83 = arith.constant 0 : index
    %c0_84 = arith.constant 0 : index
    %62 = vector.load %arg4[%c7_82, %c0_83, %c0_84] : memref<9x128x128xf32, #tpu.memory_space<vmem>>, vector<1x128x128xf32>
    %63 = vector.shape_cast %62 : vector<1x128x128xf32> to vector<128x128xf32>
    %cst_85 = arith.constant dense<0.000000e+00> : vector<64x128xf32>
    %64 = tpu.matmul %61, %63, %cst_85 {dimension_numbers = #tpu.dot_dimension_numbers<[1], [0], [0], [1], [0, 0, 1, 1], [], []>} : vector<64x128xf32>, vector<128x128xf32>, vector<64x128xf32> -> vector<64x128xf32>
    %65 = arith.addf %59, %64 : vector<64x128xf32>
    %c0_86 = arith.constant 0 : index
    %c2_87 = arith.constant 2 : index
    %c9_88 = arith.constant 9 : index
    %c0_89 = arith.constant 0 : index
    %66 = vector.load %arg9[%c0_86, %c2_87, %c9_88, %c0_89] : memref<1x10x17x128xf32, #tpu.memory_space<vmem>>, vector<1x8x8x128xf32>
    %67 = vector.shape_cast %66 : vector<1x8x8x128xf32> to vector<64x128xf32>
    %c8_90 = arith.constant 8 : index
    %c0_91 = arith.constant 0 : index
    %c0_92 = arith.constant 0 : index
    %68 = vector.load %arg4[%c8_90, %c0_91, %c0_92] : memref<9x128x128xf32, #tpu.memory_space<vmem>>, vector<1x128x128xf32>
    %69 = vector.shape_cast %68 : vector<1x128x128xf32> to vector<128x128xf32>
    %cst_93 = arith.constant dense<0.000000e+00> : vector<64x128xf32>
    %70 = tpu.matmul %67, %69, %cst_93 {dimension_numbers = #tpu.dot_dimension_numbers<[1], [0], [0], [1], [0, 0, 1, 1], [], []>} : vector<64x128xf32>, vector<128x128xf32>, vector<64x128xf32> -> vector<64x128xf32>
    %71 = arith.addf %65, %70 : vector<64x128xf32>
    %c0_94 = arith.constant 0 : index
    %c0_95 = arith.constant 0 : index
    %72 = vector.load %arg5[%c0_94, %c0_95] : memref<1x128xf32, #tpu.memory_space<vmem>>, vector<1x128xf32>
    %73 = vector.broadcast %72 : vector<1x128xf32> to vector<64x128xf32>
    %74 = arith.addf %71, %73 : vector<64x128xf32>
    %cst_96 = arith.constant 0.000000e+00 : f32
    %75 = vector.broadcast %cst_96 : f32 to vector<64x128xf32>
    %76 = arith.maximumf %74, %75 : vector<64x128xf32>
    %c0_97 = arith.constant 0 : index
    %c0_98 = arith.constant 0 : index
    %77 = vector.load %arg6[%c0_97, %c0_98] : memref<128x128xf32, #tpu.memory_space<vmem>>, vector<128x128xf32>
    %cst_99 = arith.constant dense<0.000000e+00> : vector<64x128xf32>
    %78 = tpu.matmul %76, %77, %cst_99 {dimension_numbers = #tpu.dot_dimension_numbers<[1], [0], [0], [1], [0, 0, 1, 1], [], []>} : vector<64x128xf32>, vector<128x128xf32>, vector<64x128xf32> -> vector<64x128xf32>
    %c0_100 = arith.constant 0 : index
    %c0_101 = arith.constant 0 : index
    %79 = vector.load %arg7[%c0_100, %c0_101] : memref<1x128xf32, #tpu.memory_space<vmem>>, vector<1x128xf32>
    %80 = vector.broadcast %79 : vector<1x128xf32> to vector<64x128xf32>
    %81 = arith.addf %78, %80 : vector<64x128xf32>
    %c0_102 = arith.constant 0 : index
    %c0_103 = arith.constant 0 : index
    %c0_104 = arith.constant 0 : index
    %c0_105 = arith.constant 0 : index
    %82 = vector.load %arg1[%c0_102, %c0_103, %c0_104, %c0_105] : memref<1x8x8x128xf32, #tpu.memory_space<vmem>>, vector<1x8x8x128xf32>
    %83 = vector.shape_cast %82 : vector<1x8x8x128xf32> to vector<64x128xf32>
    %84 = arith.addf %81, %83 : vector<64x128xf32>
    %cst_106 = arith.constant 0.000000e+00 : f32
    %85 = vector.broadcast %cst_106 : f32 to vector<64x128xf32>
    %86 = arith.maximumf %84, %85 : vector<64x128xf32>
    %87 = vector.shape_cast %86 : vector<64x128xf32> to vector<1x8x8x128xf32>
    %c0_107 = arith.constant 0 : index
    %c0_108 = arith.constant 0 : index
    %c0_109 = arith.constant 0 : index
    %c0_110 = arith.constant 0 : index
    %88 = vector.load %arg8[%c0_107, %c0_108, %c0_109, %c0_110] : memref<1x8x8x128xf32, #tpu.memory_space<vmem>>, vector<1x8x8x128xf32>
    tpu.vector_store %arg8[%c0_107, %c0_108, %c0_109, %c0_110], %87 {strides = array<i32>} : memref<1x8x8x128xf32, #tpu.memory_space<vmem>>, vector<1x8x8x128xf32>,
    return
  }
  func.func @transform_0(%arg0: i32) -> (i32, i32, i32, i32) {
    %c0_i32 = arith.constant 0 : i32
    %c0_i32_0 = arith.constant 0 : i32
    %c0_i32_1 = arith.constant 0 : i32
    %c0_i32_2 = arith.constant 0 : i32
    return %arg0, %c0_i32, %c0_i32_0, %c0_i32_1 : i32, i32, i32, i32
  }
  func.func @transform_1(%arg0: i32) -> (i32, i32) {
    %c0_i32 = arith.constant 0 : i32
    %c0_i32_0 = arith.constant 0 : i32
    %c0_i32_1 = arith.constant 0 : i32
    return %c0_i32, %c0_i32_0 : i32, i32
  }
  func.func @transform_2(%arg0: i32) -> (i32, i32) {
    %c0_i32 = arith.constant 0 : i32
    %c0_i32_0 = arith.constant 0 : i32
    %c0_i32_1 = arith.constant 0 : i32
    return %c0_i32, %c0_i32_0 : i32, i32
  }
  func.func @transform_3(%arg0: i32) -> (i32, i32, i32) {
    %c0_i32 = arith.constant 0 : i32
    %c0_i32_0 = arith.constant 0 : i32
    %c0_i32_1 = arith.constant 0 : i32
    %c0_i32_2 = arith.constant 0 : i32
    return %c0_i32, %c0_i32_0, %c0_i32_1 : i32, i32, i32
  }
  func.func @transform_4(%arg0: i32) -> (i32, i32) {
    %c0_i32 = arith.constant 0 : i32
    %c0_i32_0 = arith.constant 0 : i32
    %c0_i32_1 = arith.constant 0 : i32
    return %c0_i32, %c0_i32_0 : i32, i32
  }
  func.func @transform_5(%arg0: i32) -> (i32, i32) {
    %c0_i32 = arith.constant 0 : i32
    %c0_i32_0 = arith.constant 0 : i32
    %c0_i32_1 = arith.constant 0 : i32
    return %c0_i32, %c0_i32_0 : i32, i32
  }
  func.func @transform_6(%arg0: i32) -> (i32, i32) {
    %c0_i32 = arith.constant 0 : i32
    %c0_i32_0 = arith.constant 0 : i32
    %c0_i32_1 = arith.constant 0 : i32
    return %c0_i32, %c0_i32_0 : i32, i32
  }
  func.func @transform_7(%arg0: i32) -> (i32, i32, i32, i32) {
    %c0_i32 = arith.constant 0 : i32
    %c0_i32_0 = arith.constant 0 : i32
    %c0_i32_1 = arith.constant 0 : i32
    %c0_i32_2 = arith.constant 0 : i32
    return %arg0, %c0_i32, %c0_i32_0, %c0_i32_1 : i32, i32, i32, i32
  }
}

</mosaic_0001>

<llo_original>
// kernel: tpu_custom_call.1
$region0: #{tpu_custom_call.1}
  #allocation0 [shape = 'u32[]', space=smem, size = 0x4, offset = 0x4, fixed_abs, tag = 'smem constant byte address 0x4 - core index']
  #allocation1 [shape = 'u32[144,128]{1,0:T(1,128)}', space=vmem, size = 0x12000, scoped, tag = 'internal scratch']
  #allocation2 [shape = 'f32[1,10,17,128]{3,2,1,0:T(8,128)}', space=vmem, size = 0x1e000, scoped, tag = 'scratch operand']
  %s0 = inlined_call_operand.hbm [shape: f32[2,8,8,128], index: 0, kind: input, shape index: {}]
  %s1 = inlined_call_operand.hbm [shape: f32[128,128], index: 1, kind: input, shape index: {}]
  %s2 = inlined_call_operand.vmem [shape: f32[1,128], index: 2, kind: input, shape index: {}]
  %s3 = inlined_call_operand.hbm [shape: f32[9,128,128], index: 3, kind: input, shape index: {}]
  %s4 = inlined_call_operand.vmem [shape: f32[1,128], index: 4, kind: input, shape index: {}]
  %s5 = inlined_call_operand.hbm [shape: f32[128,128], index: 5, kind: input, shape index: {}]
  %s6 = inlined_call_operand.vmem [shape: f32[1,128], index: 6, kind: input, shape index: {}]
  %s7 = inlined_call_operand.hbm [shape: f32[2,8,8,128], index: 7, kind: output, shape index: {}]
  %s8 = sld [smem:[#allocation0]]
  $region77: #{tpu_custom_call.1} parent=0
    _
  %s10 = ssub.s32 1, %s8
  %s11 = scalar_select 0, %s10, %s8
  $region1: #{tpu_custom_call.1} parent=0
    #allocation3 [shape = 'u8[65536]{0}', space=vmem, size = 0x10000, scoped, tag = 'input window, operand 0']
    #allocation4 [shape = 's32[2]{0}', space=sflag, size = 0x8, scoped, tag = 'scoped memory for tpu_custom_call.1']
    #allocation5 [shape = 's32[2]{0}', space=sflag, size = 0x8, scoped, tag = 'scoped memory for tpu_custom_call.1']
    #allocation6 [shape = 'u8[65536]{0}', space=vmem, size = 0x10000, scoped, tag = 'input window, operand 1, single buffered']
    #allocation7 [shape = 's32[1]{0}', space=sflag, size = 0x4, scoped, tag = 'scoped memory for tpu_custom_call.1']
    #allocation8 [shape = 'u8[589824]{0}', space=vmem, size = 0x90000, scoped, tag = 'input window, operand 3, single buffered']
    #allocation9 [shape = 'u8[65536]{0}', space=vmem, size = 0x10000, scoped, tag = 'input window, operand 5, single buffered']
    #allocation10 [shape = 's32[1]{0}', space=sflag, size = 0x4, scoped, tag = 'scoped memory for tpu_custom_call.1']
    #allocation11 [shape = 'u8[65536]{0}', space=vmem, size = 0x10000, scoped, tag = 'output window, operand 0']
    %12 = vsyncpa [#allocation4], 0
    %s13 = scalar_lea.sflag [#allocation4], 1
    %14 = vsyncpa %s13, 0
    %15 = vsyncpa [#allocation7], 0
    %16 = vsyncpa [#allocation10], 0
    %17 = vsyncpa [#allocation5], 0
    %s18 = scalar_lea.sflag [#allocation5], 1
    %19 = vsyncpa %s18, 0
    loop: start=0, step=1, limit=4
    $region2: #{tpu_custom_call.1} parent=1 // loop_pre_header
      _
    $region3: #{tpu_custom_call.1} parent=1 // loop_header
      %s21 = sphi 0, %s25
      %p22 = scmp.ge.s32.totalorder %s21, 4
      %s31 = sphi 0, %s33
      %s34 = sphi 0, %s31
      %s35 = sphi 0, %s34
      %s51 = sphi 0, %s35
      %s55 = sphi 0, %s55
      %s57 = sphi 0, %s55
      %s58 = sphi 0, %s57
      %s72 = sphi 0, %s58
      %s76 = sphi 0, %s76
      %s78 = sphi 0, %s76
      %s79 = sphi 0, %s78
      %s93 = sphi 0, %s79
      %s97 = sphi 0, %s97
      %s99 = sphi 0, %s97
      %s100 = sphi 0, %s99
      %s114 = sphi 0, %s100
      %s118 = sphi 0, %s118
      %s120 = sphi 0, %s118
      %s121 = sphi 0, %s120
      %s135 = sphi 0, %s121
      %s139 = sphi 0, %s139
      %s141 = sphi 0, %s139
      %s142 = sphi 0, %s141
      %s156 = sphi 0, %s142
      %s160 = sphi 0, %s160
      %s162 = sphi 0, %s160
      %s163 = sphi 0, %s162
      %s177 = sphi 0, %s163
      %s183 = sphi 0, %s185
      %s186 = sphi 0, %s183
      %s187 = sphi 0, %s186
      %s203 = sphi 0, %s187
    $region4: #{tpu_custom_call.1} parent=1 // loop_header_branch
      %24 = sbr.rel (%p22) target = $region8
    $region5: #{tpu_custom_call.1} parent=1 // loop_body
      %s26 = ssub.s32 %s21, 1
      %s27 = ssub.s32 %s21, 2
      %s28 = sadd.s32 %s21, 1
      %s29 = ssub.s32 %s21, %s28
      %p30 = scmp.eq.s32.totalorder %s29, 0
      %s32 = sadd.s32 %s31, 1
      %s33 = scalar_select %p30, %s31, %s32
      %p36 = pneg %p30
      %p37 = scmp.eq.s32.totalorder %s21, 1
      %p38 = por %p36, %p37
      %p39 = scmp.ne.s32.totalorder %s31, %s34
      %p40 = scmp.eq.s32.totalorder %s21, 0
      %p41 = por %p39, %p40
      %p42 = scmp.ne.s32.totalorder %s31, %s34
      %p43 = scmp.eq.s32.totalorder %s26, 1
      %p44 = por %p42, %p43
      %p45 = scmp.ne.s32.totalorder %s34, %s35
      %p46 = scmp.eq.s32.totalorder %s26, 0
      %p47 = por %p45, %p46
      %p48 = scmp.ne.s32.totalorder %s34, %s35
      %p49 = scmp.eq.s32.totalorder %s27, 1
      %p50 = por %p48, %p49
      %p52 = scmp.ne.s32.totalorder %s35, %s51
      %p53 = scmp.eq.s32.totalorder %s27, 0
      %p54 = por %p52, %p53
      %s56 = sadd.s32 %s55, 1
      %p59 = scmp.eq.s32.totalorder %s21, 1
      %p60 = scmp.ne.s32.totalorder %s55, %s57
      %p61 = scmp.eq.s32.totalorder %s21, 0
      %p62 = por %p60, %p61
      %p63 = scmp.ne.s32.totalorder %s55, %s57
      %p64 = scmp.eq.s32.totalorder %s26, 1
      %p65 = por %p63, %p64
      %p66 = scmp.ne.s32.totalorder %s57, %s58
      %p67 = scmp.eq.s32.totalorder %s26, 0
      %p68 = por %p66, %p67
      %p69 = scmp.ne.s32.totalorder %s57, %s58
      %p70 = scmp.eq.s32.totalorder %s27, 1
      %p71 = por %p69, %p70
      %p73 = scmp.ne.s32.totalorder %s58, %s72
      %p74 = scmp.eq.s32.totalorder %s27, 0
      %p75 = por %p73, %p74
      %s77 = sadd.s32 %s76, 1
      %p80 = scmp.eq.s32.totalorder %s21, 1
      %p81 = scmp.ne.s32.totalorder %s76, %s78
      %p82 = scmp.eq.s32.totalorder %s21, 0
      %p83 = por %p81, %p82
      %p84 = scmp.ne.s32.totalorder %s76, %s78
      %p85 = scmp.eq.s32.totalorder %s26, 1
      %p86 = por %p84, %p85
      %p87 = scmp.ne.s32.totalorder %s78, %s79
      %p88 = scmp.eq.s32.totalorder %s26, 0
      %p89 = por %p87, %p88
      %p90 = scmp.ne.s32.totalorder %s78, %s79
      %p91 = scmp.eq.s32.totalorder %s27, 1
      %p92 = por %p90, %p91
      %p94 = scmp.ne.s32.totalorder %s79, %s93
      %p95 = scmp.eq.s32.totalorder %s27, 0
      %p96 = por %p94, %p95
      %s98 = sadd.s32 %s97, 1
      %p101 = scmp.eq.s32.totalorder %s21, 1
      %p102 = scmp.ne.s32.totalorder %s97, %s99
      %p103 = scmp.eq.s32.totalorder %s21, 0
      %p104 = por %p102, %p103
      %p105 = scmp.ne.s32.totalorder %s97, %s99
      %p106 = scmp.eq.s32.totalorder %s26, 1
      %p107 = por %p105, %p106
      %p108 = scmp.ne.s32.totalorder %s99, %s100
      %p109 = scmp.eq.s32.totalorder %s26, 0
      %p110 = por %p108, %p109
      %p111 = scmp.ne.s32.totalorder %s99, %s100
      %p112 = scmp.eq.s32.totalorder %s27, 1
      %p113 = por %p111, %p112
      %p115 = scmp.ne.s32.totalorder %s100, %s114
      %p116 = scmp.eq.s32.totalorder %s27, 0
      %p117 = por %p115, %p116
      %s119 = sadd.s32 %s118, 1
      %p122 = scmp.eq.s32.totalorder %s21, 1
      %p123 = scmp.ne.s32.totalorder %s118, %s120
      %p124 = scmp.eq.s32.totalorder %s21, 0
      %p125 = por %p123, %p124
      %p126 = scmp.ne.s32.totalorder %s118, %s120
      %p127 = scmp.eq.s32.totalorder %s26, 1
      %p128 = por %p126, %p127
      %p129 = scmp.ne.s32.totalorder %s120, %s121
      %p130 = scmp.eq.s32.totalorder %s26, 0
      %p131 = por %p129, %p130
      %p132 = scmp.ne.s32.totalorder %s120, %s121
      %p133 = scmp.eq.s32.totalorder %s27, 1
      %p134 = por %p132, %p133
      %p136 = scmp.ne.s32.totalorder %s121, %s135
      %p137 = scmp.eq.s32.totalorder %s27, 0
      %p138 = por %p136, %p137
      %s140 = sadd.s32 %s139, 1
      %p143 = scmp.eq.s32.totalorder %s21, 1
      %p144 = scmp.ne.s32.totalorder %s139, %s141
      %p145 = scmp.eq.s32.totalorder %s21, 0
      %p146 = por %p144, %p145
      %p147 = scmp.ne.s32.totalorder %s139, %s141
      %p148 = scmp.eq.s32.totalorder %s26, 1
      %p149 = por %p147, %p148
      %p150 = scmp.ne.s32.totalorder %s141, %s142
      %p151 = scmp.eq.s32.totalorder %s26, 0
      %p152 = por %p150, %p151
      %p153 = scmp.ne.s32.totalorder %s141, %s142
      %p154 = scmp.eq.s32.totalorder %s27, 1
      %p155 = por %p153, %p154
      %p157 = scmp.ne.s32.totalorder %s142, %s156
      %p158 = scmp.eq.s32.totalorder %s27, 0
      %p159 = por %p157, %p158
      %s161 = sadd.s32 %s160, 1
      %p164 = scmp.eq.s32.totalorder %s21, 1
      %p165 = scmp.ne.s32.totalorder %s160, %s162
      %p166 = scmp.eq.s32.totalorder %s21, 0
      %p167 = por %p165, %p166
      %p168 = scmp.ne.s32.totalorder %s160, %s162
      %p169 = scmp.eq.s32.totalorder %s26, 1
      %p170 = por %p168, %p169
      %p171 = scmp.ne.s32.totalorder %s162, %s163
      %p172 = scmp.eq.s32.totalorder %s26, 0
      %p173 = por %p171, %p172
      %p174 = scmp.ne.s32.totalorder %s162, %s163
      %p175 = scmp.eq.s32.totalorder %s27, 1
      %p176 = por %p174, %p175
      %p178 = scmp.ne.s32.totalorder %s163, %s177
      %p179 = scmp.eq.s32.totalorder %s27, 0
      %p180 = por %p178, %p179
      %s181 = ssub.s32 %s21, %s28
      %p182 = scmp.eq.s32.totalorder %s181, 0
      %s184 = sadd.s32 %s183, 1
      %s185 = scalar_select %p182, %s183, %s184
      %p188 = pneg %p182
      %p189 = scmp.eq.s32.totalorder %s21, 1
      %p190 = por %p188, %p189
      %p191 = scmp.ne.s32.totalorder %s183, %s186
      %p192 = scmp.eq.s32.totalorder %s21, 0
      %p193 = por %p191, %p192
      %p194 = scmp.ne.s32.totalorder %s183, %s186
      %p195 = scmp.eq.s32.totalorder %s26, 1
      %p196 = por %p194, %p195
      %p197 = scmp.ne.s32.totalorder %s186, %s187
      %p198 = scmp.eq.s32.totalorder %s26, 0
      %p199 = por %p197, %p198
      %p200 = scmp.ne.s32.totalorder %s186, %s187
      %p201 = scmp.eq.s32.totalorder %s27, 1
      %p202 = por %p200, %p201
      %p204 = scmp.ne.s32.totalorder %s187, %s203
      %p205 = scmp.eq.s32.totalorder %s27, 0
      %p206 = por %p204, %p205
      %p207 = scmp.le.s32.totalorder 1, %s21
      %p208 = scmp.lt.s32.totalorder %s21, 3
      %p209 = pnand %p207, %p208
      %p210 = pneg %p209
      // Predicated region
      $region9: #{tpu_custom_call.1} parent=5 // pred_check
        _
      $region10: #{tpu_custom_call.1} parent=5 // pred_check_branch
        %212 = sbr.rel (%p209) target = $region12
      $region11: #{tpu_custom_call.1} parent=5 // pred_region
        %s213 = ssub.s32 %s21, 1
        // Predicated region
        $region13: #{tpu_custom_call.1} parent=11 // pred_check
          %p214 = pneg %p68
        $region14: #{tpu_custom_call.1} parent=11 // pred_check_branch
          %216 = sbr.rel (%p214) target = $region16
        $region15: #{tpu_custom_call.1} parent=11 // pred_region
          %s218 = ssub.s32 2048, 2048
          %219 = vsyncadd [#allocation7], %s218
          %s220 = sshll.u32 [#allocation6], 4
          %s221 = int_to_ptr.vmem [resolvable:$true] %s220
          %226 = dma.hbm_to_vmem [thread:$0]  %s1, 2048, %s221, [#allocation7], 128, 128, 8
        $region16: #{tpu_custom_call.1} parent=11 // pred_fallthru
          _
        // Predicated region
        $region17: #{tpu_custom_call.1} parent=11 // pred_check
          %p227 = pneg %p89
        $region18: #{tpu_custom_call.1} parent=11 // pred_check_branch
          %229 = sbr.rel (%p227) target = $region20
        $region19: #{tpu_custom_call.1} parent=11 // pred_region
          _
        $region20: #{tpu_custom_call.1} parent=11 // pred_fallthru
          _
        // Predicated region
        $region21: #{tpu_custom_call.1} parent=11 // pred_check
          %p230 = pneg %p110
        $region22: #{tpu_custom_call.1} parent=11 // pred_check_branch
          %232 = sbr.rel (%p230) target = $region24
        $region23: #{tpu_custom_call.1} parent=11 // pred_region
          %s234 = ssub.s32 18432, 18432
          %235 = vsyncadd [#allocation7], %s234
          %s236 = sshll.u32 [#allocation8], 4
          %s237 = int_to_ptr.vmem [resolvable:$true] %s236
          %242 = dma.hbm_to_vmem [thread:$0]  %s3, 18432, %s237, [#allocation7], 128, 128, 8
        $region24: #{tpu_custom_call.1} parent=11 // pred_fallthru
          _
        // Predicated region
        $region25: #{tpu_custom_call.1} parent=11 // pred_check
          %p243 = pneg %p131
        $region26: #{tpu_custom_call.1} parent=11 // pred_check_branch
          %245 = sbr.rel (%p243) target = $region28
        $region27: #{tpu_custom_call.1} parent=11 // pred_region
          _
        $region28: #{tpu_custom_call.1} parent=11 // pred_fallthru
          _
        // Predicated region
        $region29: #{tpu_custom_call.1} parent=11 // pred_check
          %p246 = pneg %p152
        $region30: #{tpu_custom_call.1} parent=11 // pred_check_branch
          %248 = sbr.rel (%p246) target = $region32
        $region31: #{tpu_custom_call.1} parent=11 // pred_region
          %s250 = ssub.s32 2048, 2048
          %251 = vsyncadd [#allocation10], %s250
          %s252 = sshll.u32 [#allocation9], 4
          %s253 = int_to_ptr.vmem [resolvable:$true] %s252
          %258 = dma.hbm_to_vmem [thread:$0]  %s5, 2048, %s253, [#allocation10], 128, 128, 8
        $region32: #{tpu_custom_call.1} parent=11 // pred_fallthru
          _
        // Predicated region
        $region33: #{tpu_custom_call.1} parent=11 // pred_check
          %p259 = pneg %p173
        $region34: #{tpu_custom_call.1} parent=11 // pred_check_branch
          %261 = sbr.rel (%p259) target = $region36
        $region35: #{tpu_custom_call.1} parent=11 // pred_region
          _
        $region36: #{tpu_custom_call.1} parent=11 // pred_fallthru
          _
      $region12: #{tpu_custom_call.1} parent=5 // pred_fallthru
        _
      %p262 = scmp.lt.s32.totalorder %s21, 2
      // Predicated region
      $region37: #{tpu_custom_call.1} parent=5 // pred_check
        %p263 = pneg %p262
      $region38: #{tpu_custom_call.1} parent=5 // pred_check_branch
        %265 = sbr.rel (%p263) target = $region40
      $region39: #{tpu_custom_call.1} parent=5 // pred_region
        // Predicated region
        $region41: #{tpu_custom_call.1} parent=39 // pred_check
          %p266 = pneg %p41
        $region42: #{tpu_custom_call.1} parent=39 // pred_check_branch
          %268 = sbr.rel (%p266) target = $region44
        $region43: #{tpu_custom_call.1} parent=39 // pred_region
          %s269 = sand.u32 %s31, 1
          %s270 = scalar_lea.sflag [#allocation4], %s269
          %s271 = sand.u32 %s31, 1
          %s272 = smul.addr %s271, 64
          %s273 = scalar_lea.vmem [#allocation3], %s272
          %s275 = ssub.s32 1024, 1024
          %276 = vsyncadd %s270, %s275
          %s277 = smul.addr %s21, 8
          %s278 = smul.addr %s277, 128
          %s279 = scalar_lea.hbm %s0, %s278
          %s280 = sshll.u32 %s273, 4
          %s281 = int_to_ptr.vmem [resolvable:$true] %s280
          %286 = dma.hbm_to_vmem [thread:$0]  %s279, 1024, %s281, %s270, 128, 128, 8
        $region44: #{tpu_custom_call.1} parent=39 // pred_fallthru
          _
      $region40: #{tpu_custom_call.1} parent=5 // pred_fallthru
        _
      %p287 = scmp.le.s32.totalorder 1, %s21
      %p288 = scmp.lt.s32.totalorder %s21, 3
      %p289 = pnand %p287, %p288
      %p290 = pneg %p289
      // Predicated region
      $region45: #{tpu_custom_call.1} parent=5 // pred_check
        _
      $region46: #{tpu_custom_call.1} parent=5 // pred_check_branch
        %292 = sbr.rel (%p289) target = $region48
      $region47: #{tpu_custom_call.1} parent=5 // pred_region
        %s293 = ssub.s32 %s21, 1
        %s294 = sand.u32 %s34, 1
        %s295 = scalar_lea.sflag [#allocation4], %s294
        %s296 = sand.u32 %s34, 1
        %s297 = smul.addr %s296, 64
        %s298 = scalar_lea.vmem [#allocation3], %s297
        // Predicated region
        $region49: #{tpu_custom_call.1} parent=47 // pred_check
          %p299 = pneg %p47
        $region50: #{tpu_custom_call.1} parent=47 // pred_check_branch
          %301 = sbr.rel (%p299) target = $region52
        $region51: #{tpu_custom_call.1} parent=47 // pred_region
          %302 = dma.done %s295, 1024
        $region52: #{tpu_custom_call.1} parent=47 // pred_fallthru
          _
        // Predicated region
        $region53: #{tpu_custom_call.1} parent=47 // pred_check
          %p303 = pneg %p68
        $region54: #{tpu_custom_call.1} parent=47 // pred_check_branch
          %305 = sbr.rel (%p303) target = $region56
        $region55: #{tpu_custom_call.1} parent=47 // pred_region
          %306 = dma.done [#allocation7], 2048
        $region56: #{tpu_custom_call.1} parent=47 // pred_fallthru
          _
        // Predicated region
        $region57: #{tpu_custom_call.1} parent=47 // pred_check
          %p307 = pneg %p110
        $region58: #{tpu_custom_call.1} parent=47 // pred_check_branch
          %309 = sbr.rel (%p307) target = $region60
        $region59: #{tpu_custom_call.1} parent=47 // pred_region
          %310 = dma.done [#allocation7], 18432
        $region60: #{tpu_custom_call.1} parent=47 // pred_fallthru
          _
        // Predicated region
        $region61: #{tpu_custom_call.1} parent=47 // pred_check
          %p311 = pneg %p152
        $region62: #{tpu_custom_call.1} parent=47 // pred_check_branch
          %313 = sbr.rel (%p311) target = $region64
        $region63: #{tpu_custom_call.1} parent=47 // pred_region
          %314 = dma.done [#allocation10], 2048
        $region64: #{tpu_custom_call.1} parent=47 // pred_fallthru
          _
        %s315 = sand.u32 %s34, 1
        %s316 = scalar_lea.sflag [#allocation4], %s315
        %s317 = sand.u32 %s34, 1
        %s318 = smul.addr %s317, 64
        %s319 = scalar_lea.vmem [#allocation3], %s318
        %p320 = pneg %p47
        %p321 = pneg %p44
        %p322 = pneg %p68
        %p323 = pneg %p65
        %p324 = pneg %p89
        %p325 = pneg %p86
        %p326 = pneg %p110
        %p327 = pneg %p107
        %p328 = pneg %p131
        %p329 = pneg %p128
        %p330 = pneg %p152
        %p331 = pneg %p149
        %p332 = pneg %p173
        %p333 = pneg %p170
        %p334 = pneg %p199
        %p335 = pneg %p196
        %s336 = sand.u32 %s186, 1
        %s337 = scalar_lea.sflag [#allocation5], %s336
        %s338 = sand.u32 %s186, 1
        %s339 = smul.addr %s338, 64
        %s340 = scalar_lea.vmem [#allocation11], %s339
        %v341 = vld [vmem:[%s298] sm:$0xff]
        %v342 = vld [vmem:[%s298 + $0x8] sm:$0xff]
        %v343 = vld [vmem:[%s298 + $0x10] sm:$0xff]
        %v344 = vld [vmem:[%s298 + $0x18] sm:$0xff]
        %v345 = vld [vmem:[%s298 + $0x20] sm:$0xff]
        %v346 = vld [vmem:[%s298 + $0x28] sm:$0xff]
        %v347 = vld [vmem:[%s298 + $0x30] sm:$0xff]
        %v348 = vld [vmem:[%s298 + $0x38] sm:$0xff]
        %v349 = vld [vmem:[#allocation6] sm:$0xff]
        %v350 = vld [vmem:[#allocation6 + $0x8] sm:$0xff]
        %v351 = vld [vmem:[#allocation6 + $0x10] sm:$0xff]
        %v352 = vld [vmem:[#allocation6 + $0x18] sm:$0xff]
        %v353 = vld [vmem:[#allocation6 + $0x20] sm:$0xff]
        %v354 = vld [vmem:[#allocation6 + $0x28] sm:$0xff]
        %v355 = vld [vmem:[#allocation6 + $0x30] sm:$0xff]
        %v356 = vld [vmem:[#allocation6 + $0x38] sm:$0xff]
        %v357 = vld [vmem:[#allocation6 + $0x40] sm:$0xff]
        %v358 = vld [vmem:[#allocation6 + $0x48] sm:$0xff]
        %v359 = vld [vmem:[#allocation6 + $0x50] sm:$0xff]
        %v360 = vld [vmem:[#allocation6 + $0x58] sm:$0xff]
        %v361 = vld [vmem:[#allocation6 + $0x60] sm:$0xff]
        %v362 = vld [vmem:[#allocation6 + $0x68] sm:$0xff]
        %v363 = vld [vmem:[#allocation6 + $0x70] sm:$0xff]
        %v364 = vld [vmem:[#allocation6 + $0x78] sm:$0xff]
        %v365 = vld [vmem:[%s2] sm:$0x1]
        %v367 = vlaneseq
        %v368 = vshrl.u32 %v367, 7
        %v369 = vsub.s32 0, %v368
        %v370 = vrot.slane %v365, %v369
        %372 = vmatprep.subr.mxu0 0.0
        %373 = vmatpush1.msra.mxu0 %v349
        %374 = vmatprep.subr.mxu0 0.0
        %375 = vmatpush1.msra.mxu0 %v350
        %376 = vmatprep.subr.mxu0 0.0
        %377 = vmatpush1.msra.mxu0 %v351
        %378 = vmatprep.subr.mxu0 0.0
        %379 = vmatpush1.msra.mxu0 %v352
        %380 = vmatprep.subr.mxu0 0.0
        %381 = vmatpush1.msra.mxu0 %v353
        %382 = vmatprep.subr.mxu0 0.0
        %383 = vmatpush1.msra.mxu0 %v354
        %384 = vmatprep.subr.mxu0 0.0
        %385 = vmatpush1.msra.mxu0 %v355
        %386 = vmatprep.subr.mxu0 0.0
        %387 = vmatpush1.msra.mxu0 %v356
        %388 = vmatprep.subr.mxu0 0.0
        %389 = vmatpush1.msra.mxu0 %v357
        %390 = vmatprep.subr.mxu0 0.0
        %391 = vmatpush1.msra.mxu0 %v358
        %392 = vmatprep.subr.mxu0 0.0
        %393 = vmatpush1.msra.mxu0 %v359
        %394 = vmatprep.subr.mxu0 0.0
        %395 = vmatpush1.msra.mxu0 %v360
        %396 = vmatprep.subr.mxu0 0.0
        %397 = vmatpush1.msra.mxu0 %v361
        %398 = vmatprep.subr.mxu0 0.0
        %399 = vmatpush1.msra.mxu0 %v362
        %400 = vmatprep.subr.mxu0 0.0
        %401 = vmatpush1.msra.mxu0 %v363
        %402 = vmatprep.subr.mxu0 0.0
        %403 = vmatpush1.msra.mxu0 %v364
        %404 = vmatprep.subr.mxu0 0.0
        %405 = vmatpush1.msra.mxu0 0.0
        %406 = vmatprep.subr.mxu0 0.0
        %407 = vmatpush1.msra.mxu0 0.0
        %408 = vmatprep.subr.mxu0 0.0
        %409 = vmatpush1.msra.mxu0 0.0
        %410 = vmatprep.subr.mxu0 0.0
        %411 = vmatpush1.msra.mxu0 0.0
        %412 = vmatprep.subr.mxu0 0.0
        %413 = vmatpush1.msra.mxu0 0.0
        %414 = vmatprep.subr.mxu0 0.0
        %415 = vmatpush1.msra.mxu0 0.0
        %416 = vmatprep.subr.mxu0 0.0
        %417 = vmatpush1.msra.mxu0 0.0
        %418 = vmatprep.subr.mxu0 0.0
        %419 = vmatpush1.msra.mxu0 0.0
        %420 = vmatprep.subr.mxu0 0.0
        %421 = vmatpush1.msra.mxu0 0.0
        %422 = vmatprep.subr.mxu0 0.0
        %423 = vmatpush1.msra.mxu0 0.0
        %424 = vmatprep.subr.mxu0 0.0
        %425 = vmatpush1.msra.mxu0 0.0
        %426 = vmatprep.subr.mxu0 0.0
        %427 = vmatpush1.msra.mxu0 0.0
        %428 = vmatprep.subr.mxu0 0.0
        %429 = vmatpush1.msra.mxu0 0.0
        %430 = vmatprep.subr.mxu0 0.0
        %431 = vmatpush1.msra.mxu0 0.0
        %432 = vmatprep.subr.mxu0 0.0
        %433 = vmatpush1.msra.mxu0 0.0
        %434 = vmatprep.subr.mxu0 0.0
        %435 = vmatpush1.msra.mxu0 0.0
        %436 = vmatprep.mubr.f32.mxu0 0.0
        %437 = vmatmul.mubr.f32.gmra.mrb[0].mxu0 %v341
        %v438 = vpop.f32.mrb[0].mxu0
        %v439 = vadd.f32 %v370, %v438
        %v440 = vpop.f32.mrb[0].mxu0
        %441 = vmatprep.mubr.f32.mxu0 0.0
        %442 = vmatmul.mubr.f32.gmra.mrb[0].mxu0 %v342
        %v443 = vpop.f32.mrb[0].mxu0
        %v444 = vadd.f32 %v370, %v443
        %v445 = vpop.f32.mrb[0].mxu0
        %446 = vmatprep.mubr.f32.mxu0 0.0
        %447 = vmatmul.mubr.f32.gmra.mrb[0].mxu0 %v343
        %v448 = vpop.f32.mrb[0].mxu0
        %v449 = vadd.f32 %v370, %v448
        %v450 = vpop.f32.mrb[0].mxu0
        %451 = vmatprep.mubr.f32.mxu0 0.0
        %452 = vmatmul.mubr.f32.gmra.mrb[0].mxu0 %v344
        %v453 = vpop.f32.mrb[0].mxu0
        %v454 = vadd.f32 %v370, %v453
        %v455 = vpop.f32.mrb[0].mxu0
        %456 = vmatprep.mubr.f32.mxu0 0.0
        %457 = vmatmul.mubr.f32.gmra.mrb[0].mxu0 %v345
        %v458 = vpop.f32.mrb[0].mxu0
        %v459 = vadd.f32 %v370, %v458
        %v460 = vpop.f32.mrb[0].mxu0
        %461 = vmatprep.mubr.f32.mxu0 0.0
        %462 = vmatmul.mubr.f32.gmra.mrb[0].mxu0 %v346
        %v463 = vpop.f32.mrb[0].mxu0
        %v464 = vadd.f32 %v370, %v463
        %v465 = vpop.f32.mrb[0].mxu0
        %466 = vmatprep.mubr.f32.mxu0 0.0
        %467 = vmatmul.mubr.f32.gmra.mrb[0].mxu0 %v347
        %v468 = vpop.f32.mrb[0].mxu0
        %v469 = vadd.f32 %v370, %v468
        %v470 = vpop.f32.mrb[0].mxu0
        %471 = vmatprep.mubr.f32.mxu0 0.0
        %472 = vmatmul.mubr.f32.gmra.mrb[0].mxu0 %v348
        %v473 = vpop.f32.mrb[0].mxu0
        %v474 = vadd.f32 %v370, %v473
        %v475 = vpop.f32.mrb[0].mxu0
        %476 = vdwg.mxu0
        %v477 = vmax.f32 %v439, 0.0
        %v478 = vmax.f32 %v444, 0.0
        %v479 = vmax.f32 %v449, 0.0
        %v480 = vmax.f32 %v454, 0.0
        %v481 = vmax.f32 %v459, 0.0
        %v482 = vmax.f32 %v464, 0.0
        %v483 = vmax.f32 %v469, 0.0
        %v484 = vmax.f32 %v474, 0.0
        %485 = vst [vmem:[#allocation2] sm:$0xff] 0.0
        %486 = vst [vmem:[#allocation2 + $0x8] sm:$0xff] 0.0
        %487 = vst [vmem:[#allocation2 + $0x10] sm:$0x1] 0.0
        %s488 = scalar_lea.vmem [#allocation2], 216
        %489 = vst [vmem:[%s488] sm:$0xff] 0.0
        %490 = vst [vmem:[%s488 + $0x8] sm:$0xff] 0.0
        %491 = vst [vmem:[%s488 + $0x10] sm:$0x1] 0.0
        %492 = vst [vmem:[#allocation2] sm:$0xff] 0.0
        %493 = vst [vmem:[#allocation2 + $0x18] sm:$0xff] 0.0
        %494 = vst [vmem:[#allocation2 + $0x30] sm:$0xff] 0.0
        %495 = vst [vmem:[#allocation2 + $0x48] sm:$0xff] 0.0
        %496 = vst [vmem:[#allocation2 + $0x60] sm:$0xff] 0.0
        %497 = vst [vmem:[#allocation2 + $0x78] sm:$0xff] 0.0
        %498 = vst [vmem:[#allocation2 + $0x90] sm:$0xff] 0.0
        %499 = vst [vmem:[#allocation2 + $0xa8] sm:$0xff] 0.0
        %500 = vst [vmem:[#allocation2 + $0xc0] sm:$0xff] 0.0
        %501 = vst [vmem:[#allocation2 + $0xd8] sm:$0xff] 0.0
        %502 = vst [vmem:[#allocation2 + $0x10] sm:$0x1] 0.0
        %503 = vst [vmem:[#allocation2 + $0x28] sm:$0x1] 0.0
        %504 = vst [vmem:[#allocation2 + $0x40] sm:$0x1] 0.0
        %505 = vst [vmem:[#allocation2 + $0x58] sm:$0x1] 0.0
        %506 = vst [vmem:[#allocation2 + $0x70] sm:$0x1] 0.0
        %507 = vst [vmem:[#allocation2 + $0x88] sm:$0x1] 0.0
        %508 = vst [vmem:[#allocation2 + $0xa0] sm:$0x1] 0.0
        %509 = vst [vmem:[#allocation2 + $0xb8] sm:$0x1] 0.0
        %510 = vst [vmem:[#allocation2 + $0xd0] sm:$0x1] 0.0
        %511 = vst [vmem:[#allocation2 + $0xe8] sm:$0x1] 0.0
        %s512 = scalar_lea.vmem [#allocation2], 24
        %513 = vst [vmem:[%s512 + $0x8] sm:$0xff] %v477
        %514 = vst [vmem:[%s512 + $0x20] sm:$0xff] %v478
        %515 = vst [vmem:[%s512 + $0x38] sm:$0xff] %v479
        %516 = vst [vmem:[%s512 + $0x50] sm:$0xff] %v480
        %517 = vst [vmem:[%s512 + $0x68] sm:$0xff] %v481
        %518 = vst [vmem:[%s512 + $0x80] sm:$0xff] %v482
        %519 = vst [vmem:[%s512 + $0x98] sm:$0xff] %v483
        %520 = vst [vmem:[%s512 + $0xb0] sm:$0xff] %v484
        %v521 = vld [vmem:[#allocation2 + $0x7] sm:$0xff]
        %v522 = vld [vmem:[#allocation2 + $0x1f] sm:$0xff]
        %v523 = vld [vmem:[#allocation2 + $0x37] sm:$0xff]
        %v524 = vld [vmem:[#allocation2 + $0x4f] sm:$0xff]
        %v525 = vld [vmem:[#allocation2 + $0x67] sm:$0xff]
        %v526 = vld [vmem:[#allocation2 + $0x7f] sm:$0xff]
        %v527 = vld [vmem:[#allocation2 + $0x97] sm:$0xff]
        %v528 = vld [vmem:[#allocation2 + $0xaf] sm:$0xff]
        %v529 = vld [vmem:[#allocation8] sm:$0xff]
        %v530 = vld [vmem:[#allocation8 + $0x8] sm:$0xff]
        %v531 = vld [vmem:[#allocation8 + $0x10] sm:$0xff]
        %v532 = vld [vmem:[#allocation8 + $0x18] sm:$0xff]
        %v533 = vld [vmem:[#allocation8 + $0x20] sm:$0xff]
        %v534 = vld [vmem:[#allocation8 + $0x28] sm:$0xff]
        %v535 = vld [vmem:[#allocation8 + $0x30] sm:$0xff]
        %v536 = vld [vmem:[#allocation8 + $0x38] sm:$0xff]
        %v537 = vld [vmem:[#allocation8 + $0x40] sm:$0xff]
        %v538 = vld [vmem:[#allocation8 + $0x48] sm:$0xff]
        %v539 = vld [vmem:[#allocation8 + $0x50] sm:$0xff]
        %v540 = vld [vmem:[#allocation8 + $0x58] sm:$0xff]
        %v541 = vld [vmem:[#allocation8 + $0x60] sm:$0xff]
        %v542 = vld [vmem:[#allocation8 + $0x68] sm:$0xff]
        %v543 = vld [vmem:[#allocation8 + $0x70] sm:$0xff]
        %v544 = vld [vmem:[#allocation8 + $0x78] sm:$0xff]
        %v545 = vld [vmem:[#allocation2 + $0x8] sm:$0xff]
        %v546 = vld [vmem:[#allocation2 + $0x20] sm:$0xff]
        %v547 = vld [vmem:[#allocation2 + $0x38] sm:$0xff]
        %v548 = vld [vmem:[#allocation2 + $0x50] sm:$0xff]
        %v549 = vld [vmem:[#allocation2 + $0x68] sm:$0xff]
        %v550 = vld [vmem:[#allocation2 + $0x80] sm:$0xff]
        %v551 = vld [vmem:[#allocation2 + $0x98] sm:$0xff]
        %v552 = vld [vmem:[#allocation2 + $0xb0] sm:$0xff]
        %s553 = scalar_lea.vmem [#allocation8], 128
        %v554 = vld [vmem:[%s553] sm:$0xff]
        %v555 = vld [vmem:[%s553 + $0x8] sm:$0xff]
        %v556 = vld [vmem:[%s553 + $0x10] sm:$0xff]
        %v557 = vld [vmem:[%s553 + $0x18] sm:$0xff]
        %v558 = vld [vmem:[%s553 + $0x20] sm:$0xff]
        %v559 = vld [vmem:[%s553 + $0x28] sm:$0xff]
        %v560 = vld [vmem:[%s553 + $0x30] sm:$0xff]
        %v561 = vld [vmem:[%s553 + $0x38] sm:$0xff]
        %v562 = vld [vmem:[%s553 + $0x40] sm:$0xff]
        %v563 = vld [vmem:[%s553 + $0x48] sm:$0xff]
        %v564 = vld [vmem:[%s553 + $0x50] sm:$0xff]
        %v565 = vld [vmem:[%s553 + $0x58] sm:$0xff]
        %v566 = vld [vmem:[%s553 + $0x60] sm:$0xff]
        %v567 = vld [vmem:[%s553 + $0x68] sm:$0xff]
        %v568 = vld [vmem:[%s553 + $0x70] sm:$0xff]
        %v569 = vld [vmem:[%s553 + $0x78] sm:$0xff]
        %570 = vmatprep.subr.mxu0 0.0
        %571 = vmatpush1.msra.mxu0 %v554
        %572 = vmatprep.subr.mxu0 0.0
        %573 = vmatpush1.msra.mxu0 %v555
        %574 = vmatprep.subr.mxu0 0.0
        %575 = vmatpush1.msra.mxu0 %v556
        %576 = vmatprep.subr.mxu0 0.0
        %577 = vmatpush1.msra.mxu0 %v557
        %578 = vmatprep.subr.mxu0 0.0
        %579 = vmatpush1.msra.mxu0 %v558
        %580 = vmatprep.subr.mxu0 0.0
        %581 = vmatpush1.msra.mxu0 %v559
        %582 = vmatprep.subr.mxu0 0.0
        %583 = vmatpush1.msra.mxu0 %v560
        %584 = vmatprep.subr.mxu0 0.0
        %585 = vmatpush1.msra.mxu0 %v561
        %586 = vmatprep.subr.mxu0 0.0
        %587 = vmatpush1.msra.mxu0 %v562
        %588 = vmatprep.subr.mxu0 0.0
        %589 = vmatpush1.msra.mxu0 %v563
        %590 = vmatprep.subr.mxu0 0.0
        %591 = vmatpush1.msra.mxu0 %v564
        %592 = vmatprep.subr.mxu0 0.0
        %593 = vmatpush1.msra.mxu0 %v565
        %594 = vmatprep.subr.mxu0 0.0
        %595 = vmatpush1.msra.mxu0 %v566
        %596 = vmatprep.subr.mxu0 0.0
        %597 = vmatpush1.msra.mxu0 %v567
        %598 = vmatprep.subr.mxu0 0.0
        %599 = vmatpush1.msra.mxu0 %v568
        %600 = vmatprep.subr.mxu0 0.0
        %601 = vmatpush1.msra.mxu0 %v569
        %602 = vmatprep.subr.mxu0 0.0
        %603 = vmatpush1.msra.mxu0 0.0
        %604 = vmatprep.subr.mxu0 0.0
        %605 = vmatpush1.msra.mxu0 0.0
        %606 = vmatprep.subr.mxu0 0.0
        %607 = vmatpush1.msra.mxu0 0.0
        %608 = vmatprep.subr.mxu0 0.0
        %609 = vmatpush1.msra.mxu0 0.0
        %610 = vmatprep.subr.mxu0 0.0
        %611 = vmatpush1.msra.mxu0 0.0
        %612 = vmatprep.subr.mxu0 0.0
        %613 = vmatpush1.msra.mxu0 0.0
        %614 = vmatprep.subr.mxu0 0.0
        %615 = vmatpush1.msra.mxu0 0.0
        %616 = vmatprep.subr.mxu0 0.0
        %617 = vmatpush1.msra.mxu0 0.0
        %618 = vmatprep.subr.mxu0 0.0
        %619 = vmatpush1.msra.mxu0 0.0
        %620 = vmatprep.subr.mxu0 0.0
        %621 = vmatpush1.msra.mxu0 0.0
        %622 = vmatprep.subr.mxu0 0.0
        %623 = vmatpush1.msra.mxu0 0.0
        %624 = vmatprep.subr.mxu0 0.0
        %625 = vmatpush1.msra.mxu0 0.0
        %626 = vmatprep.subr.mxu0 0.0
        %627 = vmatpush1.msra.mxu0 0.0
        %628 = vmatprep.subr.mxu0 0.0
        %629 = vmatpush1.msra.mxu0 0.0
        %630 = vmatprep.subr.mxu0 0.0
        %631 = vmatpush1.msra.mxu0 0.0
        %632 = vmatprep.subr.mxu0 0.0
        %633 = vmatpush1.msra.mxu0 0.0
        %634 = vmatprep.mubr.f32.mxu0 0.0
        %635 = vmatmul.mubr.f32.gmra.mrb[0].mxu0 %v545
        %v636 = vpop.f32.mrb[0].mxu0
        %v637 = vadd.f32 0.0, %v636
        %v638 = vpop.f32.mrb[0].mxu0
        %639 = vmatprep.mubr.f32.mxu0 0.0
        %640 = vmatmul.mubr.f32.gmra.mrb[0].mxu0 %v546
        %v641 = vpop.f32.mrb[0].mxu0
        %v642 = vadd.f32 0.0, %v641
        %v643 = vpop.f32.mrb[0].mxu0
        %644 = vmatprep.mubr.f32.mxu0 0.0
        %645 = vmatmul.mubr.f32.gmra.mrb[0].mxu0 %v547
        %v646 = vpop.f32.mrb[0].mxu0
        %v647 = vadd.f32 0.0, %v646
        %v648 = vpop.f32.mrb[0].mxu0
        %649 = vmatprep.mubr.f32.mxu0 0.0
        %650 = vmatmul.mubr.f32.gmra.mrb[0].mxu0 %v548
        %v651 = vpop.f32.mrb[0].mxu0
        %v652 = vadd.f32 0.0, %v651
        %v653 = vpop.f32.mrb[0].mxu0
        %654 = vmatprep.mubr.f32.mxu0 0.0
        %655 = vmatmul.mubr.f32.gmra.mrb[0].mxu0 %v549
        %v656 = vpop.f32.mrb[0].mxu0
        %v657 = vadd.f32 0.0, %v656
        %v658 = vpop.f32.mrb[0].mxu0
        %659 = vmatprep.mubr.f32.mxu0 0.0
        %660 = vmatmul.mubr.f32.gmra.mrb[0].mxu0 %v550
        %v661 = vpop.f32.mrb[0].mxu0
        %v662 = vadd.f32 0.0, %v661
        %v663 = vpop.f32.mrb[0].mxu0
        %664 = vmatprep.mubr.f32.mxu0 0.0
        %665 = vmatmul.mubr.f32.gmra.mrb[0].mxu0 %v551
        %v666 = vpop.f32.mrb[0].mxu0
        %v667 = vadd.f32 0.0, %v666
        %v668 = vpop.f32.mrb[0].mxu0
        %669 = vmatprep.mubr.f32.mxu0 0.0
        %670 = vmatmul.mubr.f32.gmra.mrb[0].mxu0 %v552
        %v671 = vpop.f32.mrb[0].mxu0
        %v672 = vadd.f32 0.0, %v671
        %v673 = vpop.f32.mrb[0].mxu0
        %674 = vdwg.mxu0
        %675 = vmatprep.subr.mxu0 0.0
        %676 = vmatpush1.msra.mxu0 %v529
        %677 = vmatprep.subr.mxu0 0.0
        %678 = vmatpush1.msra.mxu0 %v530
        %679 = vmatprep.subr.mxu0 0.0
        %680 = vmatpush1.msra.mxu0 %v531
        %681 = vmatprep.subr.mxu0 0.0
        %682 = vmatpush1.msra.mxu0 %v532
        %683 = vmatprep.subr.mxu0 0.0
        %684 = vmatpush1.msra.mxu0 %v533
        %685 = vmatprep.subr.mxu0 0.0
        %686 = vmatpush1.msra.mxu0 %v534
        %687 = vmatprep.subr.mxu0 0.0
        %688 = vmatpush1.msra.mxu0 %v535
        %689 = vmatprep.subr.mxu0 0.0
        %690 = vmatpush1.msra.mxu0 %v536
        %691 = vmatprep.subr.mxu0 0.0
        %692 = vmatpush1.msra.mxu0 %v537
        %693 = vmatprep.subr.mxu0 0.0
        %694 = vmatpush1.msra.mxu0 %v538
        %695 = vmatprep.subr.mxu0 0.0
        %696 = vmatpush1.msra.mxu0 %v539
        %697 = vmatprep.subr.mxu0 0.0
        %698 = vmatpush1.msra.mxu0 %v540
        %699 = vmatprep.subr.mxu0 0.0
        %700 = vmatpush1.msra.mxu0 %v541
        %701 = vmatprep.subr.mxu0 0.0
        %702 = vmatpush1.msra.mxu0 %v542
        %703 = vmatprep.subr.mxu0 0.0
        %704 = vmatpush1.msra.mxu0 %v543
        %705 = vmatprep.subr.mxu0 0.0
        %706 = vmatpush1.msra.mxu0 %v544
        %707 = vmatprep.subr.mxu0 0.0
        %708 = vmatpush1.msra.mxu0 0.0
        %709 = vmatprep.subr.mxu0 0.0
        %710 = vmatpush1.msra.mxu0 0.0
        %711 = vmatprep.subr.mxu0 0.0
        %712 = vmatpush1.msra.mxu0 0.0
        %713 = vmatprep.subr.mxu0 0.0
        %714 = vmatpush1.msra.mxu0 0.0
        %715 = vmatprep.subr.mxu0 0.0
        %716 = vmatpush1.msra.mxu0 0.0
        %717 = vmatprep.subr.mxu0 0.0
        %718 = vmatpush1.msra.mxu0 0.0
        %719 = vmatprep.subr.mxu0 0.0
        %720 = vmatpush1.msra.mxu0 0.0
        %721 = vmatprep.subr.mxu0 0.0
        %722 = vmatpush1.msra.mxu0 0.0
        %723 = vmatprep.subr.mxu0 0.0
        %724 = vmatpush1.msra.mxu0 0.0
        %725 = vmatprep.subr.mxu0 0.0
        %726 = vmatpush1.msra.mxu0 0.0
        %727 = vmatprep.subr.mxu0 0.0
        %728 = vmatpush1.msra.mxu0 0.0
        %729 = vmatprep.subr.mxu0 0.0
        %730 = vmatpush1.msra.mxu0 0.0
        %731 = vmatprep.subr.mxu0 0.0
        %732 = vmatpush1.msra.mxu0 0.0
        %733 = vmatprep.subr.mxu0 0.0
        %734 = vmatpush1.msra.mxu0 0.0
        %735 = vmatprep.subr.mxu0 0.0
        %736 = vmatpush1.msra.mxu0 0.0
        %737 = vmatprep.subr.mxu0 0.0
        %738 = vmatpush1.msra.mxu0 0.0
        %739 = vmatprep.mubr.f32.mxu0 0.0
        %740 = vmatmul.mubr.f32.gmra.mrb[0].mxu0 %v521
        %v741 = vpop.f32.mrb[0].mxu0
        %v742 = vadd.f32 %v637, %v741
        %v743 = vpop.f32.mrb[0].mxu0
        %744 = vmatprep.mubr.f32.mxu0 0.0
        %745 = vmatmul.mubr.f32.gmra.mrb[0].mxu0 %v522
        %v746 = vpop.f32.mrb[0].mxu0
        %v747 = vadd.f32 %v642, %v746
        %v748 = vpop.f32.mrb[0].mxu0
        %749 = vmatprep.mubr.f32.mxu0 0.0
        %750 = vmatmul.mubr.f32.gmra.mrb[0].mxu0 %v523
        %v751 = vpop.f32.mrb[0].mxu0
        %v752 = vadd.f32 %v647, %v751
        %v753 = vpop.f32.mrb[0].mxu0
        %754 = vmatprep.mubr.f32.mxu0 0.0
        %755 = vmatmul.mubr.f32.gmra.mrb[0].mxu0 %v524
        %v756 = vpop.f32.mrb[0].mxu0
        %v757 = vadd.f32 %v652, %v756
        %v758 = vpop.f32.mrb[0].mxu0
        %759 = vmatprep.mubr.f32.mxu0 0.0
        %760 = vmatmul.mubr.f32.gmra.mrb[0].mxu0 %v525
        %v761 = vpop.f32.mrb[0].mxu0
        %v762 = vadd.f32 %v657, %v761
        %v763 = vpop.f32.mrb[0].mxu0
        %764 = vmatprep.mubr.f32.mxu0 0.0
        %765 = vmatmul.mubr.f32.gmra.mrb[0].mxu0 %v526
        %v766 = vpop.f32.mrb[0].mxu0
        %v767 = vadd.f32 %v662, %v766
        %v768 = vpop.f32.mrb[0].mxu0
        %769 = vmatprep.mubr.f32.mxu0 0.0
        %770 = vmatmul.mubr.f32.gmra.mrb[0].mxu0 %v527
        %v771 = vpop.f32.mrb[0].mxu0
        %v772 = vadd.f32 %v667, %v771
        %v773 = vpop.f32.mrb[0].mxu0
        %774 = vmatprep.mubr.f32.mxu0 0.0
        %775 = vmatmul.mubr.f32.gmra.mrb[0].mxu0 %v528
        %v776 = vpop.f32.mrb[0].mxu0
        %v777 = vadd.f32 %v672, %v776
        %v778 = vpop.f32.mrb[0].mxu0
        %779 = vdwg.mxu0
        %v780 = vld [vmem:[#allocation2 + $0x9] sm:$0xff]
        %v781 = vld [vmem:[#allocation2 + $0x21] sm:$0xff]
        %v782 = vld [vmem:[#allocation2 + $0x39] sm:$0xff]
        %v783 = vld [vmem:[#allocation2 + $0x51] sm:$0xff]
        %v784 = vld [vmem:[#allocation2 + $0x69] sm:$0xff]
        %v785 = vld [vmem:[#allocation2 + $0x81] sm:$0xff]
        %v786 = vld [vmem:[#allocation2 + $0x99] sm:$0xff]
        %v787 = vld [vmem:[#allocation2 + $0xb1] sm:$0xff]
        %s788 = scalar_lea.vmem [#allocation8], 256
        %v789 = vld [vmem:[%s788] sm:$0xff]
        %v790 = vld [vmem:[%s788 + $0x8] sm:$0xff]
        %v791 = vld [vmem:[%s788 + $0x10] sm:$0xff]
        %v792 = vld [vmem:[%s788 + $0x18] sm:$0xff]
        %v793 = vld [vmem:[%s788 + $0x20] sm:$0xff]
        %v794 = vld [vmem:[%s788 + $0x28] sm:$0xff]
        %v795 = vld [vmem:[%s788 + $0x30] sm:$0xff]
        %v796 = vld [vmem:[%s788 + $0x38] sm:$0xff]
        %v797 = vld [vmem:[%s788 + $0x40] sm:$0xff]
        %v798 = vld [vmem:[%s788 + $0x48] sm:$0xff]
        %v799 = vld [vmem:[%s788 + $0x50] sm:$0xff]
        %v800 = vld [vmem:[%s788 + $0x58] sm:$0xff]
        %v801 = vld [vmem:[%s788 + $0x60] sm:$0xff]
        %v802 = vld [vmem:[%s788 + $0x68] sm:$0xff]
        %v803 = vld [vmem:[%s788 + $0x70] sm:$0xff]
        %v804 = vld [vmem:[%s788 + $0x78] sm:$0xff]
        %805 = vmatprep.subr.mxu0 0.0
        %806 = vmatpush1.msra.mxu0 %v789
        %807 = vmatprep.subr.mxu0 0.0
        %808 = vmatpush1.msra.mxu0 %v790
        %809 = vmatprep.subr.mxu0 0.0
        %810 = vmatpush1.msra.mxu0 %v791
        %811 = vmatprep.subr.mxu0 0.0
        %812 = vmatpush1.msra.mxu0 %v792
        %813 = vmatprep.subr.mxu0 0.0
        %814 = vmatpush1.msra.mxu0 %v793
        %815 = vmatprep.subr.mxu0 0.0
        %816 = vmatpush1.msra.mxu0 %v794
        %817 = vmatprep.subr.mxu0 0.0
        %818 = vmatpush1.msra.mxu0 %v795
        %819 = vmatprep.subr.mxu0 0.0
        %820 = vmatpush1.msra.mxu0 %v796
        %821 = vmatprep.subr.mxu0 0.0
        %822 = vmatpush1.msra.mxu0 %v797
        %823 = vmatprep.subr.mxu0 0.0
        %824 = vmatpush1.msra.mxu0 %v798
        %825 = vmatprep.subr.mxu0 0.0
        %826 = vmatpush1.msra.mxu0 %v799
        %827 = vmatprep.subr.mxu0 0.0
        %828 = vmatpush1.msra.mxu0 %v800
        %829 = vmatprep.subr.mxu0 0.0
        %830 = vmatpush1.msra.mxu0 %v801
        %831 = vmatprep.subr.mxu0 0.0
        %832 = vmatpush1.msra.mxu0 %v802
        %833 = vmatprep.subr.mxu0 0.0
        %834 = vmatpush1.msra.mxu0 %v803
        %835 = vmatprep.subr.mxu0 0.0
        %836 = vmatpush1.msra.mxu0 %v804
        %837 = vmatprep.subr.mxu0 0.0
        %838 = vmatpush1.msra.mxu0 0.0
        %839 = vmatprep.subr.mxu0 0.0
        %840 = vmatpush1.msra.mxu0 0.0
        %841 = vmatprep.subr.mxu0 0.0
        %842 = vmatpush1.msra.mxu0 0.0
        %843 = vmatprep.subr.mxu0 0.0
        %844 = vmatpush1.msra.mxu0 0.0
        %845 = vmatprep.subr.mxu0 0.0
        %846 = vmatpush1.msra.mxu0 0.0
        %847 = vmatprep.subr.mxu0 0.0
        %848 = vmatpush1.msra.mxu0 0.0
        %849 = vmatprep.subr.mxu0 0.0
        %850 = vmatpush1.msra.mxu0 0.0
        %851 = vmatprep.subr.mxu0 0.0
        %852 = vmatpush1.msra.mxu0 0.0
        %853 = vmatprep.subr.mxu0 0.0
        %854 = vmatpush1.msra.mxu0 0.0
        %855 = vmatprep.subr.mxu0 0.0
        %856 = vmatpush1.msra.mxu0 0.0
        %857 = vmatprep.subr.mxu0 0.0
        %858 = vmatpush1.msra.mxu0 0.0
        %859 = vmatprep.subr.mxu0 0.0
        %860 = vmatpush1.msra.mxu0 0.0
        %861 = vmatprep.subr.mxu0 0.0
        %862 = vmatpush1.msra.mxu0 0.0
        %863 = vmatprep.subr.mxu0 0.0
        %864 = vmatpush1.msra.mxu0 0.0
        %865 = vmatprep.subr.mxu0 0.0
        %866 = vmatpush1.msra.mxu0 0.0
        %867 = vmatprep.subr.mxu0 0.0
        %868 = vmatpush1.msra.mxu0 0.0
        %869 = vmatprep.mubr.f32.mxu0 0.0
        %870 = vmatmul.mubr.f32.gmra.mrb[0].mxu0 %v780
        %v871 = vpop.f32.mrb[0].mxu0
        %v872 = vadd.f32 0.0, %v871
        %v873 = vpop.f32.mrb[0].mxu0
        %874 = vmatprep.mubr.f32.mxu0 0.0
        %875 = vmatmul.mubr.f32.gmra.mrb[0].mxu0 %v781
        %v876 = vpop.f32.mrb[0].mxu0
        %v877 = vadd.f32 0.0, %v876
        %v878 = vpop.f32.mrb[0].mxu0
        %879 = vmatprep.mubr.f32.mxu0 0.0
        %880 = vmatmul.mubr.f32.gmra.mrb[0].mxu0 %v782
        %v881 = vpop.f32.mrb[0].mxu0
        %v882 = vadd.f32 0.0, %v881
        %v883 = vpop.f32.mrb[0].mxu0
        %884 = vmatprep.mubr.f32.mxu0 0.0
        %885 = vmatmul.mubr.f32.gmra.mrb[0].mxu0 %v783
        %v886 = vpop.f32.mrb[0].mxu0
        %v887 = vadd.f32 0.0, %v886
        %v888 = vpop.f32.mrb[0].mxu0
        %889 = vmatprep.mubr.f32.mxu0 0.0
        %890 = vmatmul.mubr.f32.gmra.mrb[0].mxu0 %v784
        %v891 = vpop.f32.mrb[0].mxu0
        %v892 = vadd.f32 0.0, %v891
        %v893 = vpop.f32.mrb[0].mxu0
        %894 = vmatprep.mubr.f32.mxu0 0.0
        %895 = vmatmul.mubr.f32.gmra.mrb[0].mxu0 %v785
        %v896 = vpop.f32.mrb[0].mxu0
        %v897 = vadd.f32 0.0, %v896
        %v898 = vpop.f32.mrb[0].mxu0
        %899 = vmatprep.mubr.f32.mxu0 0.0
        %900 = vmatmul.mubr.f32.gmra.mrb[0].mxu0 %v786
        %v901 = vpop.f32.mrb[0].mxu0
        %v902 = vadd.f32 0.0, %v901
        %v903 = vpop.f32.mrb[0].mxu0
        %904 = vmatprep.mubr.f32.mxu0 0.0
        %905 = vmatmul.mubr.f32.gmra.mrb[0].mxu0 %v787
        %v906 = vpop.f32.mrb[0].mxu0
        %v907 = vadd.f32 0.0, %v906
        %v908 = vpop.f32.mrb[0].mxu0
        %909 = vdwg.mxu0
        %v910 = vadd.f32 %v742, %v872
        %v911 = vadd.f32 %v747, %v877
        %v912 = vadd.f32 %v752, %v882
        %v913 = vadd.f32 %v757, %v887
        %v914 = vadd.f32 %v762, %v892
        %v915 = vadd.f32 %v767, %v897
        %v916 = vadd.f32 %v772, %v902
        %v917 = vadd.f32 %v777, %v907
        %v918 = vld [vmem:[%s512 + $0x7] sm:$0xff]
        %v919 = vld [vmem:[%s512 + $0x1f] sm:$0xff]
        %v920 = vld [vmem:[%s512 + $0x37] sm:$0xff]
        %v921 = vld [vmem:[%s512 + $0x4f] sm:$0xff]
        %v922 = vld [vmem:[%s512 + $0x67] sm:$0xff]
        %v923 = vld [vmem:[%s512 + $0x7f] sm:$0xff]
        %v924 = vld [vmem:[%s512 + $0x97] sm:$0xff]
        %v925 = vld [vmem:[%s512 + $0xaf] sm:$0xff]
        %s926 = scalar_lea.vmem [#allocation8], 384
        %v927 = vld [vmem:[%s926] sm:$0xff]
        %v928 = vld [vmem:[%s926 + $0x8] sm:$0xff]
        %v929 = vld [vmem:[%s926 + $0x10] sm:$0xff]
        %v930 = vld [vmem:[%s926 + $0x18] sm:$0xff]
        %v931 = vld [vmem:[%s926 + $0x20] sm:$0xff]
        %v932 = vld [vmem:[%s926 + $0x28] sm:$0xff]
        %v933 = vld [vmem:[%s926 + $0x30] sm:$0xff]
        %v934 = vld [vmem:[%s926 + $0x38] sm:$0xff]
        %v935 = vld [vmem:[%s926 + $0x40] sm:$0xff]
        %v936 = vld [vmem:[%s926 + $0x48] sm:$0xff]
        %v937 = vld [vmem:[%s926 + $0x50] sm:$0xff]
        %v938 = vld [vmem:[%s926 + $0x58] sm:$0xff]
        %v939 = vld [vmem:[%s926 + $0x60] sm:$0xff]
        %v940 = vld [vmem:[%s926 + $0x68] sm:$0xff]
        %v941 = vld [vmem:[%s926 + $0x70] sm:$0xff]
        %v942 = vld [vmem:[%s926 + $0x78] sm:$0xff]
        %943 = vmatprep.subr.mxu0 0.0
        %944 = vmatpush1.msra.mxu0 %v927
        %945 = vmatprep.subr.mxu0 0.0
        %946 = vmatpush1.msra.mxu0 %v928
        %947 = vmatprep.subr.mxu0 0.0
        %948 = vmatpush1.msra.mxu0 %v929
        %949 = vmatprep.subr.mxu0 0.0
        %950 = vmatpush1.msra.mxu0 %v930
        %951 = vmatprep.subr.mxu0 0.0
        %952 = vmatpush1.msra.mxu0 %v931
        %953 = vmatprep.subr.mxu0 0.0
        %954 = vmatpush1.msra.mxu0 %v932
        %955 = vmatprep.subr.mxu0 0.0
        %956 = vmatpush1.msra.mxu0 %v933
        %957 = vmatprep.subr.mxu0 0.0
        %958 = vmatpush1.msra.mxu0 %v934
        %959 = vmatprep.subr.mxu0 0.0
        %960 = vmatpush1.msra.mxu0 %v935
        %961 = vmatprep.subr.mxu0 0.0
        %962 = vmatpush1.msra.mxu0 %v936
        %963 = vmatprep.subr.mxu0 0.0
        %964 = vmatpush1.msra.mxu0 %v937
        %965 = vmatprep.subr.mxu0 0.0
        %966 = vmatpush1.msra.mxu0 %v938
        %967 = vmatprep.subr.mxu0 0.0
        %968 = vmatpush1.msra.mxu0 %v939
        %969 = vmatprep.subr.mxu0 0.0
        %970 = vmatpush1.msra.mxu0 %v940
        %971 = vmatprep.subr.mxu0 0.0
        %972 = vmatpush1.msra.mxu0 %v941
        %973 = vmatprep.subr.mxu0 0.0
        %974 = vmatpush1.msra.mxu0 %v942
        %975 = vmatprep.subr.mxu0 0.0
        %976 = vmatpush1.msra.mxu0 0.0
        %977 = vmatprep.subr.mxu0 0.0
        %978 = vmatpush1.msra.mxu0 0.0
        %979 = vmatprep.subr.mxu0 0.0
        %980 = vmatpush1.msra.mxu0 0.0
        %981 = vmatprep.subr.mxu0 0.0
        %982 = vmatpush1.msra.mxu0 0.0
        %983 = vmatprep.subr.mxu0 0.0
        %984 = vmatpush1.msra.mxu0 0.0
        %985 = vmatprep.subr.mxu0 0.0
        %986 = vmatpush1.msra.mxu0 0.0
        %987 = vmatprep.subr.mxu0 0.0
        %988 = vmatpush1.msra.mxu0 0.0
        %989 = vmatprep.subr.mxu0 0.0
        %990 = vmatpush1.msra.mxu0 0.0
        %991 = vmatprep.subr.mxu0 0.0
        %992 = vmatpush1.msra.mxu0 0.0
        %993 = vmatprep.subr.mxu0 0.0
        %994 = vmatpush1.msra.mxu0 0.0
        %995 = vmatprep.subr.mxu0 0.0
        %996 = vmatpush1.msra.mxu0 0.0
        %997 = vmatprep.subr.mxu0 0.0
        %998 = vmatpush1.msra.mxu0 0.0
        %999 = vmatprep.subr.mxu0 0.0
        %1000 = vmatpush1.msra.mxu0 0.0
        %1001 = vmatprep.subr.mxu0 0.0
        %1002 = vmatpush1.msra.mxu0 0.0
        %1003 = vmatprep.subr.mxu0 0.0
        %1004 = vmatpush1.msra.mxu0 0.0
        %1005 = vmatprep.subr.mxu0 0.0
        %1006 = vmatpush1.msra.mxu0 0.0
        %1007 = vmatprep.mubr.f32.mxu0 0.0
        %1008 = vmatmul.mubr.f32.gmra.mrb[0].mxu0 %v918
        %v1009 = vpop.f32.mrb[0].mxu0
        %v1010 = vadd.f32 0.0, %v1009
        %v1011 = vpop.f32.mrb[0].mxu0
        %1012 = vmatprep.mubr.f32.mxu0 0.0
        %1013 = vmatmul.mubr.f32.gmra.mrb[0].mxu0 %v919
        %v1014 = vpop.f32.mrb[0].mxu0
        %v1015 = vadd.f32 0.0, %v1014
        %v1016 = vpop.f32.mrb[0].mxu0
        %1017 = vmatprep.mubr.f32.mxu0 0.0
        %1018 = vmatmul.mubr.f32.gmra.mrb[0].mxu0 %v920
        %v1019 = vpop.f32.mrb[0].mxu0
        %v1020 = vadd.f32 0.0, %v1019
        %v1021 = vpop.f32.mrb[0].mxu0
        %1022 = vmatprep.mubr.f32.mxu0 0.0
        %1023 = vmatmul.mubr.f32.gmra.mrb[0].mxu0 %v921
        %v1024 = vpop.f32.mrb[0].mxu0
        %v1025 = vadd.f32 0.0, %v1024
        %v1026 = vpop.f32.mrb[0].mxu0
        %1027 = vmatprep.mubr.f32.mxu0 0.0
        %1028 = vmatmul.mubr.f32.gmra.mrb[0].mxu0 %v922
        %v1029 = vpop.f32.mrb[0].mxu0
        %v1030 = vadd.f32 0.0, %v1029
        %v1031 = vpop.f32.mrb[0].mxu0
        %1032 = vmatprep.mubr.f32.mxu0 0.0
        %1033 = vmatmul.mubr.f32.gmra.mrb[0].mxu0 %v923
        %v1034 = vpop.f32.mrb[0].mxu0
        %v1035 = vadd.f32 0.0, %v1034
        %v1036 = vpop.f32.mrb[0].mxu0
        %1037 = vmatprep.mubr.f32.mxu0 0.0
        %1038 = vmatmul.mubr.f32.gmra.mrb[0].mxu0 %v924
        %v1039 = vpop.f32.mrb[0].mxu0
        %v1040 = vadd.f32 0.0, %v1039
        %v1041 = vpop.f32.mrb[0].mxu0
        %1042 = vmatprep.mubr.f32.mxu0 0.0
        %1043 = vmatmul.mubr.f32.gmra.mrb[0].mxu0 %v925
        %v1044 = vpop.f32.mrb[0].mxu0
        %v1045 = vadd.f32 0.0, %v1044
        %v1046 = vpop.f32.mrb[0].mxu0
        %1047 = vdwg.mxu0
        %v1048 = vadd.f32 %v910, %v1010
        %v1049 = vadd.f32 %v911, %v1015
        %v1050 = vadd.f32 %v912, %v1020
        %v1051 = vadd.f32 %v913, %v1025
        %v1052 = vadd.f32 %v914, %v1030
        %v1053 = vadd.f32 %v915, %v1035
        %v1054 = vadd.f32 %v916, %v1040
        %v1055 = vadd.f32 %v917, %v1045
        %v1056 = vld [vmem:[%s512 + $0x8] sm:$0xff]
        %v1057 = vld [vmem:[%s512 + $0x20] sm:$0xff]
        %v1058 = vld [vmem:[%s512 + $0x38] sm:$0xff]
        %v1059 = vld [vmem:[%s512 + $0x50] sm:$0xff]
        %v1060 = vld [vmem:[%s512 + $0x68] sm:$0xff]
        %v1061 = vld [vmem:[%s512 + $0x80] sm:$0xff]
        %v1062 = vld [vmem:[%s512 + $0x98] sm:$0xff]
        %v1063 = vld [vmem:[%s512 + $0xb0] sm:$0xff]
        %s1064 = scalar_lea.vmem [#allocation8], 512
        %v1065 = vld [vmem:[%s1064] sm:$0xff]
        %v1066 = vld [vmem:[%s1064 + $0x8] sm:$0xff]
        %v1067 = vld [vmem:[%s1064 + $0x10] sm:$0xff]
        %v1068 = vld [vmem:[%s1064 + $0x18] sm:$0xff]
        %v1069 = vld [vmem:[%s1064 + $0x20] sm:$0xff]
        %v1070 = vld [vmem:[%s1064 + $0x28] sm:$0xff]
        %v1071 = vld [vmem:[%s1064 + $0x30] sm:$0xff]
        %v1072 = vld [vmem:[%s1064 + $0x38] sm:$0xff]
        %v1073 = vld [vmem:[%s1064 + $0x40] sm:$0xff]
        %v1074 = vld [vmem:[%s1064 + $0x48] sm:$0xff]
        %v1075 = vld [vmem:[%s1064 + $0x50] sm:$0xff]
        %v1076 = vld [vmem:[%s1064 + $0x58] sm:$0xff]
        %v1077 = vld [vmem:[%s1064 + $0x60] sm:$0xff]
        %v1078 = vld [vmem:[%s1064 + $0x68] sm:$0xff]
        %v1079 = vld [vmem:[%s1064 + $0x70] sm:$0xff]
        %v1080 = vld [vmem:[%s1064 + $0x78] sm:$0xff]
        %1081 = vmatprep.subr.mxu0 0.0
        %1082 = vmatpush1.msra.mxu0 %v1065
        %1083 = vmatprep.subr.mxu0 0.0
        %1084 = vmatpush1.msra.mxu0 %v1066
        %1085 = vmatprep.subr.mxu0 0.0
        %1086 = vmatpush1.msra.mxu0 %v1067
        %1087 = vmatprep.subr.mxu0 0.0
        %1088 = vmatpush1.msra.mxu0 %v1068
        %1089 = vmatprep.subr.mxu0 0.0
        %1090 = vmatpush1.msra.mxu0 %v1069
        %1091 = vmatprep.subr.mxu0 0.0
        %1092 = vmatpush1.msra.mxu0 %v1070
        %1093 = vmatprep.subr.mxu0 0.0
        %1094 = vmatpush1.msra.mxu0 %v1071
        %1095 = vmatprep.subr.mxu0 0.0
        %1096 = vmatpush1.msra.mxu0 %v1072
        %1097 = vmatprep.subr.mxu0 0.0
        %1098 = vmatpush1.msra.mxu0 %v1073
        %1099 = vmatprep.subr.mxu0 0.0
        %1100 = vmatpush1.msra.mxu0 %v1074
        %1101 = vmatprep.subr.mxu0 0.0
        %1102 = vmatpush1.msra.mxu0 %v1075
        %1103 = vmatprep.subr.mxu0 0.0
        %1104 = vmatpush1.msra.mxu0 %v1076
        %1105 = vmatprep.subr.mxu0 0.0
        %1106 = vmatpush1.msra.mxu0 %v1077
        %1107 = vmatprep.subr.mxu0 0.0
        %1108 = vmatpush1.msra.mxu0 %v1078
        %1109 = vmatprep.subr.mxu0 0.0
        %1110 = vmatpush1.msra.mxu0 %v1079
        %1111 = vmatprep.subr.mxu0 0.0
        %1112 = vmatpush1.msra.mxu0 %v1080
        %1113 = vmatprep.subr.mxu0 0.0
        %1114 = vmatpush1.msra.mxu0 0.0
        %1115 = vmatprep.subr.mxu0 0.0
        %1116 = vmatpush1.msra.mxu0 0.0
        %1117 = vmatprep.subr.mxu0 0.0
        %1118 = vmatpush1.msra.mxu0 0.0
        %1119 = vmatprep.subr.mxu0 0.0
        %1120 = vmatpush1.msra.mxu0 0.0
        %1121 = vmatprep.subr.mxu0 0.0
        %1122 = vmatpush1.msra.mxu0 0.0
        %1123 = vmatprep.subr.mxu0 0.0
        %1124 = vmatpush1.msra.mxu0 0.0
        %1125 = vmatprep.subr.mxu0 0.0
        %1126 = vmatpush1.msra.mxu0 0.0
        %1127 = vmatprep.subr.mxu0 0.0
        %1128 = vmatpush1.msra.mxu0 0.0
        %1129 = vmatprep.subr.mxu0 0.0
        %1130 = vmatpush1.msra.mxu0 0.0
        %1131 = vmatprep.subr.mxu0 0.0
        %1132 = vmatpush1.msra.mxu0 0.0
        %1133 = vmatprep.subr.mxu0 0.0
        %1134 = vmatpush1.msra.mxu0 0.0
        %1135 = vmatprep.subr.mxu0 0.0
        %1136 = vmatpush1.msra.mxu0 0.0
        %1137 = vmatprep.subr.mxu0 0.0
        %1138 = vmatpush1.msra.mxu0 0.0
        %1139 = vmatprep.subr.mxu0 0.0
        %1140 = vmatpush1.msra.mxu0 0.0
        %1141 = vmatprep.subr.mxu0 0.0
        %1142 = vmatpush1.msra.mxu0 0.0
        %1143 = vmatprep.subr.mxu0 0.0
        %1144 = vmatpush1.msra.mxu0 0.0
        %1145 = vmatprep.mubr.f32.mxu0 0.0
        %1146 = vmatmul.mubr.f32.gmra.mrb[0].mxu0 %v1056
        %v1147 = vpop.f32.mrb[0].mxu0
        %v1148 = vadd.f32 0.0, %v1147
        %v1149 = vpop.f32.mrb[0].mxu0
        %1150 = vmatprep.mubr.f32.mxu0 0.0
        %1151 = vmatmul.mubr.f32.gmra.mrb[0].mxu0 %v1057
        %v1152 = vpop.f32.mrb[0].mxu0
        %v1153 = vadd.f32 0.0, %v1152
        %v1154 = vpop.f32.mrb[0].mxu0
        %1155 = vmatprep.mubr.f32.mxu0 0.0
        %1156 = vmatmul.mubr.f32.gmra.mrb[0].mxu0 %v1058
        %v1157 = vpop.f32.mrb[0].mxu0
        %v1158 = vadd.f32 0.0, %v1157
        %v1159 = vpop.f32.mrb[0].mxu0
        %1160 = vmatprep.mubr.f32.mxu0 0.0
        %1161 = vmatmul.mubr.f32.gmra.mrb[0].mxu0 %v1059
        %v1162 = vpop.f32.mrb[0].mxu0
        %v1163 = vadd.f32 0.0, %v1162
        %v1164 = vpop.f32.mrb[0].mxu0
        %1165 = vmatprep.mubr.f32.mxu0 0.0
        %1166 = vmatmul.mubr.f32.gmra.mrb[0].mxu0 %v1060
        %v1167 = vpop.f32.mrb[0].mxu0
        %v1168 = vadd.f32 0.0, %v1167
        %v1169 = vpop.f32.mrb[0].mxu0
        %1170 = vmatprep.mubr.f32.mxu0 0.0
        %1171 = vmatmul.mubr.f32.gmra.mrb[0].mxu0 %v1061
        %v1172 = vpop.f32.mrb[0].mxu0
        %v1173 = vadd.f32 0.0, %v1172
        %v1174 = vpop.f32.mrb[0].mxu0
        %1175 = vmatprep.mubr.f32.mxu0 0.0
        %1176 = vmatmul.mubr.f32.gmra.mrb[0].mxu0 %v1062
        %v1177 = vpop.f32.mrb[0].mxu0
        %v1178 = vadd.f32 0.0, %v1177
        %v1179 = vpop.f32.mrb[0].mxu0
        %1180 = vmatprep.mubr.f32.mxu0 0.0
        %1181 = vmatmul.mubr.f32.gmra.mrb[0].mxu0 %v1063
        %v1182 = vpop.f32.mrb[0].mxu0
        %v1183 = vadd.f32 0.0, %v1182
        %v1184 = vpop.f32.mrb[0].mxu0
        %1185 = vdwg.mxu0
        %v1186 = vadd.f32 %v1048, %v1148
        %v1187 = vadd.f32 %v1049, %v1153
        %v1188 = vadd.f32 %v1050, %v1158
        %v1189 = vadd.f32 %v1051, %v1163
        %v1190 = vadd.f32 %v1052, %v1168
        %v1191 = vadd.f32 %v1053, %v1173
        %v1192 = vadd.f32 %v1054, %v1178
        %v1193 = vadd.f32 %v1055, %v1183
        %v1194 = vld [vmem:[%s512 + $0x9] sm:$0xff]
        %v1195 = vld [vmem:[%s512 + $0x21] sm:$0xff]
        %v1196 = vld [vmem:[%s512 + $0x39] sm:$0xff]
        %v1197 = vld [vmem:[%s512 + $0x51] sm:$0xff]
        %v1198 = vld [vmem:[%s512 + $0x69] sm:$0xff]
        %v1199 = vld [vmem:[%s512 + $0x81] sm:$0xff]
        %v1200 = vld [vmem:[%s512 + $0x99] sm:$0xff]
        %v1201 = vld [vmem:[%s512 + $0xb1] sm:$0xff]
        %s1202 = scalar_lea.vmem [#allocation8], 640
        %v1203 = vld [vmem:[%s1202] sm:$0xff]
        %v1204 = vld [vmem:[%s1202 + $0x8] sm:$0xff]
        %v1205 = vld [vmem:[%s1202 + $0x10] sm:$0xff]
        %v1206 = vld [vmem:[%s1202 + $0x18] sm:$0xff]
        %v1207 = vld [vmem:[%s1202 + $0x20] sm:$0xff]
        %v1208 = vld [vmem:[%s1202 + $0x28] sm:$0xff]
        %v1209 = vld [vmem:[%s1202 + $0x30] sm:$0xff]
        %v1210 = vld [vmem:[%s1202 + $0x38] sm:$0xff]
        %v1211 = vld [vmem:[%s1202 + $0x40] sm:$0xff]
        %v1212 = vld [vmem:[%s1202 + $0x48] sm:$0xff]
        %v1213 = vld [vmem:[%s1202 + $0x50] sm:$0xff]
        %v1214 = vld [vmem:[%s1202 + $0x58] sm:$0xff]
        %v1215 = vld [vmem:[%s1202 + $0x60] sm:$0xff]
        %v1216 = vld [vmem:[%s1202 + $0x68] sm:$0xff]
        %v1217 = vld [vmem:[%s1202 + $0x70] sm:$0xff]
        %v1218 = vld [vmem:[%s1202 + $0x78] sm:$0xff]
        %1219 = vmatprep.subr.mxu0 0.0
        %1220 = vmatpush1.msra.mxu0 %v1203
        %1221 = vmatprep.subr.mxu0 0.0
        %1222 = vmatpush1.msra.mxu0 %v1204
        %1223 = vmatprep.subr.mxu0 0.0
        %1224 = vmatpush1.msra.mxu0 %v1205
        %1225 = vmatprep.subr.mxu0 0.0
        %1226 = vmatpush1.msra.mxu0 %v1206
        %1227 = vmatprep.subr.mxu0 0.0
        %1228 = vmatpush1.msra.mxu0 %v1207
        %1229 = vmatprep.subr.mxu0 0.0
        %1230 = vmatpush1.msra.mxu0 %v1208
        %1231 = vmatprep.subr.mxu0 0.0
        %1232 = vmatpush1.msra.mxu0 %v1209
        %1233 = vmatprep.subr.mxu0 0.0
        %1234 = vmatpush1.msra.mxu0 %v1210
        %1235 = vmatprep.subr.mxu0 0.0
        %1236 = vmatpush1.msra.mxu0 %v1211
        %1237 = vmatprep.subr.mxu0 0.0
        %1238 = vmatpush1.msra.mxu0 %v1212
        %1239 = vmatprep.subr.mxu0 0.0
        %1240 = vmatpush1.msra.mxu0 %v1213
        %1241 = vmatprep.subr.mxu0 0.0
        %1242 = vmatpush1.msra.mxu0 %v1214
        %1243 = vmatprep.subr.mxu0 0.0
        %1244 = vmatpush1.msra.mxu0 %v1215
        %1245 = vmatprep.subr.mxu0 0.0
        %1246 = vmatpush1.msra.mxu0 %v1216
        %1247 = vmatprep.subr.mxu0 0.0
        %1248 = vmatpush1.msra.mxu0 %v1217
        %1249 = vmatprep.subr.mxu0 0.0
        %1250 = vmatpush1.msra.mxu0 %v1218
        %1251 = vmatprep.subr.mxu0 0.0
        %1252 = vmatpush1.msra.mxu0 0.0
        %1253 = vmatprep.subr.mxu0 0.0
        %1254 = vmatpush1.msra.mxu0 0.0
        %1255 = vmatprep.subr.mxu0 0.0
        %1256 = vmatpush1.msra.mxu0 0.0
        %1257 = vmatprep.subr.mxu0 0.0
        %1258 = vmatpush1.msra.mxu0 0.0
        %1259 = vmatprep.subr.mxu0 0.0
        %1260 = vmatpush1.msra.mxu0 0.0
        %1261 = vmatprep.subr.mxu0 0.0
        %1262 = vmatpush1.msra.mxu0 0.0
        %1263 = vmatprep.subr.mxu0 0.0
        %1264 = vmatpush1.msra.mxu0 0.0
        %1265 = vmatprep.subr.mxu0 0.0
        %1266 = vmatpush1.msra.mxu0 0.0
        %1267 = vmatprep.subr.mxu0 0.0
        %1268 = vmatpush1.msra.mxu0 0.0
        %1269 = vmatprep.subr.mxu0 0.0
        %1270 = vmatpush1.msra.mxu0 0.0
        %1271 = vmatprep.subr.mxu0 0.0
        %1272 = vmatpush1.msra.mxu0 0.0
        %1273 = vmatprep.subr.mxu0 0.0
        %1274 = vmatpush1.msra.mxu0 0.0
        %1275 = vmatprep.subr.mxu0 0.0
        %1276 = vmatpush1.msra.mxu0 0.0
        %1277 = vmatprep.subr.mxu0 0.0
        %1278 = vmatpush1.msra.mxu0 0.0
        %1279 = vmatprep.subr.mxu0 0.0
        %1280 = vmatpush1.msra.mxu0 0.0
        %1281 = vmatprep.subr.mxu0 0.0
        %1282 = vmatpush1.msra.mxu0 0.0
        %1283 = vmatprep.mubr.f32.mxu0 0.0
        %1284 = vmatmul.mubr.f32.gmra.mrb[0].mxu0 %v1194
        %v1285 = vpop.f32.mrb[0].mxu0
        %v1286 = vadd.f32 0.0, %v1285
        %v1287 = vpop.f32.mrb[0].mxu0
        %1288 = vmatprep.mubr.f32.mxu0 0.0
        %1289 = vmatmul.mubr.f32.gmra.mrb[0].mxu0 %v1195
        %v1290 = vpop.f32.mrb[0].mxu0
        %v1291 = vadd.f32 0.0, %v1290
        %v1292 = vpop.f32.mrb[0].mxu0
        %1293 = vmatprep.mubr.f32.mxu0 0.0
        %1294 = vmatmul.mubr.f32.gmra.mrb[0].mxu0 %v1196
        %v1295 = vpop.f32.mrb[0].mxu0
        %v1296 = vadd.f32 0.0, %v1295
        %v1297 = vpop.f32.mrb[0].mxu0
        %1298 = vmatprep.mubr.f32.mxu0 0.0
        %1299 = vmatmul.mubr.f32.gmra.mrb[0].mxu0 %v1197
        %v1300 = vpop.f32.mrb[0].mxu0
        %v1301 = vadd.f32 0.0, %v1300
        %v1302 = vpop.f32.mrb[0].mxu0
        %1303 = vmatprep.mubr.f32.mxu0 0.0
        %1304 = vmatmul.mubr.f32.gmra.mrb[0].mxu0 %v1198
        %v1305 = vpop.f32.mrb[0].mxu0
        %v1306 = vadd.f32 0.0, %v1305
        %v1307 = vpop.f32.mrb[0].mxu0
        %1308 = vmatprep.mubr.f32.mxu0 0.0
        %1309 = vmatmul.mubr.f32.gmra.mrb[0].mxu0 %v1199
        %v1310 = vpop.f32.mrb[0].mxu0
        %v1311 = vadd.f32 0.0, %v1310
        %v1312 = vpop.f32.mrb[0].mxu0
        %1313 = vmatprep.mubr.f32.mxu0 0.0
        %1314 = vmatmul.mubr.f32.gmra.mrb[0].mxu0 %v1200
        %v1315 = vpop.f32.mrb[0].mxu0
        %v1316 = vadd.f32 0.0, %v1315
        %v1317 = vpop.f32.mrb[0].mxu0
        %1318 = vmatprep.mubr.f32.mxu0 0.0
        %1319 = vmatmul.mubr.f32.gmra.mrb[0].mxu0 %v1201
        %v1320 = vpop.f32.mrb[0].mxu0
        %v1321 = vadd.f32 0.0, %v1320
        %v1322 = vpop.f32.mrb[0].mxu0
        %1323 = vdwg.mxu0
        %v1324 = vadd.f32 %v1186, %v1286
        %v1325 = vadd.f32 %v1187, %v1291
        %v1326 = vadd.f32 %v1188, %v1296
        %v1327 = vadd.f32 %v1189, %v1301
        %v1328 = vadd.f32 %v1190, %v1306
        %v1329 = vadd.f32 %v1191, %v1311
        %v1330 = vadd.f32 %v1192, %v1316
        %v1331 = vadd.f32 %v1193, %v1321
        %s1332 = scalar_lea.vmem [#allocation2], 48
        %v1333 = vld [vmem:[%s1332 + $0x7] sm:$0xff]
        %v1334 = vld [vmem:[%s1332 + $0x1f] sm:$0xff]
        %v1335 = vld [vmem:[%s1332 + $0x37] sm:$0xff]
        %v1336 = vld [vmem:[%s1332 + $0x4f] sm:$0xff]
        %v1337 = vld [vmem:[%s1332 + $0x67] sm:$0xff]
        %v1338 = vld [vmem:[%s1332 + $0x7f] sm:$0xff]
        %v1339 = vld [vmem:[%s1332 + $0x97] sm:$0xff]
        %v1340 = vld [vmem:[%s1332 + $0xaf] sm:$0xff]
        %s1341 = scalar_lea.vmem [#allocation8], 768
        %v1342 = vld [vmem:[%s1341] sm:$0xff]
        %v1343 = vld [vmem:[%s1341 + $0x8] sm:$0xff]
        %v1344 = vld [vmem:[%s1341 + $0x10] sm:$0xff]
        %v1345 = vld [vmem:[%s1341 + $0x18] sm:$0xff]
        %v1346 = vld [vmem:[%s1341 + $0x20] sm:$0xff]
        %v1347 = vld [vmem:[%s1341 + $0x28] sm:$0xff]
        %v1348 = vld [vmem:[%s1341 + $0x30] sm:$0xff]
        %v1349 = vld [vmem:[%s1341 + $0x38] sm:$0xff]
        %v1350 = vld [vmem:[%s1341 + $0x40] sm:$0xff]
        %v1351 = vld [vmem:[%s1341 + $0x48] sm:$0xff]
        %v1352 = vld [vmem:[%s1341 + $0x50] sm:$0xff]
        %v1353 = vld [vmem:[%s1341 + $0x58] sm:$0xff]
        %v1354 = vld [vmem:[%s1341 + $0x60] sm:$0xff]
        %v1355 = vld [vmem:[%s1341 + $0x68] sm:$0xff]
        %v1356 = vld [vmem:[%s1341 + $0x70] sm:$0xff]
        %v1357 = vld [vmem:[%s1341 + $0x78] sm:$0xff]
        %1358 = vmatprep.subr.mxu0 0.0
        %1359 = vmatpush1.msra.mxu0 %v1342
        %1360 = vmatprep.subr.mxu0 0.0
        %1361 = vmatpush1.msra.mxu0 %v1343
        %1362 = vmatprep.subr.mxu0 0.0
        %1363 = vmatpush1.msra.mxu0 %v1344
        %1364 = vmatprep.subr.mxu0 0.0
        %1365 = vmatpush1.msra.mxu0 %v1345
        %1366 = vmatprep.subr.mxu0 0.0
        %1367 = vmatpush1.msra.mxu0 %v1346
        %1368 = vmatprep.subr.mxu0 0.0
        %1369 = vmatpush1.msra.mxu0 %v1347
        %1370 = vmatprep.subr.mxu0 0.0
        %1371 = vmatpush1.msra.mxu0 %v1348
        %1372 = vmatprep.subr.mxu0 0.0
        %1373 = vmatpush1.msra.mxu0 %v1349
        %1374 = vmatprep.subr.mxu0 0.0
        %1375 = vmatpush1.msra.mxu0 %v1350
        %1376 = vmatprep.subr.mxu0 0.0
        %1377 = vmatpush1.msra.mxu0 %v1351
        %1378 = vmatprep.subr.mxu0 0.0
        %1379 = vmatpush1.msra.mxu0 %v1352
        %1380 = vmatprep.subr.mxu0 0.0
        %1381 = vmatpush1.msra.mxu0 %v1353
        %1382 = vmatprep.subr.mxu0 0.0
        %1383 = vmatpush1.msra.mxu0 %v1354
        %1384 = vmatprep.subr.mxu0 0.0
        %1385 = vmatpush1.msra.mxu0 %v1355
        %1386 = vmatprep.subr.mxu0 0.0
        %1387 = vmatpush1.msra.mxu0 %v1356
        %1388 = vmatprep.subr.mxu0 0.0
        %1389 = vmatpush1.msra.mxu0 %v1357
        %1390 = vmatprep.subr.mxu0 0.0
        %1391 = vmatpush1.msra.mxu0 0.0
        %1392 = vmatprep.subr.mxu0 0.0
        %1393 = vmatpush1.msra.mxu0 0.0
        %1394 = vmatprep.subr.mxu0 0.0
        %1395 = vmatpush1.msra.mxu0 0.0
        %1396 = vmatprep.subr.mxu0 0.0
        %1397 = vmatpush1.msra.mxu0 0.0
        %1398 = vmatprep.subr.mxu0 0.0
        %1399 = vmatpush1.msra.mxu0 0.0
        %1400 = vmatprep.subr.mxu0 0.0
        %1401 = vmatpush1.msra.mxu0 0.0
        %1402 = vmatprep.subr.mxu0 0.0
        %1403 = vmatpush1.msra.mxu0 0.0
        %1404 = vmatprep.subr.mxu0 0.0
        %1405 = vmatpush1.msra.mxu0 0.0
        %1406 = vmatprep.subr.mxu0 0.0
        %1407 = vmatpush1.msra.mxu0 0.0
        %1408 = vmatprep.subr.mxu0 0.0
        %1409 = vmatpush1.msra.mxu0 0.0
        %1410 = vmatprep.subr.mxu0 0.0
        %1411 = vmatpush1.msra.mxu0 0.0
        %1412 = vmatprep.subr.mxu0 0.0
        %1413 = vmatpush1.msra.mxu0 0.0
        %1414 = vmatprep.subr.mxu0 0.0
        %1415 = vmatpush1.msra.mxu0 0.0
        %1416 = vmatprep.subr.mxu0 0.0
        %1417 = vmatpush1.msra.mxu0 0.0
        %1418 = vmatprep.subr.mxu0 0.0
        %1419 = vmatpush1.msra.mxu0 0.0
        %1420 = vmatprep.subr.mxu0 0.0
        %1421 = vmatpush1.msra.mxu0 0.0
        %1422 = vmatprep.mubr.f32.mxu0 0.0
        %1423 = vmatmul.mubr.f32.gmra.mrb[0].mxu0 %v1333
        %v1424 = vpop.f32.mrb[0].mxu0
        %v1425 = vadd.f32 0.0, %v1424
        %v1426 = vpop.f32.mrb[0].mxu0
        %1427 = vmatprep.mubr.f32.mxu0 0.0
        %1428 = vmatmul.mubr.f32.gmra.mrb[0].mxu0 %v1334
        %v1429 = vpop.f32.mrb[0].mxu0
        %v1430 = vadd.f32 0.0, %v1429
        %v1431 = vpop.f32.mrb[0].mxu0
        %1432 = vmatprep.mubr.f32.mxu0 0.0
        %1433 = vmatmul.mubr.f32.gmra.mrb[0].mxu0 %v1335
        %v1434 = vpop.f32.mrb[0].mxu0
        %v1435 = vadd.f32 0.0, %v1434
        %v1436 = vpop.f32.mrb[0].mxu0
        %1437 = vmatprep.mubr.f32.mxu0 0.0
        %1438 = vmatmul.mubr.f32.gmra.mrb[0].mxu0 %v1336
        %v1439 = vpop.f32.mrb[0].mxu0
        %v1440 = vadd.f32 0.0, %v1439
        %v1441 = vpop.f32.mrb[0].mxu0
        %1442 = vmatprep.mubr.f32.mxu0 0.0
        %1443 = vmatmul.mubr.f32.gmra.mrb[0].mxu0 %v1337
        %v1444 = vpop.f32.mrb[0].mxu0
        %v1445 = vadd.f32 0.0, %v1444
        %v1446 = vpop.f32.mrb[0].mxu0
        %1447 = vmatprep.mubr.f32.mxu0 0.0
        %1448 = vmatmul.mubr.f32.gmra.mrb[0].mxu0 %v1338
        %v1449 = vpop.f32.mrb[0].mxu0
        %v1450 = vadd.f32 0.0, %v1449
        %v1451 = vpop.f32.mrb[0].mxu0
        %1452 = vmatprep.mubr.f32.mxu0 0.0
        %1453 = vmatmul.mubr.f32.gmra.mrb[0].mxu0 %v1339
        %v1454 = vpop.f32.mrb[0].mxu0
        %v1455 = vadd.f32 0.0, %v1454
        %v1456 = vpop.f32.mrb[0].mxu0
        %1457 = vmatprep.mubr.f32.mxu0 0.0
        %1458 = vmatmul.mubr.f32.gmra.mrb[0].mxu0 %v1340
        %v1459 = vpop.f32.mrb[0].mxu0
        %v1460 = vadd.f32 0.0, %v1459
        %v1461 = vpop.f32.mrb[0].mxu0
        %1462 = vdwg.mxu0
        %v1463 = vadd.f32 %v1324, %v1425
        %v1464 = vadd.f32 %v1325, %v1430
        %v1465 = vadd.f32 %v1326, %v1435
        %v1466 = vadd.f32 %v1327, %v1440
        %v1467 = vadd.f32 %v1328, %v1445
        %v1468 = vadd.f32 %v1329, %v1450
        %v1469 = vadd.f32 %v1330, %v1455
        %v1470 = vadd.f32 %v1331, %v1460
        %v1471 = vld [vmem:[%s1332 + $0x8] sm:$0xff]
        %v1472 = vld [vmem:[%s1332 + $0x20] sm:$0xff]
        %v1473 = vld [vmem:[%s1332 + $0x38] sm:$0xff]
        %v1474 = vld [vmem:[%s1332 + $0x50] sm:$0xff]
        %v1475 = vld [vmem:[%s1332 + $0x68] sm:$0xff]
        %v1476 = vld [vmem:[%s1332 + $0x80] sm:$0xff]
        %v1477 = vld [vmem:[%s1332 + $0x98] sm:$0xff]
        %v1478 = vld [vmem:[%s1332 + $0xb0] sm:$0xff]
        %s1479 = scalar_lea.vmem [#allocation8], 896
        %v1480 = vld [vmem:[%s1479] sm:$0xff]
        %v1481 = vld [vmem:[%s1479 + $0x8] sm:$0xff]
        %v1482 = vld [vmem:[%s1479 + $0x10] sm:$0xff]
        %v1483 = vld [vmem:[%s1479 + $0x18] sm:$0xff]
        %v1484 = vld [vmem:[%s1479 + $0x20] sm:$0xff]
        %v1485 = vld [vmem:[%s1479 + $0x28] sm:$0xff]
        %v1486 = vld [vmem:[%s1479 + $0x30] sm:$0xff]
        %v1487 = vld [vmem:[%s1479 + $0x38] sm:$0xff]
        %v1488 = vld [vmem:[%s1479 + $0x40] sm:$0xff]
        %v1489 = vld [vmem:[%s1479 + $0x48] sm:$0xff]
        %v1490 = vld [vmem:[%s1479 + $0x50] sm:$0xff]
        %v1491 = vld [vmem:[%s1479 + $0x58] sm:$0xff]
        %v1492 = vld [vmem:[%s1479 + $0x60] sm:$0xff]
        %v1493 = vld [vmem:[%s1479 + $0x68] sm:$0xff]
        %v1494 = vld [vmem:[%s1479 + $0x70] sm:$0xff]
        %v1495 = vld [vmem:[%s1479 + $0x78] sm:$0xff]
        %1496 = vmatprep.subr.mxu0 0.0
        %1497 = vmatpush1.msra.mxu0 %v1480
        %1498 = vmatprep.subr.mxu0 0.0
        %1499 = vmatpush1.msra.mxu0 %v1481
        %1500 = vmatprep.subr.mxu0 0.0
        %1501 = vmatpush1.msra.mxu0 %v1482
        %1502 = vmatprep.subr.mxu0 0.0
        %1503 = vmatpush1.msra.mxu0 %v1483
        %1504 = vmatprep.subr.mxu0 0.0
        %1505 = vmatpush1.msra.mxu0 %v1484
        %1506 = vmatprep.subr.mxu0 0.0
        %1507 = vmatpush1.msra.mxu0 %v1485
        %1508 = vmatprep.subr.mxu0 0.0
        %1509 = vmatpush1.msra.mxu0 %v1486
        %1510 = vmatprep.subr.mxu0 0.0
        %1511 = vmatpush1.msra.mxu0 %v1487
        %1512 = vmatprep.subr.mxu0 0.0
        %1513 = vmatpush1.msra.mxu0 %v1488
        %1514 = vmatprep.subr.mxu0 0.0
        %1515 = vmatpush1.msra.mxu0 %v1489
        %1516 = vmatprep.subr.mxu0 0.0
        %1517 = vmatpush1.msra.mxu0 %v1490
        %1518 = vmatprep.subr.mxu0 0.0
        %1519 = vmatpush1.msra.mxu0 %v1491
        %1520 = vmatprep.subr.mxu0 0.0
        %1521 = vmatpush1.msra.mxu0 %v1492
        %1522 = vmatprep.subr.mxu0 0.0
        %1523 = vmatpush1.msra.mxu0 %v1493
        %1524 = vmatprep.subr.mxu0 0.0
        %1525 = vmatpush1.msra.mxu0 %v1494
        %1526 = vmatprep.subr.mxu0 0.0
        %1527 = vmatpush1.msra.mxu0 %v1495
        %1528 = vmatprep.subr.mxu0 0.0
        %1529 = vmatpush1.msra.mxu0 0.0
        %1530 = vmatprep.subr.mxu0 0.0
        %1531 = vmatpush1.msra.mxu0 0.0
        %1532 = vmatprep.subr.mxu0 0.0
        %1533 = vmatpush1.msra.mxu0 0.0
        %1534 = vmatprep.subr.mxu0 0.0
        %1535 = vmatpush1.msra.mxu0 0.0
        %1536 = vmatprep.subr.mxu0 0.0
        %1537 = vmatpush1.msra.mxu0 0.0
        %1538 = vmatprep.subr.mxu0 0.0
        %1539 = vmatpush1.msra.mxu0 0.0
        %1540 = vmatprep.subr.mxu0 0.0
        %1541 = vmatpush1.msra.mxu0 0.0
        %1542 = vmatprep.subr.mxu0 0.0
        %1543 = vmatpush1.msra.mxu0 0.0
        %1544 = vmatprep.subr.mxu0 0.0
        %1545 = vmatpush1.msra.mxu0 0.0
        %1546 = vmatprep.subr.mxu0 0.0
        %1547 = vmatpush1.msra.mxu0 0.0
        %1548 = vmatprep.subr.mxu0 0.0
        %1549 = vmatpush1.msra.mxu0 0.0
        %1550 = vmatprep.subr.mxu0 0.0
        %1551 = vmatpush1.msra.mxu0 0.0
        %1552 = vmatprep.subr.mxu0 0.0
        %1553 = vmatpush1.msra.mxu0 0.0
        %1554 = vmatprep.subr.mxu0 0.0
        %1555 = vmatpush1.msra.mxu0 0.0
        %1556 = vmatprep.subr.mxu0 0.0
        %1557 = vmatpush1.msra.mxu0 0.0
        %1558 = vmatprep.subr.mxu0 0.0
        %1559 = vmatpush1.msra.mxu0 0.0
        %1560 = vmatprep.mubr.f32.mxu0 0.0
        %1561 = vmatmul.mubr.f32.gmra.mrb[0].mxu0 %v1471
        %v1562 = vpop.f32.mrb[0].mxu0
        %v1563 = vadd.f32 0.0, %v1562
        %v1564 = vpop.f32.mrb[0].mxu0
        %1565 = vmatprep.mubr.f32.mxu0 0.0
        %1566 = vmatmul.mubr.f32.gmra.mrb[0].mxu0 %v1472
        %v1567 = vpop.f32.mrb[0].mxu0
        %v1568 = vadd.f32 0.0, %v1567
        %v1569 = vpop.f32.mrb[0].mxu0
        %1570 = vmatprep.mubr.f32.mxu0 0.0
        %1571 = vmatmul.mubr.f32.gmra.mrb[0].mxu0 %v1473
        %v1572 = vpop.f32.mrb[0].mxu0
        %v1573 = vadd.f32 0.0, %v1572
        %v1574 = vpop.f32.mrb[0].mxu0
        %1575 = vmatprep.mubr.f32.mxu0 0.0
        %1576 = vmatmul.mubr.f32.gmra.mrb[0].mxu0 %v1474
        %v1577 = vpop.f32.mrb[0].mxu0
        %v1578 = vadd.f32 0.0, %v1577
        %v1579 = vpop.f32.mrb[0].mxu0
        %1580 = vmatprep.mubr.f32.mxu0 0.0
        %1581 = vmatmul.mubr.f32.gmra.mrb[0].mxu0 %v1475
        %v1582 = vpop.f32.mrb[0].mxu0
        %v1583 = vadd.f32 0.0, %v1582
        %v1584 = vpop.f32.mrb[0].mxu0
        %1585 = vmatprep.mubr.f32.mxu0 0.0
        %1586 = vmatmul.mubr.f32.gmra.mrb[0].mxu0 %v1476
        %v1587 = vpop.f32.mrb[0].mxu0
        %v1588 = vadd.f32 0.0, %v1587
        %v1589 = vpop.f32.mrb[0].mxu0
        %1590 = vmatprep.mubr.f32.mxu0 0.0
        %1591 = vmatmul.mubr.f32.gmra.mrb[0].mxu0 %v1477
        %v1592 = vpop.f32.mrb[0].mxu0
        %v1593 = vadd.f32 0.0, %v1592
        %v1594 = vpop.f32.mrb[0].mxu0
        %1595 = vmatprep.mubr.f32.mxu0 0.0
        %1596 = vmatmul.mubr.f32.gmra.mrb[0].mxu0 %v1478
        %v1597 = vpop.f32.mrb[0].mxu0
        %v1598 = vadd.f32 0.0, %v1597
        %v1599 = vpop.f32.mrb[0].mxu0
        %1600 = vdwg.mxu0
        %v1601 = vadd.f32 %v1463, %v1563
        %v1602 = vadd.f32 %v1464, %v1568
        %v1603 = vadd.f32 %v1465, %v1573
        %v1604 = vadd.f32 %v1466, %v1578
        %v1605 = vadd.f32 %v1467, %v1583
        %v1606 = vadd.f32 %v1468, %v1588
        %v1607 = vadd.f32 %v1469, %v1593
        %v1608 = vadd.f32 %v1470, %v1598
        %v1609 = vld [vmem:[%s1332 + $0x9] sm:$0xff]
        %v1610 = vld [vmem:[%s1332 + $0x21] sm:$0xff]
        %v1611 = vld [vmem:[%s1332 + $0x39] sm:$0xff]
        %v1612 = vld [vmem:[%s1332 + $0x51] sm:$0xff]
        %v1613 = vld [vmem:[%s1332 + $0x69] sm:$0xff]
        %v1614 = vld [vmem:[%s1332 + $0x81] sm:$0xff]
        %v1615 = vld [vmem:[%s1332 + $0x99] sm:$0xff]
        %v1616 = vld [vmem:[%s1332 + $0xb1] sm:$0xff]
        %s1617 = scalar_lea.vmem [#allocation8], 1024
        %v1618 = vld [vmem:[%s1617] sm:$0xff]
        %v1619 = vld [vmem:[%s1617 + $0x8] sm:$0xff]
        %v1620 = vld [vmem:[%s1617 + $0x10] sm:$0xff]
        %v1621 = vld [vmem:[%s1617 + $0x18] sm:$0xff]
        %v1622 = vld [vmem:[%s1617 + $0x20] sm:$0xff]
        %v1623 = vld [vmem:[%s1617 + $0x28] sm:$0xff]
        %v1624 = vld [vmem:[%s1617 + $0x30] sm:$0xff]
        %v1625 = vld [vmem:[%s1617 + $0x38] sm:$0xff]
        %v1626 = vld [vmem:[%s1617 + $0x40] sm:$0xff]
        %v1627 = vld [vmem:[%s1617 + $0x48] sm:$0xff]
        %v1628 = vld [vmem:[%s1617 + $0x50] sm:$0xff]
        %v1629 = vld [vmem:[%s1617 + $0x58] sm:$0xff]
        %v1630 = vld [vmem:[%s1617 + $0x60] sm:$0xff]
        %v1631 = vld [vmem:[%s1617 + $0x68] sm:$0xff]
        %v1632 = vld [vmem:[%s1617 + $0x70] sm:$0xff]
        %v1633 = vld [vmem:[%s1617 + $0x78] sm:$0xff]
        %1634 = vmatprep.subr.mxu0 0.0
        %1635 = vmatpush1.msra.mxu0 %v1618
        %1636 = vmatprep.subr.mxu0 0.0
        %1637 = vmatpush1.msra.mxu0 %v1619
        %1638 = vmatprep.subr.mxu0 0.0
        %1639 = vmatpush1.msra.mxu0 %v1620
        %1640 = vmatprep.subr.mxu0 0.0
        %1641 = vmatpush1.msra.mxu0 %v1621
        %1642 = vmatprep.subr.mxu0 0.0
        %1643 = vmatpush1.msra.mxu0 %v1622
        %1644 = vmatprep.subr.mxu0 0.0
        %1645 = vmatpush1.msra.mxu0 %v1623
        %1646 = vmatprep.subr.mxu0 0.0
        %1647 = vmatpush1.msra.mxu0 %v1624
        %1648 = vmatprep.subr.mxu0 0.0
        %1649 = vmatpush1.msra.mxu0 %v1625
        %1650 = vmatprep.subr.mxu0 0.0
        %1651 = vmatpush1.msra.mxu0 %v1626
        %1652 = vmatprep.subr.mxu0 0.0
        %1653 = vmatpush1.msra.mxu0 %v1627
        %1654 = vmatprep.subr.mxu0 0.0
        %1655 = vmatpush1.msra.mxu0 %v1628
        %1656 = vmatprep.subr.mxu0 0.0
        %1657 = vmatpush1.msra.mxu0 %v1629
        %1658 = vmatprep.subr.mxu0 0.0
        %1659 = vmatpush1.msra.mxu0 %v1630
        %1660 = vmatprep.subr.mxu0 0.0
        %1661 = vmatpush1.msra.mxu0 %v1631
        %1662 = vmatprep.subr.mxu0 0.0
        %1663 = vmatpush1.msra.mxu0 %v1632
        %1664 = vmatprep.subr.mxu0 0.0
        %1665 = vmatpush1.msra.mxu0 %v1633
        %1666 = vmatprep.subr.mxu0 0.0
        %1667 = vmatpush1.msra.mxu0 0.0
        %1668 = vmatprep.subr.mxu0 0.0
        %1669 = vmatpush1.msra.mxu0 0.0
        %1670 = vmatprep.subr.mxu0 0.0
        %1671 = vmatpush1.msra.mxu0 0.0
        %1672 = vmatprep.subr.mxu0 0.0
        %1673 = vmatpush1.msra.mxu0 0.0
        %1674 = vmatprep.subr.mxu0 0.0
        %1675 = vmatpush1.msra.mxu0 0.0
        %1676 = vmatprep.subr.mxu0 0.0
        %1677 = vmatpush1.msra.mxu0 0.0
        %1678 = vmatprep.subr.mxu0 0.0
        %1679 = vmatpush1.msra.mxu0 0.0
        %1680 = vmatprep.subr.mxu0 0.0
        %1681 = vmatpush1.msra.mxu0 0.0
        %1682 = vmatprep.subr.mxu0 0.0
        %1683 = vmatpush1.msra.mxu0 0.0
        %1684 = vmatprep.subr.mxu0 0.0
        %1685 = vmatpush1.msra.mxu0 0.0
        %1686 = vmatprep.subr.mxu0 0.0
        %1687 = vmatpush1.msra.mxu0 0.0
        %1688 = vmatprep.subr.mxu0 0.0
        %1689 = vmatpush1.msra.mxu0 0.0
        %1690 = vmatprep.subr.mxu0 0.0
        %1691 = vmatpush1.msra.mxu0 0.0
        %1692 = vmatprep.subr.mxu0 0.0
        %1693 = vmatpush1.msra.mxu0 0.0
        %1694 = vmatprep.subr.mxu0 0.0
        %1695 = vmatpush1.msra.mxu0 0.0
        %1696 = vmatprep.subr.mxu0 0.0
        %1697 = vmatpush1.msra.mxu0 0.0
        %1698 = vmatprep.mubr.f32.mxu0 0.0
        %1699 = vmatmul.mubr.f32.gmra.mrb[0].mxu0 %v1609
        %v1700 = vpop.f32.mrb[0].mxu0
        %v1701 = vadd.f32 0.0, %v1700
        %v1702 = vpop.f32.mrb[0].mxu0
        %1703 = vmatprep.mubr.f32.mxu0 0.0
        %1704 = vmatmul.mubr.f32.gmra.mrb[0].mxu0 %v1610
        %v1705 = vpop.f32.mrb[0].mxu0
        %v1706 = vadd.f32 0.0, %v1705
        %v1707 = vpop.f32.mrb[0].mxu0
        %1708 = vmatprep.mubr.f32.mxu0 0.0
        %1709 = vmatmul.mubr.f32.gmra.mrb[0].mxu0 %v1611
        %v1710 = vpop.f32.mrb[0].mxu0
        %v1711 = vadd.f32 0.0, %v1710
        %v1712 = vpop.f32.mrb[0].mxu0
        %1713 = vmatprep.mubr.f32.mxu0 0.0
        %1714 = vmatmul.mubr.f32.gmra.mrb[0].mxu0 %v1612
        %v1715 = vpop.f32.mrb[0].mxu0
        %v1716 = vadd.f32 0.0, %v1715
        %v1717 = vpop.f32.mrb[0].mxu0
        %1718 = vmatprep.mubr.f32.mxu0 0.0
        %1719 = vmatmul.mubr.f32.gmra.mrb[0].mxu0 %v1613
        %v1720 = vpop.f32.mrb[0].mxu0
        %v1721 = vadd.f32 0.0, %v1720
        %v1722 = vpop.f32.mrb[0].mxu0
        %1723 = vmatprep.mubr.f32.mxu0 0.0
        %1724 = vmatmul.mubr.f32.gmra.mrb[0].mxu0 %v1614
        %v1725 = vpop.f32.mrb[0].mxu0
        %v1726 = vadd.f32 0.0, %v1725
        %v1727 = vpop.f32.mrb[0].mxu0
        %1728 = vmatprep.mubr.f32.mxu0 0.0
        %1729 = vmatmul.mubr.f32.gmra.mrb[0].mxu0 %v1615
        %v1730 = vpop.f32.mrb[0].mxu0
        %v1731 = vadd.f32 0.0, %v1730
        %v1732 = vpop.f32.mrb[0].mxu0
        %1733 = vmatprep.mubr.f32.mxu0 0.0
        %1734 = vmatmul.mubr.f32.gmra.mrb[0].mxu0 %v1616
        %v1735 = vpop.f32.mrb[0].mxu0
        %v1736 = vadd.f32 0.0, %v1735
        %v1737 = vpop.f32.mrb[0].mxu0
        %1738 = vdwg.mxu0
        %v1739 = vadd.f32 %v1601, %v1701
        %v1740 = vadd.f32 %v1602, %v1706
        %v1741 = vadd.f32 %v1603, %v1711
        %v1742 = vadd.f32 %v1604, %v1716
        %v1743 = vadd.f32 %v1605, %v1721
        %v1744 = vadd.f32 %v1606, %v1726
        %v1745 = vadd.f32 %v1607, %v1731
        %v1746 = vadd.f32 %v1608, %v1736
        %v1747 = vld [vmem:[%s4] sm:$0x1]
        %v1749 = vlaneseq
        %v1750 = vshrl.u32 %v1749, 7
        %v1751 = vsub.s32 0, %v1750
        %v1752 = vrot.slane %v1747, %v1751
        %v1754 = vadd.f32 %v1739, %v1752
        %v1755 = vadd.f32 %v1740, %v1752
        %v1756 = vadd.f32 %v1741, %v1752
        %v1757 = vadd.f32 %v1742, %v1752
        %v1758 = vadd.f32 %v1743, %v1752
        %v1759 = vadd.f32 %v1744, %v1752
        %v1760 = vadd.f32 %v1745, %v1752
        %v1761 = vadd.f32 %v1746, %v1752
        %v1762 = vmax.f32 %v1754, 0.0
        %v1763 = vmax.f32 %v1755, 0.0
        %v1764 = vmax.f32 %v1756, 0.0
        %v1765 = vmax.f32 %v1757, 0.0
        %v1766 = vmax.f32 %v1758, 0.0
        %v1767 = vmax.f32 %v1759, 0.0
        %v1768 = vmax.f32 %v1760, 0.0
        %v1769 = vmax.f32 %v1761, 0.0
        %v1770 = vld [vmem:[#allocation9] sm:$0xff]
        %v1771 = vld [vmem:[#allocation9 + $0x8] sm:$0xff]
        %v1772 = vld [vmem:[#allocation9 + $0x10] sm:$0xff]
        %v1773 = vld [vmem:[#allocation9 + $0x18] sm:$0xff]
        %v1774 = vld [vmem:[#allocation9 + $0x20] sm:$0xff]
        %v1775 = vld [vmem:[#allocation9 + $0x28] sm:$0xff]
        %v1776 = vld [vmem:[#allocation9 + $0x30] sm:$0xff]
        %v1777 = vld [vmem:[#allocation9 + $0x38] sm:$0xff]
        %v1778 = vld [vmem:[#allocation9 + $0x40] sm:$0xff]
        %v1779 = vld [vmem:[#allocation9 + $0x48] sm:$0xff]
        %v1780 = vld [vmem:[#allocation9 + $0x50] sm:$0xff]
        %v1781 = vld [vmem:[#allocation9 + $0x58] sm:$0xff]
        %v1782 = vld [vmem:[#allocation9 + $0x60] sm:$0xff]
        %v1783 = vld [vmem:[#allocation9 + $0x68] sm:$0xff]
        %v1784 = vld [vmem:[#allocation9 + $0x70] sm:$0xff]
        %v1785 = vld [vmem:[#allocation9 + $0x78] sm:$0xff]
        %v1786 = vld [vmem:[%s6] sm:$0x1]
        %v1788 = vlaneseq
        %v1789 = vshrl.u32 %v1788, 7
        %v1790 = vsub.s32 0, %v1789
        %v1791 = vrot.slane %v1786, %v1790
        %1793 = vmatprep.subr.mxu0 0.0
        %1794 = vmatpush1.msra.mxu0 %v1770
        %1795 = vmatprep.subr.mxu0 0.0
        %1796 = vmatpush1.msra.mxu0 %v1771
        %1797 = vmatprep.subr.mxu0 0.0
        %1798 = vmatpush1.msra.mxu0 %v1772
        %1799 = vmatprep.subr.mxu0 0.0
        %1800 = vmatpush1.msra.mxu0 %v1773
        %1801 = vmatprep.subr.mxu0 0.0
        %1802 = vmatpush1.msra.mxu0 %v1774
        %1803 = vmatprep.subr.mxu0 0.0
        %1804 = vmatpush1.msra.mxu0 %v1775
        %1805 = vmatprep.subr.mxu0 0.0
        %1806 = vmatpush1.msra.mxu0 %v1776
        %1807 = vmatprep.subr.mxu0 0.0
        %1808 = vmatpush1.msra.mxu0 %v1777
        %1809 = vmatprep.subr.mxu0 0.0
        %1810 = vmatpush1.msra.mxu0 %v1778
        %1811 = vmatprep.subr.mxu0 0.0
        %1812 = vmatpush1.msra.mxu0 %v1779
        %1813 = vmatprep.subr.mxu0 0.0
        %1814 = vmatpush1.msra.mxu0 %v1780
        %1815 = vmatprep.subr.mxu0 0.0
        %1816 = vmatpush1.msra.mxu0 %v1781
        %1817 = vmatprep.subr.mxu0 0.0
        %1818 = vmatpush1.msra.mxu0 %v1782
        %1819 = vmatprep.subr.mxu0 0.0
        %1820 = vmatpush1.msra.mxu0 %v1783
        %1821 = vmatprep.subr.mxu0 0.0
        %1822 = vmatpush1.msra.mxu0 %v1784
        %1823 = vmatprep.subr.mxu0 0.0
        %1824 = vmatpush1.msra.mxu0 %v1785
        %1825 = vmatprep.subr.mxu0 0.0
        %1826 = vmatpush1.msra.mxu0 0.0
        %1827 = vmatprep.subr.mxu0 0.0
        %1828 = vmatpush1.msra.mxu0 0.0
        %1829 = vmatprep.subr.mxu0 0.0
        %1830 = vmatpush1.msra.mxu0 0.0
        %1831 = vmatprep.subr.mxu0 0.0
        %1832 = vmatpush1.msra.mxu0 0.0
        %1833 = vmatprep.subr.mxu0 0.0
        %1834 = vmatpush1.msra.mxu0 0.0
        %1835 = vmatprep.subr.mxu0 0.0
        %1836 = vmatpush1.msra.mxu0 0.0
        %1837 = vmatprep.subr.mxu0 0.0
        %1838 = vmatpush1.msra.mxu0 0.0
        %1839 = vmatprep.subr.mxu0 0.0
        %1840 = vmatpush1.msra.mxu0 0.0
        %1841 = vmatprep.subr.mxu0 0.0
        %1842 = vmatpush1.msra.mxu0 0.0
        %1843 = vmatprep.subr.mxu0 0.0
        %1844 = vmatpush1.msra.mxu0 0.0
        %1845 = vmatprep.subr.mxu0 0.0
        %1846 = vmatpush1.msra.mxu0 0.0
        %1847 = vmatprep.subr.mxu0 0.0
        %1848 = vmatpush1.msra.mxu0 0.0
        %1849 = vmatprep.subr.mxu0 0.0
        %1850 = vmatpush1.msra.mxu0 0.0
        %1851 = vmatprep.subr.mxu0 0.0
        %1852 = vmatpush1.msra.mxu0 0.0
        %1853 = vmatprep.subr.mxu0 0.0
        %1854 = vmatpush1.msra.mxu0 0.0
        %1855 = vmatprep.subr.mxu0 0.0
        %1856 = vmatpush1.msra.mxu0 0.0
        %1857 = vmatprep.mubr.f32.mxu0 0.0
        %1858 = vmatmul.mubr.f32.gmra.mrb[0].mxu0 %v1762
        %v1859 = vpop.f32.mrb[0].mxu0
        %v1860 = vadd.f32 %v1791, %v1859
        %v1861 = vpop.f32.mrb[0].mxu0
        %1862 = vmatprep.mubr.f32.mxu0 0.0
        %1863 = vmatmul.mubr.f32.gmra.mrb[0].mxu0 %v1763
        %v1864 = vpop.f32.mrb[0].mxu0
        %v1865 = vadd.f32 %v1791, %v1864
        %v1866 = vpop.f32.mrb[0].mxu0
        %1867 = vmatprep.mubr.f32.mxu0 0.0
        %1868 = vmatmul.mubr.f32.gmra.mrb[0].mxu0 %v1764
        %v1869 = vpop.f32.mrb[0].mxu0
        %v1870 = vadd.f32 %v1791, %v1869
        %v1871 = vpop.f32.mrb[0].mxu0
        %1872 = vmatprep.mubr.f32.mxu0 0.0
        %1873 = vmatmul.mubr.f32.gmra.mrb[0].mxu0 %v1765
        %v1874 = vpop.f32.mrb[0].mxu0
        %v1875 = vadd.f32 %v1791, %v1874
        %v1876 = vpop.f32.mrb[0].mxu0
        %1877 = vmatprep.mubr.f32.mxu0 0.0
        %1878 = vmatmul.mubr.f32.gmra.mrb[0].mxu0 %v1766
        %v1879 = vpop.f32.mrb[0].mxu0
        %v1880 = vadd.f32 %v1791, %v1879
        %v1881 = vpop.f32.mrb[0].mxu0
        %1882 = vmatprep.mubr.f32.mxu0 0.0
        %1883 = vmatmul.mubr.f32.gmra.mrb[0].mxu0 %v1767
        %v1884 = vpop.f32.mrb[0].mxu0
        %v1885 = vadd.f32 %v1791, %v1884
        %v1886 = vpop.f32.mrb[0].mxu0
        %1887 = vmatprep.mubr.f32.mxu0 0.0
        %1888 = vmatmul.mubr.f32.gmra.mrb[0].mxu0 %v1768
        %v1889 = vpop.f32.mrb[0].mxu0
        %v1890 = vadd.f32 %v1791, %v1889
        %v1891 = vpop.f32.mrb[0].mxu0
        %1892 = vmatprep.mubr.f32.mxu0 0.0
        %1893 = vmatmul.mubr.f32.gmra.mrb[0].mxu0 %v1769
        %v1894 = vpop.f32.mrb[0].mxu0
        %v1895 = vadd.f32 %v1791, %v1894
        %v1896 = vpop.f32.mrb[0].mxu0
        %1897 = vdwg.mxu0
        %v1898 = vld [vmem:[%s298] sm:$0xff]
        %v1899 = vld [vmem:[%s298 + $0x8] sm:$0xff]
        %v1900 = vld [vmem:[%s298 + $0x10] sm:$0xff]
        %v1901 = vld [vmem:[%s298 + $0x18] sm:$0xff]
        %v1902 = vld [vmem:[%s298 + $0x20] sm:$0xff]
        %v1903 = vld [vmem:[%s298 + $0x28] sm:$0xff]
        %v1904 = vld [vmem:[%s298 + $0x30] sm:$0xff]
        %v1905 = vld [vmem:[%s298 + $0x38] sm:$0xff]
        %v1906 = vadd.f32 %v1860, %v1898
        %v1907 = vadd.f32 %v1865, %v1899
        %v1908 = vadd.f32 %v1870, %v1900
        %v1909 = vadd.f32 %v1875, %v1901
        %v1910 = vadd.f32 %v1880, %v1902
        %v1911 = vadd.f32 %v1885, %v1903
        %v1912 = vadd.f32 %v1890, %v1904
        %v1913 = vadd.f32 %v1895, %v1905
        %v1914 = vmax.f32 %v1906, 0.0
        %v1915 = vmax.f32 %v1907, 0.0
        %v1916 = vmax.f32 %v1908, 0.0
        %v1917 = vmax.f32 %v1909, 0.0
        %v1918 = vmax.f32 %v1910, 0.0
        %v1919 = vmax.f32 %v1911, 0.0
        %v1920 = vmax.f32 %v1912, 0.0
        %v1921 = vmax.f32 %v1913, 0.0
        %1922 = vst [vmem:[%s340] sm:$0xff] %v1914
        %1923 = vst [vmem:[%s340 + $0x8] sm:$0xff] %v1915
        %1924 = vst [vmem:[%s340 + $0x10] sm:$0xff] %v1916
        %1925 = vst [vmem:[%s340 + $0x18] sm:$0xff] %v1917
        %1926 = vst [vmem:[%s340 + $0x20] sm:$0xff] %v1918
        %1927 = vst [vmem:[%s340 + $0x28] sm:$0xff] %v1919
        %1928 = vst [vmem:[%s340 + $0x30] sm:$0xff] %v1920
        %1929 = vst [vmem:[%s340 + $0x38] sm:$0xff] %v1921
        %s1930 = sand.u32 %s186, 1
        %s1931 = scalar_lea.sflag [#allocation5], %s1930
        %s1932 = sand.u32 %s186, 1
        %s1933 = smul.addr %s1932, 64
        %s1934 = scalar_lea.vmem [#allocation11], %s1933
        // Predicated region
        $region65: #{tpu_custom_call.1} parent=47 // pred_check
          %p1935 = pneg %p196
        $region66: #{tpu_custom_call.1} parent=47 // pred_check_branch
          %1937 = sbr.rel (%p1935) target = $region68
        $region67: #{tpu_custom_call.1} parent=47 // pred_region
          %s1939 = ssub.s32 1024, 1024
          %1940 = vsyncadd %s1931, %s1939
          %s1941 = smul.addr %s26, 8
          %s1942 = smul.addr %s1941, 128
          %s1943 = scalar_lea.hbm %s7, %s1942
          %s1944 = sshll.u32 %s1934, 4
          %s1945 = int_to_ptr.vmem [resolvable:$true] %s1944
          %1950 = dma.vmem_to_hbm [thread:$0]  %s1945, 1024, %s1943, %s1931, 128, 128, 8
        $region68: #{tpu_custom_call.1} parent=47 // pred_fallthru
          _
      $region48: #{tpu_custom_call.1} parent=5 // pred_fallthru
        _
      %p1951 = scmp.le.s32.totalorder 2, %s21
      // Predicated region
      $region69: #{tpu_custom_call.1} parent=5 // pred_check
        %p1952 = pneg %p1951
      $region70: #{tpu_custom_call.1} parent=5 // pred_check_branch
        %1954 = sbr.rel (%p1952) target = $region72
      $region71: #{tpu_custom_call.1} parent=5 // pred_region
        %s1955 = ssub.s32 %s21, 2
        // Predicated region
        $region73: #{tpu_custom_call.1} parent=71 // pred_check
          %p1956 = pneg %p202
        $region74: #{tpu_custom_call.1} parent=71 // pred_check_branch
          %1958 = sbr.rel (%p1956) target = $region76
        $region75: #{tpu_custom_call.1} parent=71 // pred_region
          %s1959 = sand.u32 %s187, 1
          %s1960 = scalar_lea.sflag [#allocation5], %s1959
          %s1961 = sand.u32 %s187, 1
          %s1962 = smul.addr %s1961, 64
          %s1963 = scalar_lea.vmem [#allocation11], %s1962
          %1964 = dma.done %s1960, 1024
        $region76: #{tpu_custom_call.1} parent=71 // pred_fallthru
          _
      $region72: #{tpu_custom_call.1} parent=5 // pred_fallthru
        _
    $region6: #{tpu_custom_call.1} parent=1 // loop_footer
      %s25 = sadd.s32 1, %s21
    $region7: #{tpu_custom_call.1} parent=1 // loop_footer_branch
      %20 = sbr.rel target = $region3
    $region8: #{tpu_custom_call.1} parent=1 // loop_exit
      _
    %1965 = vsyncpa [#allocation4], 1
    %s1966 = scalar_lea.sflag [#allocation4], 1
    %1967 = vsyncpa %s1966, 1
    %1968 = vsyncpa [#allocation7], 1
    %1969 = vsyncpa [#allocation10], 1
    %1970 = vsyncpa [#allocation5], 1
    %s1971 = scalar_lea.sflag [#allocation5], 1
    %1972 = vsyncpa %s1971, 1

// kernel: tpu_custom_call.1
$region0: #{tpu_custom_call.1}
  #allocation0 [shape = 'u32[]', space=smem, size = 0x4, offset = 0x4, fixed_abs, tag = 'smem constant byte address 0x4 - core index']
  #allocation1 [shape = 'u32[144,128]{1,0:T(1,128)}', space=vmem, size = 0x12000, scoped, tag = 'internal scratch']
  #allocation2 [shape = 'f32[1,10,17,128]{3,2,1,0:T(8,128)}', space=vmem, size = 0x1e000, scoped, tag = 'scratch operand']
  %s0 = inlined_call_operand.hbm [shape: f32[2,8,8,128], index: 0, kind: input, shape index: {}]
  %s1 = inlined_call_operand.hbm [shape: f32[128,128], index: 1, kind: input, shape index: {}]
  %s2 = inlined_call_operand.vmem [shape: f32[1,128], index: 2, kind: input, shape index: {}]
  %s3 = inlined_call_operand.hbm [shape: f32[9,128,128], index: 3, kind: input, shape index: {}]
  %s4 = inlined_call_operand.vmem [shape: f32[1,128], index: 4, kind: input, shape index: {}]
  %s5 = inlined_call_operand.hbm [shape: f32[128,128], index: 5, kind: input, shape index: {}]
  %s6 = inlined_call_operand.vmem [shape: f32[1,128], index: 6, kind: input, shape index: {}]
  %s7 = inlined_call_operand.hbm [shape: f32[2,8,8,128], index: 7, kind: output, shape index: {}]
  %s8 = sld [smem:[#allocation0]]
  $region77: #{tpu_custom_call.1} parent=0
    _
  %s10 = ssub.s32 1, %s8
  %s11 = scalar_select 0, %s10, %s8
  $region1: #{tpu_custom_call.1} parent=0
    #allocation3 [shape = 'u8[65536]{0}', space=vmem, size = 0x10000, scoped, tag = 'input window, operand 0']
    #allocation4 [shape = 's32[2]{0}', space=sflag, size = 0x8, scoped, tag = 'scoped memory for tpu_custom_call.1']
    #allocation5 [shape = 's32[2]{0}', space=sflag, size = 0x8, scoped, tag = 'scoped memory for tpu_custom_call.1']
    #allocation6 [shape = 'u8[65536]{0}', space=vmem, size = 0x10000, scoped, tag = 'input window, operand 1, single buffered']
    #allocation7 [shape = 's32[1]{0}', space=sflag, size = 0x4, scoped, tag = 'scoped memory for tpu_custom_call.1']
    #allocation8 [shape = 'u8[589824]{0}', space=vmem, size = 0x90000, scoped, tag = 'input window, operand 3, single buffered']
    #allocation9 [shape = 'u8[65536]{0}', space=vmem, size = 0x10000, scoped, tag = 'input window, operand 5, single buffered']
    #allocation10 [shape = 's32[1]{0}', space=sflag, size = 0x4, scoped, tag = 'scoped memory for tpu_custom_call.1']
    #allocation11 [shape = 'u8[65536]{0}', space=vmem, size = 0x10000, scoped, tag = 'output window, operand 0']
    %12 = vsyncpa [#allocation4], 0
    %s13 = scalar_lea.sflag [#allocation4], 1
    %14 = vsyncpa %s13, 0
    %15 = vsyncpa [#allocation7], 0
    %16 = vsyncpa [#allocation10], 0
    %17 = vsyncpa [#allocation5], 0
    %s18 = scalar_lea.sflag [#allocation5], 1
    %19 = vsyncpa %s18, 0
    loop: start=0, step=1, limit=4
    $region2: #{tpu_custom_call.1} parent=1 // loop_pre_header
      _
    $region3: #{tpu_custom_call.1} parent=1 // loop_header
      %s21 = sphi 0, %s25
      %p22 = scmp.ge.s32.totalorder %s21, 4
      %s31 = sphi 0, %s33
      %s34 = sphi 0, %s31
      %s35 = sphi 0, %s34
      %s51 = sphi 0, %s35
      %s55 = sphi 0, %s55
      %s57 = sphi 0, %s55
      %s58 = sphi 0, %s57
      %s72 = sphi 0, %s58
      %s76 = sphi 0, %s76
      %s78 = sphi 0, %s76
      %s79 = sphi 0, %s78
      %s93 = sphi 0, %s79
      %s97 = sphi 0, %s97
      %s99 = sphi 0, %s97
      %s100 = sphi 0, %s99
      %s114 = sphi 0, %s100
      %s118 = sphi 0, %s118
      %s120 = sphi 0, %s118
      %s121 = sphi 0, %s120
      %s135 = sphi 0, %s121
      %s139 = sphi 0, %s139
      %s141 = sphi 0, %s139
      %s142 = sphi 0, %s141
      %s156 = sphi 0, %s142
      %s160 = sphi 0, %s160
      %s162 = sphi 0, %s160
      %s163 = sphi 0, %s162
      %s177 = sphi 0, %s163
      %s183 = sphi 0, %s185
      %s186 = sphi 0, %s183
      %s187 = sphi 0, %s186
      %s203 = sphi 0, %s187
    $region4: #{tpu_custom_call.1} parent=1 // loop_header_branch
      %24 = sbr.rel (%p22) target = $region8
    $region5: #{tpu_custom_call.1} parent=1 // loop_body
      %s26 = ssub.s32 %s21, 1
      %s27 = ssub.s32 %s21, 2
      %s28 = sadd.s32 %s21, 1
      %s29 = ssub.s32 %s21, %s28
      %p30 = scmp.eq.s32.totalorder %s29, 0
      %s32 = sadd.s32 %s31, 1
      %s33 = scalar_select %p30, %s31, %s32
      %p36 = pneg %p30
      %p37 = scmp.eq.s32.totalorder %s21, 1
      %p38 = por %p36, %p37
      %p39 = scmp.ne.s32.totalorder %s31, %s34
      %p40 = scmp.eq.s32.totalorder %s21, 0
      %p41 = por %p39, %p40
      %p42 = scmp.ne.s32.totalorder %s31, %s34
      %p43 = scmp.eq.s32.totalorder %s26, 1
      %p44 = por %p42, %p43
      %p45 = scmp.ne.s32.totalorder %s34, %s35
      %p46 = scmp.eq.s32.totalorder %s26, 0
      %p47 = por %p45, %p46
      %p48 = scmp.ne.s32.totalorder %s34, %s35
      %p49 = scmp.eq.s32.totalorder %s27, 1
      %p50 = por %p48, %p49
      %p52 = scmp.ne.s32.totalorder %s35, %s51
      %p53 = scmp.eq.s32.totalorder %s27, 0
      %p54 = por %p52, %p53
      %s56 = sadd.s32 %s55, 1
      %p59 = scmp.eq.s32.totalorder %s21, 1
      %p60 = scmp.ne.s32.totalorder %s55, %s57
      %p61 = scmp.eq.s32.totalorder %s21, 0
      %p62 = por %p60, %p61
      %p63 = scmp.ne.s32.totalorder %s55, %s57
      %p64 = scmp.eq.s32.totalorder %s26, 1
      %p65 = por %p63, %p64
      %p66 = scmp.ne.s32.totalorder %s57, %s58
      %p67 = scmp.eq.s32.totalorder %s26, 0
      %p68 = por %p66, %p67
      %p69 = scmp.ne.s32.totalorder %s57, %s58
      %p70 = scmp.eq.s32.totalorder %s27, 1
      %p71 = por %p69, %p70
      %p73 = scmp.ne.s32.totalorder %s58, %s72
      %p74 = scmp.eq.s32.totalorder %s27, 0
      %p75 = por %p73, %p74
      %s77 = sadd.s32 %s76, 1
      %p80 = scmp.eq.s32.totalorder %s21, 1
      %p81 = scmp.ne.s32.totalorder %s76, %s78
      %p82 = scmp.eq.s32.totalorder %s21, 0
      %p83 = por %p81, %p82
      %p84 = scmp.ne.s32.totalorder %s76, %s78
      %p85 = scmp.eq.s32.totalorder %s26, 1
      %p86 = por %p84, %p85
      %p87 = scmp.ne.s32.totalorder %s78, %s79
      %p88 = scmp.eq.s32.totalorder %s26, 0
      %p89 = por %p87, %p88
      %p90 = scmp.ne.s32.totalorder %s78, %s79
      %p91 = scmp.eq.s32.totalorder %s27, 1
      %p92 = por %p90, %p91
      %p94 = scmp.ne.s32.totalorder %s79, %s93
      %p95 = scmp.eq.s32.totalorder %s27, 0
      %p96 = por %p94, %p95
      %s98 = sadd.s32 %s97, 1
      %p101 = scmp.eq.s32.totalorder %s21, 1
      %p102 = scmp.ne.s32.totalorder %s97, %s99
      %p103 = scmp.eq.s32.totalorder %s21, 0
      %p104 = por %p102, %p103
      %p105 = scmp.ne.s32.totalorder %s97, %s99
      %p106 = scmp.eq.s32.totalorder %s26, 1
      %p107 = por %p105, %p106
      %p108 = scmp.ne.s32.totalorder %s99, %s100
      %p109 = scmp.eq.s32.totalorder %s26, 0
      %p110 = por %p108, %p109
      %p111 = scmp.ne.s32.totalorder %s99, %s100
      %p112 = scmp.eq.s32.totalorder %s27, 1
      %p113 = por %p111, %p112
      %p115 = scmp.ne.s32.totalorder %s100, %s114
      %p116 = scmp.eq.s32.totalorder %s27, 0
      %p117 = por %p115, %p116
      %s119 = sadd.s32 %s118, 1
      %p122 = scmp.eq.s32.totalorder %s21, 1
      %p123 = scmp.ne.s32.totalorder %s118, %s120
      %p124 = scmp.eq.s32.totalorder %s21, 0
      %p125 = por %p123, %p124
      %p126 = scmp.ne.s32.totalorder %s118, %s120
      %p127 = scmp.eq.s32.totalorder %s26, 1
      %p128 = por %p126, %p127
      %p129 = scmp.ne.s32.totalorder %s120, %s121
      %p130 = scmp.eq.s32.totalorder %s26, 0
      %p131 = por %p129, %p130
      %p132 = scmp.ne.s32.totalorder %s120, %s121
      %p133 = scmp.eq.s32.totalorder %s27, 1
      %p134 = por %p132, %p133
      %p136 = scmp.ne.s32.totalorder %s121, %s135
      %p137 = scmp.eq.s32.totalorder %s27, 0
      %p138 = por %p136, %p137
      %s140 = sadd.s32 %s139, 1
      %p143 = scmp.eq.s32.totalorder %s21, 1
      %p144 = scmp.ne.s32.totalorder %s139, %s141
      %p145 = scmp.eq.s32.totalorder %s21, 0
      %p146 = por %p144, %p145
      %p147 = scmp.ne.s32.totalorder %s139, %s141
      %p148 = scmp.eq.s32.totalorder %s26, 1
      %p149 = por %p147, %p148
      %p150 = scmp.ne.s32.totalorder %s141, %s142
      %p151 = scmp.eq.s32.totalorder %s26, 0
      %p152 = por %p150, %p151
      %p153 = scmp.ne.s32.totalorder %s141, %s142
      %p154 = scmp.eq.s32.totalorder %s27, 1
      %p155 = por %p153, %p154
      %p157 = scmp.ne.s32.totalorder %s142, %s156
      %p158 = scmp.eq.s32.totalorder %s27, 0
      %p159 = por %p157, %p158
      %s161 = sadd.s32 %s160, 1
      %p164 = scmp.eq.s32.totalorder %s21, 1
      %p165 = scmp.ne.s32.totalorder %s160, %s162
      %p166 = scmp.eq.s32.totalorder %s21, 0
      %p167 = por %p165, %p166
      %p168 = scmp.ne.s32.totalorder %s160, %s162
      %p169 = scmp.eq.s32.totalorder %s26, 1
      %p170 = por %p168, %p169
      %p171 = scmp.ne.s32.totalorder %s162, %s163
      %p172 = scmp.eq.s32.totalorder %s26, 0
      %p173 = por %p171, %p172
      %p174 = scmp.ne.s32.totalorder %s162, %s163
      %p175 = scmp.eq.s32.totalorder %s27, 1
      %p176 = por %p174, %p175
      %p178 = scmp.ne.s32.totalorder %s163, %s177
      %p179 = scmp.eq.s32.totalorder %s27, 0
      %p180 = por %p178, %p179
      %s181 = ssub.s32 %s21, %s28
      %p182 = scmp.eq.s32.totalorder %s181, 0
      %s184 = sadd.s32 %s183, 1
      %s185 = scalar_select %p182, %s183, %s184
      %p188 = pneg %p182
      %p189 = scmp.eq.s32.totalorder %s21, 1
      %p190 = por %p188, %p189
      %p191 = scmp.ne.s32.totalorder %s183, %s186
      %p192 = scmp.eq.s32.totalorder %s21, 0
      %p193 = por %p191, %p192
      %p194 = scmp.ne.s32.totalorder %s183, %s186
      %p195 = scmp.eq.s32.totalorder %s26, 1
      %p196 = por %p194, %p195
      %p197 = scmp.ne.s32.totalorder %s186, %s187
      %p198 = scmp.eq.s32.totalorder %s26, 0
      %p199 = por %p197, %p198
      %p200 = scmp.ne.s32.totalorder %s186, %s187
      %p201 = scmp.eq.s32.totalorder %s27, 1
      %p202 = por %p200, %p201
      %p204 = scmp.ne.s32.totalorder %s187, %s203
      %p205 = scmp.eq.s32.totalorder %s27, 0
      %p206 = por %p204, %p205
      %p207 = scmp.le.s32.totalorder 1, %s21
      %p208 = scmp.lt.s32.totalorder %s21, 3
      %p209 = pnand %p207, %p208
      %p210 = pneg %p209
      // Predicated region
      $region9: #{tpu_custom_call.1} parent=5 // pred_check
        _
      $region10: #{tpu_custom_call.1} parent=5 // pred_check_branch
        %212 = sbr.rel (%p209) target = $region12
      $region11: #{tpu_custom_call.1} parent=5 // pred_region
        %s213 = ssub.s32 %s21, 1
        // Predicated region
        $region13: #{tpu_custom_call.1} parent=11 // pred_check
          %p214 = pneg %p68
        $region14: #{tpu_custom_call.1} parent=11 // pred_check_branch
          %216 = sbr.rel (%p214) target = $region16
        $region15: #{tpu_custom_call.1} parent=11 // pred_region
          %s218 = ssub.s32 2048, 2048
          %219 = vsyncadd [#allocation7], %s218
          %s220 = sshll.u32 [#allocation6], 4
          %s221 = int_to_ptr.vmem [resolvable:$true] %s220
          %226 = dma.hbm_to_vmem [thread:$0]  %s1, 2048, %s221, [#allocation7], 128, 128, 8
        $region16: #{tpu_custom_call.1} parent=11 // pred_fallthru
          _
        // Predicated region
        $region17: #{tpu_custom_call.1} parent=11 // pred_check
          %p227 = pneg %p89
        $region18: #{tpu_custom_call.1} parent=11 // pred_check_branch
          %229 = sbr.rel (%p227) target = $region20
        $region19: #{tpu_custom_call.1} parent=11 // pred_region
          _
        $region20: #{tpu_custom_call.1} parent=11 // pred_fallthru
          _
        // Predicated region
        $region21: #{tpu_custom_call.1} parent=11 // pred_check
          %p230 = pneg %p110
        $region22: #{tpu_custom_call.1} parent=11 // pred_check_branch
          %232 = sbr.rel (%p230) target = $region24
        $region23: #{tpu_custom_call.1} parent=11 // pred_region
          %s234 = ssub.s32 18432, 18432
          %235 = vsyncadd [#allocation7], %s234
          %s236 = sshll.u32 [#allocation8], 4
          %s237 = int_to_ptr.vmem [resolvable:$true] %s236
          %242 = dma.hbm_to_vmem [thread:$0]  %s3, 18432, %s237, [#allocation7], 128, 128, 8
        $region24: #{tpu_custom_call.1} parent=11 // pred_fallthru
          _
        // Predicated region
        $region25: #{tpu_custom_call.1} parent=11 // pred_check
          %p243 = pneg %p131
        $region26: #{tpu_custom_call.1} parent=11 // pred_check_branch
          %245 = sbr.rel (%p243) target = $region28
        $region27: #{tpu_custom_call.1} parent=11 // pred_region
          _
        $region28: #{tpu_custom_call.1} parent=11 // pred_fallthru
          _
        // Predicated region
        $region29: #{tpu_custom_call.1} parent=11 // pred_check
          %p246 = pneg %p152
        $region30: #{tpu_custom_call.1} parent=11 // pred_check_branch
          %248 = sbr.rel (%p246) target = $region32
        $region31: #{tpu_custom_call.1} parent=11 // pred_region
          %s250 = ssub.s32 2048, 2048
          %251 = vsyncadd [#allocation10], %s250
          %s252 = sshll.u32 [#allocation9], 4
          %s253 = int_to_ptr.vmem [resolvable:$true] %s252
          %258 = dma.hbm_to_vmem [thread:$0]  %s5, 2048, %s253, [#allocation10], 128, 128, 8
        $region32: #{tpu_custom_call.1} parent=11 // pred_fallthru
          _
        // Predicated region
        $region33: #{tpu_custom_call.1} parent=11 // pred_check
          %p259 = pneg %p173
        $region34: #{tpu_custom_call.1} parent=11 // pred_check_branch
          %261 = sbr.rel (%p259) target = $region36
        $region35: #{tpu_custom_call.1} parent=11 // pred_region
          _
        $region36: #{tpu_custom_call.1} parent=11 // pred_fallthru
          _
      $region12: #{tpu_custom_call.1} parent=5 // pred_fallthru
        _
      %p262 = scmp.lt.s32.totalorder %s21, 2
      // Predicated region
      $region37: #{tpu_custom_call.1} parent=5 // pred_check
        %p263 = pneg %p262
      $region38: #{tpu_custom_call.1} parent=5 // pred_check_branch
        %265 = sbr.rel (%p263) target = $region40
      $region39: #{tpu_custom_call.1} parent=5 // pred_region
        // Predicated region
        $region41: #{tpu_custom_call.1} parent=39 // pred_check
          %p266 = pneg %p41
        $region42: #{tpu_custom_call.1} parent=39 // pred_check_branch
          %268 = sbr.rel (%p266) target = $region44
        $region43: #{tpu_custom_call.1} parent=39 // pred_region
          %s269 = sand.u32 %s31, 1
          %s270 = scalar_lea.sflag [#allocation4], %s269
          %s271 = sand.u32 %s31, 1
          %s272 = smul.addr %s271, 64
          %s273 = scalar_lea.vmem [#allocation3], %s272
          %s275 = ssub.s32 1024, 1024
          %276 = vsyncadd %s270, %s275
          %s277 = smul.addr %s21, 8
          %s278 = smul.addr %s277, 128
          %s279 = scalar_lea.hbm %s0, %s278
          %s280 = sshll.u32 %s273, 4
          %s281 = int_to_ptr.vmem [resolvable:$true] %s280
          %286 = dma.hbm_to_vmem [thread:$0]  %s279, 1024, %s281, %s270, 128, 128, 8
        $region44: #{tpu_custom_call.1} parent=39 // pred_fallthru
          _
      $region40: #{tpu_custom_call.1} parent=5 // pred_fallthru
        _
      %p287 = scmp.le.s32.totalorder 1, %s21
      %p288 = scmp.lt.s32.totalorder %s21, 3
      %p289 = pnand %p287, %p288
      %p290 = pneg %p289
      // Predicated region
      $region45: #{tpu_custom_call.1} parent=5 // pred_check
        _
      $region46: #{tpu_custom_call.1} parent=5 // pred_check_branch
        %292 = sbr.rel (%p289) target = $region48
      $region47: #{tpu_custom_call.1} parent=5 // pred_region
        %s293 = ssub.s32 %s21, 1
        %s294 = sand.u32 %s34, 1
        %s295 = scalar_lea.sflag [#allocation4], %s294
        %s296 = sand.u32 %s34, 1
        %s297 = smul.addr %s296, 64
        %s298 = scalar_lea.vmem [#allocation3], %s297
        // Predicated region
        $region49: #{tpu_custom_call.1} parent=47 // pred_check
          %p299 = pneg %p47
        $region50: #{tpu_custom_call.1} parent=47 // pred_check_branch
          %301 = sbr.rel (%p299) target = $region52
        $region51: #{tpu_custom_call.1} parent=47 // pred_region
          %302 = dma.done %s295, 1024
        $region52: #{tpu_custom_call.1} parent=47 // pred_fallthru
          _
        // Predicated region
        $region53: #{tpu_custom_call.1} parent=47 // pred_check
          %p303 = pneg %p68
        $region54: #{tpu_custom_call.1} parent=47 // pred_check_branch
          %305 = sbr.rel (%p303) target = $region56
        $region55: #{tpu_custom_call.1} parent=47 // pred_region
          %306 = dma.done [#allocation7], 2048
        $region56: #{tpu_custom_call.1} parent=47 // pred_fallthru
          _
        // Predicated region
        $region57: #{tpu_custom_call.1} parent=47 // pred_check
          %p307 = pneg %p110
        $region58: #{tpu_custom_call.1} parent=47 // pred_check_branch
          %309 = sbr.rel (%p307) target = $region60
        $region59: #{tpu_custom_call.1} parent=47 // pred_region
          %310 = dma.done [#allocation7], 18432
        $region60: #{tpu_custom_call.1} parent=47 // pred_fallthru
          _
        // Predicated region
        $region61: #{tpu_custom_call.1} parent=47 // pred_check
          %p311 = pneg %p152
        $region62: #{tpu_custom_call.1} parent=47 // pred_check_branch
          %313 = sbr.rel (%p311) target = $region64
        $region63: #{tpu_custom_call.1} parent=47 // pred_region
          %314 = dma.done [#allocation10], 2048
        $region64: #{tpu_custom_call.1} parent=47 // pred_fallthru
          _
        %s315 = sand.u32 %s34, 1
        %s316 = scalar_lea.sflag [#allocation4], %s315
        %s317 = sand.u32 %s34, 1
        %s318 = smul.addr %s317, 64
        %s319 = scalar_lea.vmem [#allocation3], %s318
        %p320 = pneg %p47
        %p321 = pneg %p44
        %p322 = pneg %p68
        %p323 = pneg %p65
        %p324 = pneg %p89
        %p325 = pneg %p86
        %p326 = pneg %p110
        %p327 = pneg %p107
        %p328 = pneg %p131
        %p329 = pneg %p128
        %p330 = pneg %p152
        %p331 = pneg %p149
        %p332 = pneg %p173
        %p333 = pneg %p170
        %p334 = pneg %p199
        %p335 = pneg %p196
        %s336 = sand.u32 %s186, 1
        %s337 = scalar_lea.sflag [#allocation5], %s336
        %s338 = sand.u32 %s186, 1
        %s339 = smul.addr %s338, 64
        %s340 = scalar_lea.vmem [#allocation11], %s339
        %v341 = vld [vmem:[%s298] sm:$0xff]
        %v342 = vld [vmem:[%s298 + $0x8] sm:$0xff]
        %v343 = vld [vmem:[%s298 + $0x10] sm:$0xff]
        %v344 = vld [vmem:[%s298 + $0x18] sm:$0xff]
        %v345 = vld [vmem:[%s298 + $0x20] sm:$0xff]
        %v346 = vld [vmem:[%s298 + $0x28] sm:$0xff]
        %v347 = vld [vmem:[%s298 + $0x30] sm:$0xff]
        %v348 = vld [vmem:[%s298 + $0x38] sm:$0xff]
        %v349 = vld [vmem:[#allocation6] sm:$0xff]
        %v350 = vld [vmem:[#allocation6 + $0x8] sm:$0xff]
        %v351 = vld [vmem:[#allocation6 + $0x10] sm:$0xff]
        %v352 = vld [vmem:[#allocation6 + $0x18] sm:$0xff]
        %v353 = vld [vmem:[#allocation6 + $0x20] sm:$0xff]
        %v354 = vld [vmem:[#allocation6 + $0x28] sm:$0xff]
        %v355 = vld [vmem:[#allocation6 + $0x30] sm:$0xff]
        %v356 = vld [vmem:[#allocation6 + $0x38] sm:$0xff]
        %v357 = vld [vmem:[#allocation6 + $0x40] sm:$0xff]
        %v358 = vld [vmem:[#allocation6 + $0x48] sm:$0xff]
        %v359 = vld [vmem:[#allocation6 + $0x50] sm:$0xff]
        %v360 = vld [vmem:[#allocation6 + $0x58] sm:$0xff]
        %v361 = vld [vmem:[#allocation6 + $0x60] sm:$0xff]
        %v362 = vld [vmem:[#allocation6 + $0x68] sm:$0xff]
        %v363 = vld [vmem:[#allocation6 + $0x70] sm:$0xff]
        %v364 = vld [vmem:[#allocation6 + $0x78] sm:$0xff]
        %v365 = vld [vmem:[%s2] sm:$0x1]
        %v367 = vlaneseq
        %v368 = vshrl.u32 %v367, 7
        %v369 = vsub.s32 0, %v368
        %v370 = vrot.slane %v365, %v369
        %372 = vmatprep.subr.mxu0 0.0
        %373 = vmatpush1.msra.mxu0 %v349
        %374 = vmatprep.subr.mxu0 0.0
        %375 = vmatpush1.msra.mxu0 %v350
        %376 = vmatprep.subr.mxu0 0.0
        %377 = vmatpush1.msra.mxu0 %v351
        %378 = vmatprep.subr.mxu0 0.0
        %379 = vmatpush1.msra.mxu0 %v352
        %380 = vmatprep.subr.mxu0 0.0
        %381 = vmatpush1.msra.mxu0 %v353
        %382 = vmatprep.subr.mxu0 0.0
        %383 = vmatpush1.msra.mxu0 %v354
        %384 = vmatprep.subr.mxu0 0.0
        %385 = vmatpush1.msra.mxu0 %v355
        %386 = vmatprep.subr.mxu0 0.0
        %387 = vmatpush1.msra.mxu0 %v356
        %388 = vmatprep.subr.mxu0 0.0
        %389 = vmatpush1.msra.mxu0 %v357
        %390 = vmatprep.subr.mxu0 0.0
        %391 = vmatpush1.msra.mxu0 %v358
        %392 = vmatprep.subr.mxu0 0.0
        %393 = vmatpush1.msra.mxu0 %v359
        %394 = vmatprep.subr.mxu0 0.0
        %395 = vmatpush1.msra.mxu0 %v360
        %396 = vmatprep.subr.mxu0 0.0
        %397 = vmatpush1.msra.mxu0 %v361
        %398 = vmatprep.subr.mxu0 0.0
        %399 = vmatpush1.msra.mxu0 %v362
        %400 = vmatprep.subr.mxu0 0.0
        %401 = vmatpush1.msra.mxu0 %v363
        %402 = vmatprep.subr.mxu0 0.0
        %403 = vmatpush1.msra.mxu0 %v364
        %404 = vmatprep.subr.mxu0 0.0
        %405 = vmatpush1.msra.mxu0 0.0
        %406 = vmatprep.subr.mxu0 0.0
        %407 = vmatpush1.msra.mxu0 0.0
        %408 = vmatprep.subr.mxu0 0.0
        %409 = vmatpush1.msra.mxu0 0.0
        %410 = vmatprep.subr.mxu0 0.0
        %411 = vmatpush1.msra.mxu0 0.0
        %412 = vmatprep.subr.mxu0 0.0
        %413 = vmatpush1.msra.mxu0 0.0
        %414 = vmatprep.subr.mxu0 0.0
        %415 = vmatpush1.msra.mxu0 0.0
        %416 = vmatprep.subr.mxu0 0.0
        %417 = vmatpush1.msra.mxu0 0.0
        %418 = vmatprep.subr.mxu0 0.0
        %419 = vmatpush1.msra.mxu0 0.0
        %420 = vmatprep.subr.mxu0 0.0
        %421 = vmatpush1.msra.mxu0 0.0
        %422 = vmatprep.subr.mxu0 0.0
        %423 = vmatpush1.msra.mxu0 0.0
        %424 = vmatprep.subr.mxu0 0.0
        %425 = vmatpush1.msra.mxu0 0.0
        %426 = vmatprep.subr.mxu0 0.0
        %427 = vmatpush1.msra.mxu0 0.0
        %428 = vmatprep.subr.mxu0 0.0
        %429 = vmatpush1.msra.mxu0 0.0
        %430 = vmatprep.subr.mxu0 0.0
        %431 = vmatpush1.msra.mxu0 0.0
        %432 = vmatprep.subr.mxu0 0.0
        %433 = vmatpush1.msra.mxu0 0.0
        %434 = vmatprep.subr.mxu0 0.0
        %435 = vmatpush1.msra.mxu0 0.0
        %436 = vmatprep.mubr.f32.mxu0 0.0
        %437 = vmatmul.mubr.f32.gmra.mrb[0].mxu0 %v341
        %v438 = vpop.f32.mrb[0].mxu0
        %v439 = vadd.f32 %v370, %v438
        %v440 = vpop.f32.mrb[0].mxu0
        %441 = vmatprep.mubr.f32.mxu0 0.0
        %442 = vmatmul.mubr.f32.gmra.mrb[0].mxu0 %v342
        %v443 = vpop.f32.mrb[0].mxu0
        %v444 = vadd.f32 %v370, %v443
        %v445 = vpop.f32.mrb[0].mxu0
        %446 = vmatprep.mubr.f32.mxu0 0.0
        %447 = vmatmul.mubr.f32.gmra.mrb[0].mxu0 %v343
        %v448 = vpop.f32.mrb[0].mxu0
        %v449 = vadd.f32 %v370, %v448
        %v450 = vpop.f32.mrb[0].mxu0
        %451 = vmatprep.mubr.f32.mxu0 0.0
        %452 = vmatmul.mubr.f32.gmra.mrb[0].mxu0 %v344
        %v453 = vpop.f32.mrb[0].mxu0
        %v454 = vadd.f32 %v370, %v453
        %v455 = vpop.f32.mrb[0].mxu0
        %456 = vmatprep.mubr.f32.mxu0 0.0
        %457 = vmatmul.mubr.f32.gmra.mrb[0].mxu0 %v345
        %v458 = vpop.f32.mrb[0].mxu0
        %v459 = vadd.f32 %v370, %v458
        %v460 = vpop.f32.mrb[0].mxu0
        %461 = vmatprep.mubr.f32.mxu0 0.0
        %462 = vmatmul.mubr.f32.gmra.mrb[0].mxu0 %v346
        %v463 = vpop.f32.mrb[0].mxu0
        %v464 = vadd.f32 %v370, %v463
        %v465 = vpop.f32.mrb[0].mxu0
        %466 = vmatprep.mubr.f32.mxu0 0.0
        %467 = vmatmul.mubr.f32.gmra.mrb[0].mxu0 %v347
        %v468 = vpop.f32.mrb[0].mxu0
        %v469 = vadd.f32 %v370, %v468
        %v470 = vpop.f32.mrb[0].mxu0
        %471 = vmatprep.mubr.f32.mxu0 0.0
        %472 = vmatmul.mubr.f32.gmra.mrb[0].mxu0 %v348
        %v473 = vpop.f32.mrb[0].mxu0
        %v474 = vadd.f32 %v370, %v473
        %v475 = vpop.f32.mrb[0].mxu0
        %476 = vdwg.mxu0
        %v477 = vmax.f32 %v439, 0.0
        %v478 = vmax.f32 %v444, 0.0
        %v479 = vmax.f32 %v449, 0.0
        %v480 = vmax.f32 %v454, 0.0
        %v481 = vmax.f32 %v459, 0.0
        %v482 = vmax.f32 %v464, 0.0
        %v483 = vmax.f32 %v469, 0.0
        %v484 = vmax.f32 %v474, 0.0
        %485 = vst [vmem:[#allocation2] sm:$0xff] 0.0
        %486 = vst [vmem:[#allocation2 + $0x8] sm:$0xff] 0.0
        %487 = vst [vmem:[#allocation2 + $0x10] sm:$0x1] 0.0
        %s488 = scalar_lea.vmem [#allocation2], 216
        %489 = vst [vmem:[%s488] sm:$0xff] 0.0
        %490 = vst [vmem:[%s488 + $0x8] sm:$0xff] 0.0
        %491 = vst [vmem:[%s488 + $0x10] sm:$0x1] 0.0
        %492 = vst [vmem:[#allocation2] sm:$0xff] 0.0
        %493 = vst [vmem:[#allocation2 + $0x18] sm:$0xff] 0.0
        %494 = vst [vmem:[#allocation2 + $0x30] sm:$0xff] 0.0
        %495 = vst [vmem:[#allocation2 + $0x48] sm:$0xff] 0.0
        %496 = vst [vmem:[#allocation2 + $0x60] sm:$0xff] 0.0
        %497 = vst [vmem:[#allocation2 + $0x78] sm:$0xff] 0.0
        %498 = vst [vmem:[#allocation2 + $0x90] sm:$0xff] 0.0
        %499 = vst [vmem:[#allocation2 + $0xa8] sm:$0xff] 0.0
        %500 = vst [vmem:[#allocation2 + $0xc0] sm:$0xff] 0.0
        %501 = vst [vmem:[#allocation2 + $0xd8] sm:$0xff] 0.0
        %502 = vst [vmem:[#allocation2 + $0x10] sm:$0x1] 0.0
        %503 = vst [vmem:[#allocation2 + $0x28] sm:$0x1] 0.0
        %504 = vst [vmem:[#allocation2 + $0x40] sm:$0x1] 0.0
        %505 = vst [vmem:[#allocation2 + $0x58] sm:$0x1] 0.0
        %506 = vst [vmem:[#allocation2 + $0x70] sm:$0x1] 0.0
        %507 = vst [vmem:[#allocation2 + $0x88] sm:$0x1] 0.0
        %508 = vst [vmem:[#allocation2 + $0xa0] sm:$0x1] 0.0
        %509 = vst [vmem:[#allocation2 + $0xb8] sm:$0x1] 0.0
        %510 = vst [vmem:[#allocation2 + $0xd0] sm:$0x1] 0.0
        %511 = vst [vmem:[#allocation2 + $0xe8] sm:$0x1] 0.0
        %s512 = scalar_lea.vmem [#allocation2], 24
        %513 = vst [vmem:[%s512 + $0x8] sm:$0xff] %v477
        %514 = vst [vmem:[%s512 + $0x20] sm:$0xff] %v478
        %515 = vst [vmem:[%s512 + $0x38] sm:$0xff] %v479
        %516 = vst [vmem:[%s512 + $0x50] sm:$0xff] %v480
        %517 = vst [vmem:[%s512 + $0x68] sm:$0xff] %v481
        %518 = vst [vmem:[%s512 + $0x80] sm:$0xff] %v482
        %519 = vst [vmem:[%s512 + $0x98] sm:$0xff] %v483
        %520 = vst [vmem:[%s512 + $0xb0] sm:$0xff] %v484
        %v521 = vld [vmem:[#allocation2 + $0x7] sm:$0xff]
        %v522 = vld [vmem:[#allocation2 + $0x1f] sm:$0xff]
        %v523 = vld [vmem:[#allocation2 + $0x37] sm:$0xff]
        %v524 = vld [vmem:[#allocation2 + $0x4f] sm:$0xff]
        %v525 = vld [vmem:[#allocation2 + $0x67] sm:$0xff]
        %v526 = vld [vmem:[#allocation2 + $0x7f] sm:$0xff]
        %v527 = vld [vmem:[#allocation2 + $0x97] sm:$0xff]
        %v528 = vld [vmem:[#allocation2 + $0xaf] sm:$0xff]
        %v529 = vld [vmem:[#allocation8] sm:$0xff]
        %v530 = vld [vmem:[#allocation8 + $0x8] sm:$0xff]
        %v531 = vld [vmem:[#allocation8 + $0x10] sm:$0xff]
        %v532 = vld [vmem:[#allocation8 + $0x18] sm:$0xff]
        %v533 = vld [vmem:[#allocation8 + $0x20] sm:$0xff]
        %v534 = vld [vmem:[#allocation8 + $0x28] sm:$0xff]
        %v535 = vld [vmem:[#allocation8 + $0x30] sm:$0xff]
        %v536 = vld [vmem:[#allocation8 + $0x38] sm:$0xff]
        %v537 = vld [vmem:[#allocation8 + $0x40] sm:$0xff]
        %v538 = vld [vmem:[#allocation8 + $0x48] sm:$0xff]
        %v539 = vld [vmem:[#allocation8 + $0x50] sm:$0xff]
        %v540 = vld [vmem:[#allocation8 + $0x58] sm:$0xff]
        %v541 = vld [vmem:[#allocation8 + $0x60] sm:$0xff]
        %v542 = vld [vmem:[#allocation8 + $0x68] sm:$0xff]
        %v543 = vld [vmem:[#allocation8 + $0x70] sm:$0xff]
        %v544 = vld [vmem:[#allocation8 + $0x78] sm:$0xff]
        %v545 = vld [vmem:[#allocation2 + $0x8] sm:$0xff]
        %v546 = vld [vmem:[#allocation2 + $0x20] sm:$0xff]
        %v547 = vld [vmem:[#allocation2 + $0x38] sm:$0xff]
        %v548 = vld [vmem:[#allocation2 + $0x50] sm:$0xff]
        %v549 = vld [vmem:[#allocation2 + $0x68] sm:$0xff]
        %v550 = vld [vmem:[#allocation2 + $0x80] sm:$0xff]
        %v551 = vld [vmem:[#allocation2 + $0x98] sm:$0xff]
        %v552 = vld [vmem:[#allocation2 + $0xb0] sm:$0xff]
        %s553 = scalar_lea.vmem [#allocation8], 128
        %v554 = vld [vmem:[%s553] sm:$0xff]
        %v555 = vld [vmem:[%s553 + $0x8] sm:$0xff]
        %v556 = vld [vmem:[%s553 + $0x10] sm:$0xff]
        %v557 = vld [vmem:[%s553 + $0x18] sm:$0xff]
        %v558 = vld [vmem:[%s553 + $0x20] sm:$0xff]
        %v559 = vld [vmem:[%s553 + $0x28] sm:$0xff]
        %v560 = vld [vmem:[%s553 + $0x30] sm:$0xff]
        %v561 = vld [vmem:[%s553 + $0x38] sm:$0xff]
        %v562 = vld [vmem:[%s553 + $0x40] sm:$0xff]
        %v563 = vld [vmem:[%s553 + $0x48] sm:$0xff]
        %v564 = vld [vmem:[%s553 + $0x50] sm:$0xff]
        %v565 = vld [vmem:[%s553 + $0x58] sm:$0xff]
        %v566 = vld [vmem:[%s553 + $0x60] sm:$0xff]
        %v567 = vld [vmem:[%s553 + $0x68] sm:$0xff]
        %v568 = vld [vmem:[%s553 + $0x70] sm:$0xff]
        %v569 = vld [vmem:[%s553 + $0x78] sm:$0xff]
        %570 = vmatprep.subr.mxu0 0.0
        %571 = vmatpush1.msra.mxu0 %v554
        %572 = vmatprep.subr.mxu0 0.0
        %573 = vmatpush1.msra.mxu0 %v555
        %574 = vmatprep.subr.mxu0 0.0
        %575 = vmatpush1.msra.mxu0 %v556
        %576 = vmatprep.subr.mxu0 0.0
        %577 = vmatpush1.msra.mxu0 %v557
        %578 = vmatprep.subr.mxu0 0.0
        %579 = vmatpush1.msra.mxu0 %v558
        %580 = vmatprep.subr.mxu0 0.0
        %581 = vmatpush1.msra.mxu0 %v559
        %582 = vmatprep.subr.mxu0 0.0
        %583 = vmatpush1.msra.mxu0 %v560
        %584 = vmatprep.subr.mxu0 0.0
        %585 = vmatpush1.msra.mxu0 %v561
        %586 = vmatprep.subr.mxu0 0.0
        %587 = vmatpush1.msra.mxu0 %v562
        %588 = vmatprep.subr.mxu0 0.0
        %589 = vmatpush1.msra.mxu0 %v563
        %590 = vmatprep.subr.mxu0 0.0
        %591 = vmatpush1.msra.mxu0 %v564
        %592 = vmatprep.subr.mxu0 0.0
        %593 = vmatpush1.msra.mxu0 %v565
        %594 = vmatprep.subr.mxu0 0.0
        %595 = vmatpush1.msra.mxu0 %v566
        %596 = vmatprep.subr.mxu0 0.0
        %597 = vmatpush1.msra.mxu0 %v567
        %598 = vmatprep.subr.mxu0 0.0
        %599 = vmatpush1.msra.mxu0 %v568
        %600 = vmatprep.subr.mxu0 0.0
        %601 = vmatpush1.msra.mxu0 %v569
        %602 = vmatprep.subr.mxu0 0.0
        %603 = vmatpush1.msra.mxu0 0.0
        %604 = vmatprep.subr.mxu0 0.0
        %605 = vmatpush1.msra.mxu0 0.0
        %606 = vmatprep.subr.mxu0 0.0
        %607 = vmatpush1.msra.mxu0 0.0
        %608 = vmatprep.subr.mxu0 0.0
        %609 = vmatpush1.msra.mxu0 0.0
        %610 = vmatprep.subr.mxu0 0.0
        %611 = vmatpush1.msra.mxu0 0.0
        %612 = vmatprep.subr.mxu0 0.0
        %613 = vmatpush1.msra.mxu0 0.0
        %614 = vmatprep.subr.mxu0 0.0
        %615 = vmatpush1.msra.mxu0 0.0
        %616 = vmatprep.subr.mxu0 0.0
        %617 = vmatpush1.msra.mxu0 0.0
        %618 = vmatprep.subr.mxu0 0.0
        %619 = vmatpush1.msra.mxu0 0.0
        %620 = vmatprep.subr.mxu0 0.0
        %621 = vmatpush1.msra.mxu0 0.0
        %622 = vmatprep.subr.mxu0 0.0
        %623 = vmatpush1.msra.mxu0 0.0
        %624 = vmatprep.subr.mxu0 0.0
        %625 = vmatpush1.msra.mxu0 0.0
        %626 = vmatprep.subr.mxu0 0.0
        %627 = vmatpush1.msra.mxu0 0.0
        %628 = vmatprep.subr.mxu0 0.0
        %629 = vmatpush1.msra.mxu0 0.0
        %630 = vmatprep.subr.mxu0 0.0
        %631 = vmatpush1.msra.mxu0 0.0
        %632 = vmatprep.subr.mxu0 0.0
        %633 = vmatpush1.msra.mxu0 0.0
        %634 = vmatprep.mubr.f32.mxu0 0.0
        %635 = vmatmul.mubr.f32.gmra.mrb[0].mxu0 %v545
        %v636 = vpop.f32.mrb[0].mxu0
        %v637 = vadd.f32 0.0, %v636
        %v638 = vpop.f32.mrb[0].mxu0
        %639 = vmatprep.mubr.f32.mxu0 0.0
        %640 = vmatmul.mubr.f32.gmra.mrb[0].mxu0 %v546
        %v641 = vpop.f32.mrb[0].mxu0
        %v642 = vadd.f32 0.0, %v641
        %v643 = vpop.f32.mrb[0].mxu0
        %644 = vmatprep.mubr.f32.mxu0 0.0
        %645 = vmatmul.mubr.f32.gmra.mrb[0].mxu0 %v547
        %v646 = vpop.f32.mrb[0].mxu0
        %v647 = vadd.f32 0.0, %v646
        %v648 = vpop.f32.mrb[0].mxu0
        %649 = vmatprep.mubr.f32.mxu0 0.0
        %650 = vmatmul.mubr.f32.gmra.mrb[0].mxu0 %v548
        %v651 = vpop.f32.mrb[0].mxu0
        %v652 = vadd.f32 0.0, %v651
        %v653 = vpop.f32.mrb[0].mxu0
        %654 = vmatprep.mubr.f32.mxu0 0.0
        %655 = vmatmul.mubr.f32.gmra.mrb[0].mxu0 %v549
        %v656 = vpop.f32.mrb[0].mxu0
        %v657 = vadd.f32 0.0, %v656
        %v658 = vpop.f32.mrb[0].mxu0
        %659 = vmatprep.mubr.f32.mxu0 0.0
        %660 = vmatmul.mubr.f32.gmra.mrb[0].mxu0 %v550
        %v661 = vpop.f32.mrb[0].mxu0
        %v662 = vadd.f32 0.0, %v661
        %v663 = vpop.f32.mrb[0].mxu0
        %664 = vmatprep.mubr.f32.mxu0 0.0
        %665 = vmatmul.mubr.f32.gmra.mrb[0].mxu0 %v551
        %v666 = vpop.f32.mrb[0].mxu0
        %v667 = vadd.f32 0.0, %v666
        %v668 = vpop.f32.mrb[0].mxu0
        %669 = vmatprep.mubr.f32.mxu0 0.0
        %670 = vmatmul.mubr.f32.gmra.mrb[0].mxu0 %v552
        %v671 = vpop.f32.mrb[0].mxu0
        %v672 = vadd.f32 0.0, %v671
        %v673 = vpop.f32.mrb[0].mxu0
        %674 = vdwg.mxu0
        %675 = vmatprep.subr.mxu0 0.0
        %676 = vmatpush1.msra.mxu0 %v529
        %677 = vmatprep.subr.mxu0 0.0
        %678 = vmatpush1.msra.mxu0 %v530
        %679 = vmatprep.subr.mxu0 0.0
        %680 = vmatpush1.msra.mxu0 %v531
        %681 = vmatprep.subr.mxu0 0.0
        %682 = vmatpush1.msra.mxu0 %v532
        %683 = vmatprep.subr.mxu0 0.0
        %684 = vmatpush1.msra.mxu0 %v533
        %685 = vmatprep.subr.mxu0 0.0
        %686 = vmatpush1.msra.mxu0 %v534
        %687 = vmatprep.subr.mxu0 0.0
        %688 = vmatpush1.msra.mxu0 %v535
        %689 = vmatprep.subr.mxu0 0.0
        %690 = vmatpush1.msra.mxu0 %v536
        %691 = vmatprep.subr.mxu0 0.0
        %692 = vmatpush1.msra.mxu0 %v537
        %693 = vmatprep.subr.mxu0 0.0
        %694 = vmatpush1.msra.mxu0 %v538
        %695 = vmatprep.subr.mxu0 0.0
        %696 = vmatpush1.msra.mxu0 %v539
        %697 = vmatprep.subr.mxu0 0.0
        %698 = vmatpush1.msra.mxu0 %v540
        %699 = vmatprep.subr.mxu0 0.0
        %700 = vmatpush1.msra.mxu0 %v541
        %701 = vmatprep.subr.mxu0 0.0
        %702 = vmatpush1.msra.mxu0 %v542
        %703 = vmatprep.subr.mxu0 0.0
        %704 = vmatpush1.msra.mxu0 %v543
        %705 = vmatprep.subr.mxu0 0.0
        %706 = vmatpush1.msra.mxu0 %v544
        %707 = vmatprep.subr.mxu0 0.0
        %708 = vmatpush1.msra.mxu0 0.0
        %709 = vmatprep.subr.mxu0 0.0
        %710 = vmatpush1.msra.mxu0 0.0
        %711 = vmatprep.subr.mxu0 0.0
        %712 = vmatpush1.msra.mxu0 0.0
        %713 = vmatprep.subr.mxu0 0.0
        %714 = vmatpush1.msra.mxu0 0.0
        %715 = vmatprep.subr.mxu0 0.0
        %716 = vmatpush1.msra.mxu0 0.0
        %717 = vmatprep.subr.mxu0 0.0
        %718 = vmatpush1.msra.mxu0 0.0
        %719 = vmatprep.subr.mxu0 0.0
        %720 = vmatpush1.msra.mxu0 0.0
        %721 = vmatprep.subr.mxu0 0.0
        %722 = vmatpush1.msra.mxu0 0.0
        %723 = vmatprep.subr.mxu0 0.0
        %724 = vmatpush1.msra.mxu0 0.0
        %725 = vmatprep.subr.mxu0 0.0
        %726 = vmatpush1.msra.mxu0 0.0
        %727 = vmatprep.subr.mxu0 0.0
        %728 = vmatpush1.msra.mxu0 0.0
        %729 = vmatprep.subr.mxu0 0.0
        %730 = vmatpush1.msra.mxu0 0.0
        %731 = vmatprep.subr.mxu0 0.0
        %732 = vmatpush1.msra.mxu0 0.0
        %733 = vmatprep.subr.mxu0 0.0
        %734 = vmatpush1.msra.mxu0 0.0
        %735 = vmatprep.subr.mxu0 0.0
        %736 = vmatpush1.msra.mxu0 0.0
        %737 = vmatprep.subr.mxu0 0.0
        %738 = vmatpush1.msra.mxu0 0.0
        %739 = vmatprep.mubr.f32.mxu0 0.0
        %740 = vmatmul.mubr.f32.gmra.mrb[0].mxu0 %v521
        %v741 = vpop.f32.mrb[0].mxu0
        %v742 = vadd.f32 %v637, %v741
        %v743 = vpop.f32.mrb[0].mxu0
        %744 = vmatprep.mubr.f32.mxu0 0.0
        %745 = vmatmul.mubr.f32.gmra.mrb[0].mxu0 %v522
        %v746 = vpop.f32.mrb[0].mxu0
        %v747 = vadd.f32 %v642, %v746
        %v748 = vpop.f32.mrb[0].mxu0
        %749 = vmatprep.mubr.f32.mxu0 0.0
        %750 = vmatmul.mubr.f32.gmra.mrb[0].mxu0 %v523
        %v751 = vpop.f32.mrb[0].mxu0
        %v752 = vadd.f32 %v647, %v751
        %v753 = vpop.f32.mrb[0].mxu0
        %754 = vmatprep.mubr.f32.mxu0 0.0
        %755 = vmatmul.mubr.f32.gmra.mrb[0].mxu0 %v524
        %v756 = vpop.f32.mrb[0].mxu0
        %v757 = vadd.f32 %v652, %v756
        %v758 = vpop.f32.mrb[0].mxu0
        %759 = vmatprep.mubr.f32.mxu0 0.0
        %760 = vmatmul.mubr.f32.gmra.mrb[0].mxu0 %v525
        %v761 = vpop.f32.mrb[0].mxu0
        %v762 = vadd.f32 %v657, %v761
        %v763 = vpop.f32.mrb[0].mxu0
        %764 = vmatprep.mubr.f32.mxu0 0.0
        %765 = vmatmul.mubr.f32.gmra.mrb[0].mxu0 %v526
        %v766 = vpop.f32.mrb[0].mxu0
        %v767 = vadd.f32 %v662, %v766
        %v768 = vpop.f32.mrb[0].mxu0
        %769 = vmatprep.mubr.f32.mxu0 0.0
        %770 = vmatmul.mubr.f32.gmra.mrb[0].mxu0 %v527
        %v771 = vpop.f32.mrb[0].mxu0
        %v772 = vadd.f32 %v667, %v771
        %v773 = vpop.f32.mrb[0].mxu0
        %774 = vmatprep.mubr.f32.mxu0 0.0
        %775 = vmatmul.mubr.f32.gmra.mrb[0].mxu0 %v528
        %v776 = vpop.f32.mrb[0].mxu0
        %v777 = vadd.f32 %v672, %v776
        %v778 = vpop.f32.mrb[0].mxu0
        %779 = vdwg.mxu0
        %v780 = vld [vmem:[#allocation2 + $0x9] sm:$0xff]
        %v781 = vld [vmem:[#allocation2 + $0x21] sm:$0xff]
        %v782 = vld [vmem:[#allocation2 + $0x39] sm:$0xff]
        %v783 = vld [vmem:[#allocation2 + $0x51] sm:$0xff]
        %v784 = vld [vmem:[#allocation2 + $0x69] sm:$0xff]
        %v785 = vld [vmem:[#allocation2 + $0x81] sm:$0xff]
        %v786 = vld [vmem:[#allocation2 + $0x99] sm:$0xff]
        %v787 = vld [vmem:[#allocation2 + $0xb1] sm:$0xff]
        %s788 = scalar_lea.vmem [#allocation8], 256
        %v789 = vld [vmem:[%s788] sm:$0xff]
        %v790 = vld [vmem:[%s788 + $0x8] sm:$0xff]
        %v791 = vld [vmem:[%s788 + $0x10] sm:$0xff]
        %v792 = vld [vmem:[%s788 + $0x18] sm:$0xff]
        %v793 = vld [vmem:[%s788 + $0x20] sm:$0xff]
        %v794 = vld [vmem:[%s788 + $0x28] sm:$0xff]
        %v795 = vld [vmem:[%s788 + $0x30] sm:$0xff]
        %v796 = vld [vmem:[%s788 + $0x38] sm:$0xff]
        %v797 = vld [vmem:[%s788 + $0x40] sm:$0xff]
        %v798 = vld [vmem:[%s788 + $0x48] sm:$0xff]
        %v799 = vld [vmem:[%s788 + $0x50] sm:$0xff]
        %v800 = vld [vmem:[%s788 + $0x58] sm:$0xff]
        %v801 = vld [vmem:[%s788 + $0x60] sm:$0xff]
        %v802 = vld [vmem:[%s788 + $0x68] sm:$0xff]
        %v803 = vld [vmem:[%s788 + $0x70] sm:$0xff]
        %v804 = vld [vmem:[%s788 + $0x78] sm:$0xff]
        %805 = vmatprep.subr.mxu0 0.0
        %806 = vmatpush1.msra.mxu0 %v789
        %807 = vmatprep.subr.mxu0 0.0
        %808 = vmatpush1.msra.mxu0 %v790
        %809 = vmatprep.subr.mxu0 0.0
        %810 = vmatpush1.msra.mxu0 %v791
        %811 = vmatprep.subr.mxu0 0.0
        %812 = vmatpush1.msra.mxu0 %v792
        %813 = vmatprep.subr.mxu0 0.0
        %814 = vmatpush1.msra.mxu0 %v793
        %815 = vmatprep.subr.mxu0 0.0
        %816 = vmatpush1.msra.mxu0 %v794
        %817 = vmatprep.subr.mxu0 0.0
        %818 = vmatpush1.msra.mxu0 %v795
        %819 = vmatprep.subr.mxu0 0.0
        %820 = vmatpush1.msra.mxu0 %v796
        %821 = vmatprep.subr.mxu0 0.0
        %822 = vmatpush1.msra.mxu0 %v797
        %823 = vmatprep.subr.mxu0 0.0
        %824 = vmatpush1.msra.mxu0 %v798
        %825 = vmatprep.subr.mxu0 0.0
        %826 = vmatpush1.msra.mxu0 %v799
        %827 = vmatprep.subr.mxu0 0.0
        %828 = vmatpush1.msra.mxu0 %v800
        %829 = vmatprep.subr.mxu0 0.0
        %830 = vmatpush1.msra.mxu0 %v801
        %831 = vmatprep.subr.mxu0 0.0
        %832 = vmatpush1.msra.mxu0 %v802
        %833 = vmatprep.subr.mxu0 0.0
        %834 = vmatpush1.msra.mxu0 %v803
        %835 = vmatprep.subr.mxu0 0.0
        %836 = vmatpush1.msra.mxu0 %v804
        %837 = vmatprep.subr.mxu0 0.0
        %838 = vmatpush1.msra.mxu0 0.0
        %839 = vmatprep.subr.mxu0 0.0
        %840 = vmatpush1.msra.mxu0 0.0
        %841 = vmatprep.subr.mxu0 0.0
        %842 = vmatpush1.msra.mxu0 0.0
        %843 = vmatprep.subr.mxu0 0.0
        %844 = vmatpush1.msra.mxu0 0.0
        %845 = vmatprep.subr.mxu0 0.0
        %846 = vmatpush1.msra.mxu0 0.0
        %847 = vmatprep.subr.mxu0 0.0
        %848 = vmatpush1.msra.mxu0 0.0
        %849 = vmatprep.subr.mxu0 0.0
        %850 = vmatpush1.msra.mxu0 0.0
        %851 = vmatprep.subr.mxu0 0.0
        %852 = vmatpush1.msra.mxu0 0.0
        %853 = vmatprep.subr.mxu0 0.0
        %854 = vmatpush1.msra.mxu0 0.0
        %855 = vmatprep.subr.mxu0 0.0
        %856 = vmatpush1.msra.mxu0 0.0
        %857 = vmatprep.subr.mxu0 0.0
        %858 = vmatpush1.msra.mxu0 0.0
        %859 = vmatprep.subr.mxu0 0.0
        %860 = vmatpush1.msra.mxu0 0.0
        %861 = vmatprep.subr.mxu0 0.0
        %862 = vmatpush1.msra.mxu0 0.0
        %863 = vmatprep.subr.mxu0 0.0
        %864 = vmatpush1.msra.mxu0 0.0
        %865 = vmatprep.subr.mxu0 0.0
        %866 = vmatpush1.msra.mxu0 0.0
        %867 = vmatprep.subr.mxu0 0.0
        %868 = vmatpush1.msra.mxu0 0.0
        %869 = vmatprep.mubr.f32.mxu0 0.0
        %870 = vmatmul.mubr.f32.gmra.mrb[0].mxu0 %v780
        %v871 = vpop.f32.mrb[0].mxu0
        %v872 = vadd.f32 0.0, %v871
        %v873 = vpop.f32.mrb[0].mxu0
        %874 = vmatprep.mubr.f32.mxu0 0.0
        %875 = vmatmul.mubr.f32.gmra.mrb[0].mxu0 %v781
        %v876 = vpop.f32.mrb[0].mxu0
        %v877 = vadd.f32 0.0, %v876
        %v878 = vpop.f32.mrb[0].mxu0
        %879 = vmatprep.mubr.f32.mxu0 0.0
        %880 = vmatmul.mubr.f32.gmra.mrb[0].mxu0 %v782
        %v881 = vpop.f32.mrb[0].mxu0
        %v882 = vadd.f32 0.0, %v881
        %v883 = vpop.f32.mrb[0].mxu0
        %884 = vmatprep.mubr.f32.mxu0 0.0
        %885 = vmatmul.mubr.f32.gmra.mrb[0].mxu0 %v783
        %v886 = vpop.f32.mrb[0].mxu0
        %v887 = vadd.f32 0.0, %v886
        %v888 = vpop.f32.mrb[0].mxu0
        %889 = vmatprep.mubr.f32.mxu0 0.0
        %890 = vmatmul.mubr.f32.gmra.mrb[0].mxu0 %v784
        %v891 = vpop.f32.mrb[0].mxu0
        %v892 = vadd.f32 0.0, %v891
        %v893 = vpop.f32.mrb[0].mxu0
        %894 = vmatprep.mubr.f32.mxu0 0.0
        %895 = vmatmul.mubr.f32.gmra.mrb[0].mxu0 %v785
        %v896 = vpop.f32.mrb[0].mxu0
        %v897 = vadd.f32 0.0, %v896
        %v898 = vpop.f32.mrb[0].mxu0
        %899 = vmatprep.mubr.f32.mxu0 0.0
        %900 = vmatmul.mubr.f32.gmra.mrb[0].mxu0 %v786
        %v901 = vpop.f32.mrb[0].mxu0
        %v902 = vadd.f32 0.0, %v901
        %v903 = vpop.f32.mrb[0].mxu0
        %904 = vmatprep.mubr.f32.mxu0 0.0
        %905 = vmatmul.mubr.f32.gmra.mrb[0].mxu0 %v787
        %v906 = vpop.f32.mrb[0].mxu0
        %v907 = vadd.f32 0.0, %v906
        %v908 = vpop.f32.mrb[0].mxu0
        %909 = vdwg.mxu0
        %v910 = vadd.f32 %v742, %v872
        %v911 = vadd.f32 %v747, %v877
        %v912 = vadd.f32 %v752, %v882
        %v913 = vadd.f32 %v757, %v887
        %v914 = vadd.f32 %v762, %v892
        %v915 = vadd.f32 %v767, %v897
        %v916 = vadd.f32 %v772, %v902
        %v917 = vadd.f32 %v777, %v907
        %v918 = vld [vmem:[%s512 + $0x7] sm:$0xff]
        %v919 = vld [vmem:[%s512 + $0x1f] sm:$0xff]
        %v920 = vld [vmem:[%s512 + $0x37] sm:$0xff]
        %v921 = vld [vmem:[%s512 + $0x4f] sm:$0xff]
        %v922 = vld [vmem:[%s512 + $0x67] sm:$0xff]
        %v923 = vld [vmem:[%s512 + $0x7f] sm:$0xff]
        %v924 = vld [vmem:[%s512 + $0x97] sm:$0xff]
        %v925 = vld [vmem:[%s512 + $0xaf] sm:$0xff]
        %s926 = scalar_lea.vmem [#allocation8], 384
        %v927 = vld [vmem:[%s926] sm:$0xff]
        %v928 = vld [vmem:[%s926 + $0x8] sm:$0xff]
        %v929 = vld [vmem:[%s926 + $0x10] sm:$0xff]
        %v930 = vld [vmem:[%s926 + $0x18] sm:$0xff]
        %v931 = vld [vmem:[%s926 + $0x20] sm:$0xff]
        %v932 = vld [vmem:[%s926 + $0x28] sm:$0xff]
        %v933 = vld [vmem:[%s926 + $0x30] sm:$0xff]
        %v934 = vld [vmem:[%s926 + $0x38] sm:$0xff]
        %v935 = vld [vmem:[%s926 + $0x40] sm:$0xff]
        %v936 = vld [vmem:[%s926 + $0x48] sm:$0xff]
        %v937 = vld [vmem:[%s926 + $0x50] sm:$0xff]
        %v938 = vld [vmem:[%s926 + $0x58] sm:$0xff]
        %v939 = vld [vmem:[%s926 + $0x60] sm:$0xff]
        %v940 = vld [vmem:[%s926 + $0x68] sm:$0xff]
        %v941 = vld [vmem:[%s926 + $0x70] sm:$0xff]
        %v942 = vld [vmem:[%s926 + $0x78] sm:$0xff]
        %943 = vmatprep.subr.mxu0 0.0
        %944 = vmatpush1.msra.mxu0 %v927
        %945 = vmatprep.subr.mxu0 0.0
        %946 = vmatpush1.msra.mxu0 %v928
        %947 = vmatprep.subr.mxu0 0.0
        %948 = vmatpush1.msra.mxu0 %v929
        %949 = vmatprep.subr.mxu0 0.0
        %950 = vmatpush1.msra.mxu0 %v930
        %951 = vmatprep.subr.mxu0 0.0
        %952 = vmatpush1.msra.mxu0 %v931
        %953 = vmatprep.subr.mxu0 0.0
        %954 = vmatpush1.msra.mxu0 %v932
        %955 = vmatprep.subr.mxu0 0.0
        %956 = vmatpush1.msra.mxu0 %v933
        %957 = vmatprep.subr.mxu0 0.0
        %958 = vmatpush1.msra.mxu0 %v934
        %959 = vmatprep.subr.mxu0 0.0
        %960 = vmatpush1.msra.mxu0 %v935
        %961 = vmatprep.subr.mxu0 0.0
        %962 = vmatpush1.msra.mxu0 %v936
        %963 = vmatprep.subr.mxu0 0.0
        %964 = vmatpush1.msra.mxu0 %v937
        %965 = vmatprep.subr.mxu0 0.0
        %966 = vmatpush1.msra.mxu0 %v938
        %967 = vmatprep.subr.mxu0 0.0
        %968 = vmatpush1.msra.mxu0 %v939
        %969 = vmatprep.subr.mxu0 0.0
        %970 = vmatpush1.msra.mxu0 %v940
        %971 = vmatprep.subr.mxu0 0.0
        %972 = vmatpush1.msra.mxu0 %v941
        %973 = vmatprep.subr.mxu0 0.0
        %974 = vmatpush1.msra.mxu0 %v942
        %975 = vmatprep.subr.mxu0 0.0
        %976 = vmatpush1.msra.mxu0 0.0
        %977 = vmatprep.subr.mxu0 0.0
        %978 = vmatpush1.msra.mxu0 0.0
        %979 = vmatprep.subr.mxu0 0.0
        %980 = vmatpush1.msra.mxu0 0.0
        %981 = vmatprep.subr.mxu0 0.0
        %982 = vmatpush1.msra.mxu0 0.0
        %983 = vmatprep.subr.mxu0 0.0
        %984 = vmatpush1.msra.mxu0 0.0
        %985 = vmatprep.subr.mxu0 0.0
        %986 = vmatpush1.msra.mxu0 0.0
        %987 = vmatprep.subr.mxu0 0.0
        %988 = vmatpush1.msra.mxu0 0.0
        %989 = vmatprep.subr.mxu0 0.0
        %990 = vmatpush1.msra.mxu0 0.0
        %991 = vmatprep.subr.mxu0 0.0
        %992 = vmatpush1.msra.mxu0 0.0
        %993 = vmatprep.subr.mxu0 0.0
        %994 = vmatpush1.msra.mxu0 0.0
        %995 = vmatprep.subr.mxu0 0.0
        %996 = vmatpush1.msra.mxu0 0.0
        %997 = vmatprep.subr.mxu0 0.0
        %998 = vmatpush1.msra.mxu0 0.0
        %999 = vmatprep.subr.mxu0 0.0
        %1000 = vmatpush1.msra.mxu0 0.0
        %1001 = vmatprep.subr.mxu0 0.0
        %1002 = vmatpush1.msra.mxu0 0.0
        %1003 = vmatprep.subr.mxu0 0.0
        %1004 = vmatpush1.msra.mxu0 0.0
        %1005 = vmatprep.subr.mxu0 0.0
        %1006 = vmatpush1.msra.mxu0 0.0
        %1007 = vmatprep.mubr.f32.mxu0 0.0
        %1008 = vmatmul.mubr.f32.gmra.mrb[0].mxu0 %v918
        %v1009 = vpop.f32.mrb[0].mxu0
        %v1010 = vadd.f32 0.0, %v1009
        %v1011 = vpop.f32.mrb[0].mxu0
        %1012 = vmatprep.mubr.f32.mxu0 0.0
        %1013 = vmatmul.mubr.f32.gmra.mrb[0].mxu0 %v919
        %v1014 = vpop.f32.mrb[0].mxu0
        %v1015 = vadd.f32 0.0, %v1014
        %v1016 = vpop.f32.mrb[0].mxu0
        %1017 = vmatprep.mubr.f32.mxu0 0.0
        %1018 = vmatmul.mubr.f32.gmra.mrb[0].mxu0 %v920
        %v1019 = vpop.f32.mrb[0].mxu0
        %v1020 = vadd.f32 0.0, %v1019
        %v1021 = vpop.f32.mrb[0].mxu0
        %1022 = vmatprep.mubr.f32.mxu0 0.0
        %1023 = vmatmul.mubr.f32.gmra.mrb[0].mxu0 %v921
        %v1024 = vpop.f32.mrb[0].mxu0
        %v1025 = vadd.f32 0.0, %v1024
        %v1026 = vpop.f32.mrb[0].mxu0
        %1027 = vmatprep.mubr.f32.mxu0 0.0
        %1028 = vmatmul.mubr.f32.gmra.mrb[0].mxu0 %v922
        %v1029 = vpop.f32.mrb[0].mxu0
        %v1030 = vadd.f32 0.0, %v1029
        %v1031 = vpop.f32.mrb[0].mxu0
        %1032 = vmatprep.mubr.f32.mxu0 0.0
        %1033 = vmatmul.mubr.f32.gmra.mrb[0].mxu0 %v923
        %v1034 = vpop.f32.mrb[0].mxu0
        %v1035 = vadd.f32 0.0, %v1034
        %v1036 = vpop.f32.mrb[0].mxu0
        %1037 = vmatprep.mubr.f32.mxu0 0.0
        %1038 = vmatmul.mubr.f32.gmra.mrb[0].mxu0 %v924
        %v1039 = vpop.f32.mrb[0].mxu0
        %v1040 = vadd.f32 0.0, %v1039
        %v1041 = vpop.f32.mrb[0].mxu0
        %1042 = vmatprep.mubr.f32.mxu0 0.0
        %1043 = vmatmul.mubr.f32.gmra.mrb[0].mxu0 %v925
        %v1044 = vpop.f32.mrb[0].mxu0
        %v1045 = vadd.f32 0.0, %v1044
        %v1046 = vpop.f32.mrb[0].mxu0
        %1047 = vdwg.mxu0
        %v1048 = vadd.f32 %v910, %v1010
        %v1049 = vadd.f32 %v911, %v1015
        %v1050 = vadd.f32 %v912, %v1020
        %v1051 = vadd.f32 %v913, %v1025
        %v1052 = vadd.f32 %v914, %v1030
        %v1053 = vadd.f32 %v915, %v1035
        %v1054 = vadd.f32 %v916, %v1040
        %v1055 = vadd.f32 %v917, %v1045
        %v1056 = vld [vmem:[%s512 + $0x8] sm:$0xff]
        %v1057 = vld [vmem:[%s512 + $0x20] sm:$0xff]
        %v1058 = vld [vmem:[%s512 + $0x38] sm:$0xff]
        %v1059 = vld [vmem:[%s512 + $0x50] sm:$0xff]
        %v1060 = vld [vmem:[%s512 + $0x68] sm:$0xff]
        %v1061 = vld [vmem:[%s512 + $0x80] sm:$0xff]
        %v1062 = vld [vmem:[%s512 + $0x98] sm:$0xff]
        %v1063 = vld [vmem:[%s512 + $0xb0] sm:$0xff]
        %s1064 = scalar_lea.vmem [#allocation8], 512
        %v1065 = vld [vmem:[%s1064] sm:$0xff]
        %v1066 = vld [vmem:[%s1064 + $0x8] sm:$0xff]
        %v1067 = vld [vmem:[%s1064 + $0x10] sm:$0xff]
        %v1068 = vld [vmem:[%s1064 + $0x18] sm:$0xff]
        %v1069 = vld [vmem:[%s1064 + $0x20] sm:$0xff]
        %v1070 = vld [vmem:[%s1064 + $0x28] sm:$0xff]
        %v1071 = vld [vmem:[%s1064 + $0x30] sm:$0xff]
        %v1072 = vld [vmem:[%s1064 + $0x38] sm:$0xff]
        %v1073 = vld [vmem:[%s1064 + $0x40] sm:$0xff]
        %v1074 = vld [vmem:[%s1064 + $0x48] sm:$0xff]
        %v1075 = vld [vmem:[%s1064 + $0x50] sm:$0xff]
        %v1076 = vld [vmem:[%s1064 + $0x58] sm:$0xff]
        %v1077 = vld [vmem:[%s1064 + $0x60] sm:$0xff]
        %v1078 = vld [vmem:[%s1064 + $0x68] sm:$0xff]
        %v1079 = vld [vmem:[%s1064 + $0x70] sm:$0xff]
        %v1080 = vld [vmem:[%s1064 + $0x78] sm:$0xff]
        %1081 = vmatprep.subr.mxu0 0.0
        %1082 = vmatpush1.msra.mxu0 %v1065
        %1083 = vmatprep.subr.mxu0 0.0
        %1084 = vmatpush1.msra.mxu0 %v1066
        %1085 = vmatprep.subr.mxu0 0.0
        %1086 = vmatpush1.msra.mxu0 %v1067
        %1087 = vmatprep.subr.mxu0 0.0
        %1088 = vmatpush1.msra.mxu0 %v1068
        %1089 = vmatprep.subr.mxu0 0.0
        %1090 = vmatpush1.msra.mxu0 %v1069
        %1091 = vmatprep.subr.mxu0 0.0
        %1092 = vmatpush1.msra.mxu0 %v1070
        %1093 = vmatprep.subr.mxu0 0.0
        %1094 = vmatpush1.msra.mxu0 %v1071
        %1095 = vmatprep.subr.mxu0 0.0
        %1096 = vmatpush1.msra.mxu0 %v1072
        %1097 = vmatprep.subr.mxu0 0.0
        %1098 = vmatpush1.msra.mxu0 %v1073
        %1099 = vmatprep.subr.mxu0 0.0
        %1100 = vmatpush1.msra.mxu0 %v1074
        %1101 = vmatprep.subr.mxu0 0.0
        %1102 = vmatpush1.msra.mxu0 %v1075
        %1103 = vmatprep.subr.mxu0 0.0
        %1104 = vmatpush1.msra.mxu0 %v1076
        %1105 = vmatprep.subr.mxu0 0.0
        %1106 = vmatpush1.msra.mxu0 %v1077
        %1107 = vmatprep.subr.mxu0 0.0
        %1108 = vmatpush1.msra.mxu0 %v1078
        %1109 = vmatprep.subr.mxu0 0.0
        %1110 = vmatpush1.msra.mxu0 %v1079
        %1111 = vmatprep.subr.mxu0 0.0
        %1112 = vmatpush1.msra.mxu0 %v1080
        %1113 = vmatprep.subr.mxu0 0.0
        %1114 = vmatpush1.msra.mxu0 0.0
        %1115 = vmatprep.subr.mxu0 0.0
        %1116 = vmatpush1.msra.mxu0 0.0
        %1117 = vmatprep.subr.mxu0 0.0
        %1118 = vmatpush1.msra.mxu0 0.0
        %1119 = vmatprep.subr.mxu0 0.0
        %1120 = vmatpush1.msra.mxu0 0.0
        %1121 = vmatprep.subr.mxu0 0.0
        %1122 = vmatpush1.msra.mxu0 0.0
        %1123 = vmatprep.subr.mxu0 0.0
        %1124 = vmatpush1.msra.mxu0 0.0
        %1125 = vmatprep.subr.mxu0 0.0
        %1126 = vmatpush1.msra.mxu0 0.0
        %1127 = vmatprep.subr.mxu0 0.0
        %1128 = vmatpush1.msra.mxu0 0.0
        %1129 = vmatprep.subr.mxu0 0.0
        %1130 = vmatpush1.msra.mxu0 0.0
        %1131 = vmatprep.subr.mxu0 0.0
        %1132 = vmatpush1.msra.mxu0 0.0
        %1133 = vmatprep.subr.mxu0 0.0
        %1134 = vmatpush1.msra.mxu0 0.0
        %1135 = vmatprep.subr.mxu0 0.0
        %1136 = vmatpush1.msra.mxu0 0.0
        %1137 = vmatprep.subr.mxu0 0.0
        %1138 = vmatpush1.msra.mxu0 0.0
        %1139 = vmatprep.subr.mxu0 0.0
        %1140 = vmatpush1.msra.mxu0 0.0
        %1141 = vmatprep.subr.mxu0 0.0
        %1142 = vmatpush1.msra.mxu0 0.0
        %1143 = vmatprep.subr.mxu0 0.0
        %1144 = vmatpush1.msra.mxu0 0.0
        %1145 = vmatprep.mubr.f32.mxu0 0.0
        %1146 = vmatmul.mubr.f32.gmra.mrb[0].mxu0 %v1056
        %v1147 = vpop.f32.mrb[0].mxu0
        %v1148 = vadd.f32 0.0, %v1147
        %v1149 = vpop.f32.mrb[0].mxu0
        %1150 = vmatprep.mubr.f32.mxu0 0.0
        %1151 = vmatmul.mubr.f32.gmra.mrb[0].mxu0 %v1057
        %v1152 = vpop.f32.mrb[0].mxu0
        %v1153 = vadd.f32 0.0, %v1152
        %v1154 = vpop.f32.mrb[0].mxu0
        %1155 = vmatprep.mubr.f32.mxu0 0.0
        %1156 = vmatmul.mubr.f32.gmra.mrb[0].mxu0 %v1058
        %v1157 = vpop.f32.mrb[0].mxu0
        %v1158 = vadd.f32 0.0, %v1157
        %v1159 = vpop.f32.mrb[0].mxu0
        %1160 = vmatprep.mubr.f32.mxu0 0.0
        %1161 = vmatmul.mubr.f32.gmra.mrb[0].mxu0 %v1059
        %v1162 = vpop.f32.mrb[0].mxu0
        %v1163 = vadd.f32 0.0, %v1162
        %v1164 = vpop.f32.mrb[0].mxu0
        %1165 = vmatprep.mubr.f32.mxu0 0.0
        %1166 = vmatmul.mubr.f32.gmra.mrb[0].mxu0 %v1060
        %v1167 = vpop.f32.mrb[0].mxu0
        %v1168 = vadd.f32 0.0, %v1167
        %v1169 = vpop.f32.mrb[0].mxu0
        %1170 = vmatprep.mubr.f32.mxu0 0.0
        %1171 = vmatmul.mubr.f32.gmra.mrb[0].mxu0 %v1061
        %v1172 = vpop.f32.mrb[0].mxu0
        %v1173 = vadd.f32 0.0, %v1172
        %v1174 = vpop.f32.mrb[0].mxu0
        %1175 = vmatprep.mubr.f32.mxu0 0.0
        %1176 = vmatmul.mubr.f32.gmra.mrb[0].mxu0 %v1062
        %v1177 = vpop.f32.mrb[0].mxu0
        %v1178 = vadd.f32 0.0, %v1177
        %v1179 = vpop.f32.mrb[0].mxu0
        %1180 = vmatprep.mubr.f32.mxu0 0.0
        %1181 = vmatmul.mubr.f32.gmra.mrb[0].mxu0 %v1063
        %v1182 = vpop.f32.mrb[0].mxu0
        %v1183 = vadd.f32 0.0, %v1182
        %v1184 = vpop.f32.mrb[0].mxu0
        %1185 = vdwg.mxu0
        %v1186 = vadd.f32 %v1048, %v1148
        %v1187 = vadd.f32 %v1049, %v1153
        %v1188 = vadd.f32 %v1050, %v1158
        %v1189 = vadd.f32 %v1051, %v1163
        %v1190 = vadd.f32 %v1052, %v1168
        %v1191 = vadd.f32 %v1053, %v1173
        %v1192 = vadd.f32 %v1054, %v1178
        %v1193 = vadd.f32 %v1055, %v1183
        %v1194 = vld [vmem:[%s512 + $0x9] sm:$0xff]
        %v1195 = vld [vmem:[%s512 + $0x21] sm:$0xff]
        %v1196 = vld [vmem:[%s512 + $0x39] sm:$0xff]
        %v1197 = vld [vmem:[%s512 + $0x51] sm:$0xff]
        %v1198 = vld [vmem:[%s512 + $0x69] sm:$0xff]
        %v1199 = vld [vmem:[%s512 + $0x81] sm:$0xff]
        %v1200 = vld [vmem:[%s512 + $0x99] sm:$0xff]
        %v1201 = vld [vmem:[%s512 + $0xb1] sm:$0xff]
        %s1202 = scalar_lea.vmem [#allocation8], 640
        %v1203 = vld [vmem:[%s1202] sm:$0xff]
        %v1204 = vld [vmem:[%s1202 + $0x8] sm:$0xff]
        %v1205 = vld [vmem:[%s1202 + $0x10] sm:$0xff]
        %v1206 = vld [vmem:[%s1202 + $0x18] sm:$0xff]
        %v1207 = vld [vmem:[%s1202 + $0x20] sm:$0xff]
        %v1208 = vld [vmem:[%s1202 + $0x28] sm:$0xff]
        %v1209 = vld [vmem:[%s1202 + $0x30] sm:$0xff]
        %v1210 = vld [vmem:[%s1202 + $0x38] sm:$0xff]
        %v1211 = vld [vmem:[%s1202 + $0x40] sm:$0xff]
        %v1212 = vld [vmem:[%s1202 + $0x48] sm:$0xff]
        %v1213 = vld [vmem:[%s1202 + $0x50] sm:$0xff]
        %v1214 = vld [vmem:[%s1202 + $0x58] sm:$0xff]
        %v1215 = vld [vmem:[%s1202 + $0x60] sm:$0xff]
        %v1216 = vld [vmem:[%s1202 + $0x68] sm:$0xff]
        %v1217 = vld [vmem:[%s1202 + $0x70] sm:$0xff]
        %v1218 = vld [vmem:[%s1202 + $0x78] sm:$0xff]
        %1219 = vmatprep.subr.mxu0 0.0
        %1220 = vmatpush1.msra.mxu0 %v1203
        %1221 = vmatprep.subr.mxu0 0.0
        %1222 = vmatpush1.msra.mxu0 %v1204
        %1223 = vmatprep.subr.mxu0 0.0
        %1224 = vmatpush1.msra.mxu0 %v1205
        %1225 = vmatprep.subr.mxu0 0.0
        %1226 = vmatpush1.msra.mxu0 %v1206
        %1227 = vmatprep.subr.mxu0 0.0
        %1228 = vmatpush1.msra.mxu0 %v1207
        %1229 = vmatprep.subr.mxu0 0.0
        %1230 = vmatpush1.msra.mxu0 %v1208
        %1231 = vmatprep.subr.mxu0 0.0
        %1232 = vmatpush1.msra.mxu0 %v1209
        %1233 = vmatprep.subr.mxu0 0.0
        %1234 = vmatpush1.msra.mxu0 %v1210
        %1235 = vmatprep.subr.mxu0 0.0
        %1236 = vmatpush1.msra.mxu0 %v1211
        %1237 = vmatprep.subr.mxu0 0.0
        %1238 = vmatpush1.msra.mxu0 %v1212
        %1239 = vmatprep.subr.mxu0 0.0
        %1240 = vmatpush1.msra.mxu0 %v1213
        %1241 = vmatprep.subr.mxu0 0.0
        %1242 = vmatpush1.msra.mxu0 %v1214
        %1243 = vmatprep.subr.mxu0 0.0
        %1244 = vmatpush1.msra.mxu0 %v1215
        %1245 = vmatprep.subr.mxu0 0.0
        %1246 = vmatpush1.msra.mxu0 %v1216
        %1247 = vmatprep.subr.mxu0 0.0
        %1248 = vmatpush1.msra.mxu0 %v1217
        %1249 = vmatprep.subr.mxu0 0.0
        %1250 = vmatpush1.msra.mxu0 %v1218
        %1251 = vmatprep.subr.mxu0 0.0
        %1252 = vmatpush1.msra.mxu0 0.0
        %1253 = vmatprep.subr.mxu0 0.0
        %1254 = vmatpush1.msra.mxu0 0.0
        %1255 = vmatprep.subr.mxu0 0.0
        %1256 = vmatpush1.msra.mxu0 0.0
        %1257 = vmatprep.subr.mxu0 0.0
        %1258 = vmatpush1.msra.mxu0 0.0
        %1259 = vmatprep.subr.mxu0 0.0
        %1260 = vmatpush1.msra.mxu0 0.0
        %1261 = vmatprep.subr.mxu0 0.0
        %1262 = vmatpush1.msra.mxu0 0.0
        %1263 = vmatprep.subr.mxu0 0.0
        %1264 = vmatpush1.msra.mxu0 0.0
        %1265 = vmatprep.subr.mxu0 0.0
        %1266 = vmatpush1.msra.mxu0 0.0
        %1267 = vmatprep.subr.mxu0 0.0
        %1268 = vmatpush1.msra.mxu0 0.0
        %1269 = vmatprep.subr.mxu0 0.0
        %1270 = vmatpush1.msra.mxu0 0.0
        %1271 = vmatprep.subr.mxu0 0.0
        %1272 = vmatpush1.msra.mxu0 0.0
        %1273 = vmatprep.subr.mxu0 0.0
        %1274 = vmatpush1.msra.mxu0 0.0
        %1275 = vmatprep.subr.mxu0 0.0
        %1276 = vmatpush1.msra.mxu0 0.0
        %1277 = vmatprep.subr.mxu0 0.0
        %1278 = vmatpush1.msra.mxu0 0.0
        %1279 = vmatprep.subr.mxu0 0.0
        %1280 = vmatpush1.msra.mxu0 0.0
        %1281 = vmatprep.subr.mxu0 0.0
        %1282 = vmatpush1.msra.mxu0 0.0
        %1283 = vmatprep.mubr.f32.mxu0 0.0
        %1284 = vmatmul.mubr.f32.gmra.mrb[0].mxu0 %v1194
        %v1285 = vpop.f32.mrb[0].mxu0
        %v1286 = vadd.f32 0.0, %v1285
        %v1287 = vpop.f32.mrb[0].mxu0
        %1288 = vmatprep.mubr.f32.mxu0 0.0
        %1289 = vmatmul.mubr.f32.gmra.mrb[0].mxu0 %v1195
        %v1290 = vpop.f32.mrb[0].mxu0
        %v1291 = vadd.f32 0.0, %v1290
        %v1292 = vpop.f32.mrb[0].mxu0
        %1293 = vmatprep.mubr.f32.mxu0 0.0
        %1294 = vmatmul.mubr.f32.gmra.mrb[0].mxu0 %v1196
        %v1295 = vpop.f32.mrb[0].mxu0
        %v1296 = vadd.f32 0.0, %v1295
        %v1297 = vpop.f32.mrb[0].mxu0
        %1298 = vmatprep.mubr.f32.mxu0 0.0
        %1299 = vmatmul.mubr.f32.gmra.mrb[0].mxu0 %v1197
        %v1300 = vpop.f32.mrb[0].mxu0
        %v1301 = vadd.f32 0.0, %v1300
        %v1302 = vpop.f32.mrb[0].mxu0
        %1303 = vmatprep.mubr.f32.mxu0 0.0
        %1304 = vmatmul.mubr.f32.gmra.mrb[0].mxu0 %v1198
        %v1305 = vpop.f32.mrb[0].mxu0
        %v1306 = vadd.f32 0.0, %v1305
        %v1307 = vpop.f32.mrb[0].mxu0
        %1308 = vmatprep.mubr.f32.mxu0 0.0
        %1309 = vmatmul.mubr.f32.gmra.mrb[0].mxu0 %v1199
        %v1310 = vpop.f32.mrb[0].mxu0
        %v1311 = vadd.f32 0.0, %v1310
        %v1312 = vpop.f32.mrb[0].mxu0
        %1313 = vmatprep.mubr.f32.mxu0 0.0
        %1314 = vmatmul.mubr.f32.gmra.mrb[0].mxu0 %v1200
        %v1315 = vpop.f32.mrb[0].mxu0
        %v1316 = vadd.f32 0.0, %v1315
        %v1317 = vpop.f32.mrb[0].mxu0
        %1318 = vmatprep.mubr.f32.mxu0 0.0
        %1319 = vmatmul.mubr.f32.gmra.mrb[0].mxu0 %v1201
        %v1320 = vpop.f32.mrb[0].mxu0
        %v1321 = vadd.f32 0.0, %v1320
        %v1322 = vpop.f32.mrb[0].mxu0
        %1323 = vdwg.mxu0
        %v1324 = vadd.f32 %v1186, %v1286
        %v1325 = vadd.f32 %v1187, %v1291
        %v1326 = vadd.f32 %v1188, %v1296
        %v1327 = vadd.f32 %v1189, %v1301
        %v1328 = vadd.f32 %v1190, %v1306
        %v1329 = vadd.f32 %v1191, %v1311
        %v1330 = vadd.f32 %v1192, %v1316
        %v1331 = vadd.f32 %v1193, %v1321
        %s1332 = scalar_lea.vmem [#allocation2], 48
        %v1333 = vld [vmem:[%s1332 + $0x7] sm:$0xff]
        %v1334 = vld [vmem:[%s1332 + $0x1f] sm:$0xff]
        %v1335 = vld [vmem:[%s1332 + $0x37] sm:$0xff]
        %v1336 = vld [vmem:[%s1332 + $0x4f] sm:$0xff]
        %v1337 = vld [vmem:[%s1332 + $0x67] sm:$0xff]
        %v1338 = vld [vmem:[%s1332 + $0x7f] sm:$0xff]
        %v1339 = vld [vmem:[%s1332 + $0x97] sm:$0xff]
        %v1340 = vld [vmem:[%s1332 + $0xaf] sm:$0xff]
        %s1341 = scalar_lea.vmem [#allocation8], 768
        %v1342 = vld [vmem:[%s1341] sm:$0xff]
        %v1343 = vld [vmem:[%s1341 + $0x8] sm:$0xff]
        %v1344 = vld [vmem:[%s1341 + $0x10] sm:$0xff]
        %v1345 = vld [vmem:[%s1341 + $0x18] sm:$0xff]
        %v1346 = vld [vmem:[%s1341 + $0x20] sm:$0xff]
        %v1347 = vld [vmem:[%s1341 + $0x28] sm:$0xff]
        %v1348 = vld [vmem:[%s1341 + $0x30] sm:$0xff]
        %v1349 = vld [vmem:[%s1341 + $0x38] sm:$0xff]
        %v1350 = vld [vmem:[%s1341 + $0x40] sm:$0xff]
        %v1351 = vld [vmem:[%s1341 + $0x48] sm:$0xff]
        %v1352 = vld [vmem:[%s1341 + $0x50] sm:$0xff]
        %v1353 = vld [vmem:[%s1341 + $0x58] sm:$0xff]
        %v1354 = vld [vmem:[%s1341 + $0x60] sm:$0xff]
        %v1355 = vld [vmem:[%s1341 + $0x68] sm:$0xff]
        %v1356 = vld [vmem:[%s1341 + $0x70] sm:$0xff]
        %v1357 = vld [vmem:[%s1341 + $0x78] sm:$0xff]
        %1358 = vmatprep.subr.mxu0 0.0
        %1359 = vmatpush1.msra.mxu0 %v1342
        %1360 = vmatprep.subr.mxu0 0.0
        %1361 = vmatpush1.msra.mxu0 %v1343
        %1362 = vmatprep.subr.mxu0 0.0
        %1363 = vmatpush1.msra.mxu0 %v1344
        %1364 = vmatprep.subr.mxu0 0.0
        %1365 = vmatpush1.msra.mxu0 %v1345
        %1366 = vmatprep.subr.mxu0 0.0
        %1367 = vmatpush1.msra.mxu0 %v1346
        %1368 = vmatprep.subr.mxu0 0.0
        %1369 = vmatpush1.msra.mxu0 %v1347
        %1370 = vmatprep.subr.mxu0 0.0
        %1371 = vmatpush1.msra.mxu0 %v1348
        %1372 = vmatprep.subr.mxu0 0.0
        %1373 = vmatpush1.msra.mxu0 %v1349
        %1374 = vmatprep.subr.mxu0 0.0
        %1375 = vmatpush1.msra.mxu0 %v1350
        %1376 = vmatprep.subr.mxu0 0.0
        %1377 = vmatpush1.msra.mxu0 %v1351
        %1378 = vmatprep.subr.mxu0 0.0
        %1379 = vmatpush1.msra.mxu0 %v1352
        %1380 = vmatprep.subr.mxu0 0.0
        %1381 = vmatpush1.msra.mxu0 %v1353
        %1382 = vmatprep.subr.mxu0 0.0
        %1383 = vmatpush1.msra.mxu0 %v1354
        %1384 = vmatprep.subr.mxu0 0.0
        %1385 = vmatpush1.msra.mxu0 %v1355
        %1386 = vmatprep.subr.mxu0 0.0
        %1387 = vmatpush1.msra.mxu0 %v1356
        %1388 = vmatprep.subr.mxu0 0.0
        %1389 = vmatpush1.msra.mxu0 %v1357
        %1390 = vmatprep.subr.mxu0 0.0
        %1391 = vmatpush1.msra.mxu0 0.0
        %1392 = vmatprep.subr.mxu0 0.0
        %1393 = vmatpush1.msra.mxu0 0.0
        %1394 = vmatprep.subr.mxu0 0.0
        %1395 = vmatpush1.msra.mxu0 0.0
        %1396 = vmatprep.subr.mxu0 0.0
        %1397 = vmatpush1.msra.mxu0 0.0
        %1398 = vmatprep.subr.mxu0 0.0
        %1399 = vmatpush1.msra.mxu0 0.0
        %1400 = vmatprep.subr.mxu0 0.0
        %1401 = vmatpush1.msra.mxu0 0.0
        %1402 = vmatprep.subr.mxu0 0.0
        %1403 = vmatpush1.msra.mxu0 0.0
        %1404 = vmatprep.subr.mxu0 0.0
        %1405 = vmatpush1.msra.mxu0 0.0
        %1406 = vmatprep.subr.mxu0 0.0
        %1407 = vmatpush1.msra.mxu0 0.0
        %1408 = vmatprep.subr.mxu0 0.0
        %1409 = vmatpush1.msra.mxu0 0.0
        %1410 = vmatprep.subr.mxu0 0.0
        %1411 = vmatpush1.msra.mxu0 0.0
        %1412 = vmatprep.subr.mxu0 0.0
        %1413 = vmatpush1.msra.mxu0 0.0
        %1414 = vmatprep.subr.mxu0 0.0
        %1415 = vmatpush1.msra.mxu0 0.0
        %1416 = vmatprep.subr.mxu0 0.0
        %1417 = vmatpush1.msra.mxu0 0.0
        %1418 = vmatprep.subr.mxu0 0.0
        %1419 = vmatpush1.msra.mxu0 0.0
        %1420 = vmatprep.subr.mxu0 0.0
        %1421 = vmatpush1.msra.mxu0 0.0
        %1422 = vmatprep.mubr.f32.mxu0 0.0
        %1423 = vmatmul.mubr.f32.gmra.mrb[0].mxu0 %v1333
        %v1424 = vpop.f32.mrb[0].mxu0
        %v1425 = vadd.f32 0.0, %v1424
        %v1426 = vpop.f32.mrb[0].mxu0
        %1427 = vmatprep.mubr.f32.mxu0 0.0
        %1428 = vmatmul.mubr.f32.gmra.mrb[0].mxu0 %v1334
        %v1429 = vpop.f32.mrb[0].mxu0
        %v1430 = vadd.f32 0.0, %v1429
        %v1431 = vpop.f32.mrb[0].mxu0
        %1432 = vmatprep.mubr.f32.mxu0 0.0
        %1433 = vmatmul.mubr.f32.gmra.mrb[0].mxu0 %v1335
        %v1434 = vpop.f32.mrb[0].mxu0
        %v1435 = vadd.f32 0.0, %v1434
        %v1436 = vpop.f32.mrb[0].mxu0
        %1437 = vmatprep.mubr.f32.mxu0 0.0
        %1438 = vmatmul.mubr.f32.gmra.mrb[0].mxu0 %v1336
        %v1439 = vpop.f32.mrb[0].mxu0
        %v1440 = vadd.f32 0.0, %v1439
        %v1441 = vpop.f32.mrb[0].mxu0
        %1442 = vmatprep.mubr.f32.mxu0 0.0
        %1443 = vmatmul.mubr.f32.gmra.mrb[0].mxu0 %v1337
        %v1444 = vpop.f32.mrb[0].mxu0
        %v1445 = vadd.f32 0.0, %v1444
        %v1446 = vpop.f32.mrb[0].mxu0
        %1447 = vmatprep.mubr.f32.mxu0 0.0
        %1448 = vmatmul.mubr.f32.gmra.mrb[0].mxu0 %v1338
        %v1449 = vpop.f32.mrb[0].mxu0
        %v1450 = vadd.f32 0.0, %v1449
        %v1451 = vpop.f32.mrb[0].mxu0
        %1452 = vmatprep.mubr.f32.mxu0 0.0
        %1453 = vmatmul.mubr.f32.gmra.mrb[0].mxu0 %v1339
        %v1454 = vpop.f32.mrb[0].mxu0
        %v1455 = vadd.f32 0.0, %v1454
        %v1456 = vpop.f32.mrb[0].mxu0
        %1457 = vmatprep.mubr.f32.mxu0 0.0
        %1458 = vmatmul.mubr.f32.gmra.mrb[0].mxu0 %v1340
        %v1459 = vpop.f32.mrb[0].mxu0
        %v1460 = vadd.f32 0.0, %v1459
        %v1461 = vpop.f32.mrb[0].mxu0
        %1462 = vdwg.mxu0
        %v1463 = vadd.f32 %v1324, %v1425
        %v1464 = vadd.f32 %v1325, %v1430
        %v1465 = vadd.f32 %v1326, %v1435
        %v1466 = vadd.f32 %v1327, %v1440
        %v1467 = vadd.f32 %v1328, %v1445
        %v1468 = vadd.f32 %v1329, %v1450
        %v1469 = vadd.f32 %v1330, %v1455
        %v1470 = vadd.f32 %v1331, %v1460
        %v1471 = vld [vmem:[%s1332 + $0x8] sm:$0xff]
        %v1472 = vld [vmem:[%s1332 + $0x20] sm:$0xff]
        %v1473 = vld [vmem:[%s1332 + $0x38] sm:$0xff]
        %v1474 = vld [vmem:[%s1332 + $0x50] sm:$0xff]
        %v1475 = vld [vmem:[%s1332 + $0x68] sm:$0xff]
        %v1476 = vld [vmem:[%s1332 + $0x80] sm:$0xff]
        %v1477 = vld [vmem:[%s1332 + $0x98] sm:$0xff]
        %v1478 = vld [vmem:[%s1332 + $0xb0] sm:$0xff]
        %s1479 = scalar_lea.vmem [#allocation8], 896
        %v1480 = vld [vmem:[%s1479] sm:$0xff]
        %v1481 = vld [vmem:[%s1479 + $0x8] sm:$0xff]
        %v1482 = vld [vmem:[%s1479 + $0x10] sm:$0xff]
        %v1483 = vld [vmem:[%s1479 + $0x18] sm:$0xff]
        %v1484 = vld [vmem:[%s1479 + $0x20] sm:$0xff]
        %v1485 = vld [vmem:[%s1479 + $0x28] sm:$0xff]
        %v1486 = vld [vmem:[%s1479 + $0x30] sm:$0xff]
        %v1487 = vld [vmem:[%s1479 + $0x38] sm:$0xff]
        %v1488 = vld [vmem:[%s1479 + $0x40] sm:$0xff]
        %v1489 = vld [vmem:[%s1479 + $0x48] sm:$0xff]
        %v1490 = vld [vmem:[%s1479 + $0x50] sm:$0xff]
        %v1491 = vld [vmem:[%s1479 + $0x58] sm:$0xff]
        %v1492 = vld [vmem:[%s1479 + $0x60] sm:$0xff]
        %v1493 = vld [vmem:[%s1479 + $0x68] sm:$0xff]
        %v1494 = vld [vmem:[%s1479 + $0x70] sm:$0xff]
        %v1495 = vld [vmem:[%s1479 + $0x78] sm:$0xff]
        %1496 = vmatprep.subr.mxu0 0.0
        %1497 = vmatpush1.msra.mxu0 %v1480
        %1498 = vmatprep.subr.mxu0 0.0
        %1499 = vmatpush1.msra.mxu0 %v1481
        %1500 = vmatprep.subr.mxu0 0.0
        %1501 = vmatpush1.msra.mxu0 %v1482
        %1502 = vmatprep.subr.mxu0 0.0
        %1503 = vmatpush1.msra.mxu0 %v1483
        %1504 = vmatprep.subr.mxu0 0.0
        %1505 = vmatpush1.msra.mxu0 %v1484
        %1506 = vmatprep.subr.mxu0 0.0
        %1507 = vmatpush1.msra.mxu0 %v1485
        %1508 = vmatprep.subr.mxu0 0.0
        %1509 = vmatpush1.msra.mxu0 %v1486
        %1510 = vmatprep.subr.mxu0 0.0
        %1511 = vmatpush1.msra.mxu0 %v1487
        %1512 = vmatprep.subr.mxu0 0.0
        %1513 = vmatpush1.msra.mxu0 %v1488
        %1514 = vmatprep.subr.mxu0 0.0
        %1515 = vmatpush1.msra.mxu0 %v1489
        %1516 = vmatprep.subr.mxu0 0.0
        %1517 = vmatpush1.msra.mxu0 %v1490
        %1518 = vmatprep.subr.mxu0 0.0
        %1519 = vmatpush1.msra.mxu0 %v1491
        %1520 = vmatprep.subr.mxu0 0.0
        %1521 = vmatpush1.msra.mxu0 %v1492
        %1522 = vmatprep.subr.mxu0 0.0
        %1523 = vmatpush1.msra.mxu0 %v1493
        %1524 = vmatprep.subr.mxu0 0.0
        %1525 = vmatpush1.msra.mxu0 %v1494
        %1526 = vmatprep.subr.mxu0 0.0
        %1527 = vmatpush1.msra.mxu0 %v1495
        %1528 = vmatprep.subr.mxu0 0.0
        %1529 = vmatpush1.msra.mxu0 0.0
        %1530 = vmatprep.subr.mxu0 0.0
        %1531 = vmatpush1.msra.mxu0 0.0
        %1532 = vmatprep.subr.mxu0 0.0
        %1533 = vmatpush1.msra.mxu0 0.0
        %1534 = vmatprep.subr.mxu0 0.0
        %1535 = vmatpush1.msra.mxu0 0.0
        %1536 = vmatprep.subr.mxu0 0.0
        %1537 = vmatpush1.msra.mxu0 0.0
        %1538 = vmatprep.subr.mxu0 0.0
        %1539 = vmatpush1.msra.mxu0 0.0
        %1540 = vmatprep.subr.mxu0 0.0
        %1541 = vmatpush1.msra.mxu0 0.0
        %1542 = vmatprep.subr.mxu0 0.0
        %1543 = vmatpush1.msra.mxu0 0.0
        %1544 = vmatprep.subr.mxu0 0.0
        %1545 = vmatpush1.msra.mxu0 0.0
        %1546 = vmatprep.subr.mxu0 0.0
        %1547 = vmatpush1.msra.mxu0 0.0
        %1548 = vmatprep.subr.mxu0 0.0
        %1549 = vmatpush1.msra.mxu0 0.0
        %1550 = vmatprep.subr.mxu0 0.0
        %1551 = vmatpush1.msra.mxu0 0.0
        %1552 = vmatprep.subr.mxu0 0.0
        %1553 = vmatpush1.msra.mxu0 0.0
        %1554 = vmatprep.subr.mxu0 0.0
        %1555 = vmatpush1.msra.mxu0 0.0
        %1556 = vmatprep.subr.mxu0 0.0
        %1557 = vmatpush1.msra.mxu0 0.0
        %1558 = vmatprep.subr.mxu0 0.0
        %1559 = vmatpush1.msra.mxu0 0.0
        %1560 = vmatprep.mubr.f32.mxu0 0.0
        %1561 = vmatmul.mubr.f32.gmra.mrb[0].mxu0 %v1471
        %v1562 = vpop.f32.mrb[0].mxu0
        %v1563 = vadd.f32 0.0, %v1562
        %v1564 = vpop.f32.mrb[0].mxu0
        %1565 = vmatprep.mubr.f32.mxu0 0.0
        %1566 = vmatmul.mubr.f32.gmra.mrb[0].mxu0 %v1472
        %v1567 = vpop.f32.mrb[0].mxu0
        %v1568 = vadd.f32 0.0, %v1567
        %v1569 = vpop.f32.mrb[0].mxu0
        %1570 = vmatprep.mubr.f32.mxu0 0.0
        %1571 = vmatmul.mubr.f32.gmra.mrb[0].mxu0 %v1473
        %v1572 = vpop.f32.mrb[0].mxu0
        %v1573 = vadd.f32 0.0, %v1572
        %v1574 = vpop.f32.mrb[0].mxu0
        %1575 = vmatprep.mubr.f32.mxu0 0.0
        %1576 = vmatmul.mubr.f32.gmra.mrb[0].mxu0 %v1474
        %v1577 = vpop.f32.mrb[0].mxu0
        %v1578 = vadd.f32 0.0, %v1577
        %v1579 = vpop.f32.mrb[0].mxu0
        %1580 = vmatprep.mubr.f32.mxu0 0.0
        %1581 = vmatmul.mubr.f32.gmra.mrb[0].mxu0 %v1475
        %v1582 = vpop.f32.mrb[0].mxu0
        %v1583 = vadd.f32 0.0, %v1582
        %v1584 = vpop.f32.mrb[0].mxu0
        %1585 = vmatprep.mubr.f32.mxu0 0.0
        %1586 = vmatmul.mubr.f32.gmra.mrb[0].mxu0 %v1476
        %v1587 = vpop.f32.mrb[0].mxu0
        %v1588 = vadd.f32 0.0, %v1587
        %v1589 = vpop.f32.mrb[0].mxu0
        %1590 = vmatprep.mubr.f32.mxu0 0.0
        %1591 = vmatmul.mubr.f32.gmra.mrb[0].mxu0 %v1477
        %v1592 = vpop.f32.mrb[0].mxu0
        %v1593 = vadd.f32 0.0, %v1592
        %v1594 = vpop.f32.mrb[0].mxu0
        %1595 = vmatprep.mubr.f32.mxu0 0.0
        %1596 = vmatmul.mubr.f32.gmra.mrb[0].mxu0 %v1478
        %v1597 = vpop.f32.mrb[0].mxu0
        %v1598 = vadd.f32 0.0, %v1597
        %v1599 = vpop.f32.mrb[0].mxu0
        %1600 = vdwg.mxu0
        %v1601 = vadd.f32 %v1463, %v1563
        %v1602 = vadd.f32 %v1464, %v1568
        %v1603 = vadd.f32 %v1465, %v1573
        %v1604 = vadd.f32 %v1466, %v1578
        %v1605 = vadd.f32 %v1467, %v1583
        %v1606 = vadd.f32 %v1468, %v1588
        %v1607 = vadd.f32 %v1469, %v1593
        %v1608 = vadd.f32 %v1470, %v1598
        %v1609 = vld [vmem:[%s1332 + $0x9] sm:$0xff]
        %v1610 = vld [vmem:[%s1332 + $0x21] sm:$0xff]
        %v1611 = vld [vmem:[%s1332 + $0x39] sm:$0xff]
        %v1612 = vld [vmem:[%s1332 + $0x51] sm:$0xff]
        %v1613 = vld [vmem:[%s1332 + $0x69] sm:$0xff]
        %v1614 = vld [vmem:[%s1332 + $0x81] sm:$0xff]
        %v1615 = vld [vmem:[%s1332 + $0x99] sm:$0xff]
        %v1616 = vld [vmem:[%s1332 + $0xb1] sm:$0xff]
        %s1617 = scalar_lea.vmem [#allocation8], 1024
        %v1618 = vld [vmem:[%s1617] sm:$0xff]
        %v1619 = vld [vmem:[%s1617 + $0x8] sm:$0xff]
        %v1620 = vld [vmem:[%s1617 + $0x10] sm:$0xff]
        %v1621 = vld [vmem:[%s1617 + $0x18] sm:$0xff]
        %v1622 = vld [vmem:[%s1617 + $0x20] sm:$0xff]
        %v1623 = vld [vmem:[%s1617 + $0x28] sm:$0xff]
        %v1624 = vld [vmem:[%s1617 + $0x30] sm:$0xff]
        %v1625 = vld [vmem:[%s1617 + $0x38] sm:$0xff]
        %v1626 = vld [vmem:[%s1617 + $0x40] sm:$0xff]
        %v1627 = vld [vmem:[%s1617 + $0x48] sm:$0xff]
        %v1628 = vld [vmem:[%s1617 + $0x50] sm:$0xff]
        %v1629 = vld [vmem:[%s1617 + $0x58] sm:$0xff]
        %v1630 = vld [vmem:[%s1617 + $0x60] sm:$0xff]
        %v1631 = vld [vmem:[%s1617 + $0x68] sm:$0xff]
        %v1632 = vld [vmem:[%s1617 + $0x70] sm:$0xff]
        %v1633 = vld [vmem:[%s1617 + $0x78] sm:$0xff]
        %1634 = vmatprep.subr.mxu0 0.0
        %1635 = vmatpush1.msra.mxu0 %v1618
        %1636 = vmatprep.subr.mxu0 0.0
        %1637 = vmatpush1.msra.mxu0 %v1619
        %1638 = vmatprep.subr.mxu0 0.0
        %1639 = vmatpush1.msra.mxu0 %v1620
        %1640 = vmatprep.subr.mxu0 0.0
        %1641 = vmatpush1.msra.mxu0 %v1621
        %1642 = vmatprep.subr.mxu0 0.0
        %1643 = vmatpush1.msra.mxu0 %v1622
        %1644 = vmatprep.subr.mxu0 0.0
        %1645 = vmatpush1.msra.mxu0 %v1623
        %1646 = vmatprep.subr.mxu0 0.0
        %1647 = vmatpush1.msra.mxu0 %v1624
        %1648 = vmatprep.subr.mxu0 0.0
        %1649 = vmatpush1.msra.mxu0 %v1625
        %1650 = vmatprep.subr.mxu0 0.0
        %1651 = vmatpush1.msra.mxu0 %v1626
        %1652 = vmatprep.subr.mxu0 0.0
        %1653 = vmatpush1.msra.mxu0 %v1627
        %1654 = vmatprep.subr.mxu0 0.0
        %1655 = vmatpush1.msra.mxu0 %v1628
        %1656 = vmatprep.subr.mxu0 0.0
        %1657 = vmatpush1.msra.mxu0 %v1629
        %1658 = vmatprep.subr.mxu0 0.0
        %1659 = vmatpush1.msra.mxu0 %v1630
        %1660 = vmatprep.subr.mxu0 0.0
        %1661 = vmatpush1.msra.mxu0 %v1631
        %1662 = vmatprep.subr.mxu0 0.0
        %1663 = vmatpush1.msra.mxu0 %v1632
        %1664 = vmatprep.subr.mxu0 0.0
        %1665 = vmatpush1.msra.mxu0 %v1633
        %1666 = vmatprep.subr.mxu0 0.0
        %1667 = vmatpush1.msra.mxu0 0.0
        %1668 = vmatprep.subr.mxu0 0.0
        %1669 = vmatpush1.msra.mxu0 0.0
        %1670 = vmatprep.subr.mxu0 0.0
        %1671 = vmatpush1.msra.mxu0 0.0
        %1672 = vmatprep.subr.mxu0 0.0
        %1673 = vmatpush1.msra.mxu0 0.0
        %1674 = vmatprep.subr.mxu0 0.0
        %1675 = vmatpush1.msra.mxu0 0.0
        %1676 = vmatprep.subr.mxu0 0.0
        %1677 = vmatpush1.msra.mxu0 0.0
        %1678 = vmatprep.subr.mxu0 0.0
        %1679 = vmatpush1.msra.mxu0 0.0
        %1680 = vmatprep.subr.mxu0 0.0
        %1681 = vmatpush1.msra.mxu0 0.0
        %1682 = vmatprep.subr.mxu0 0.0
        %1683 = vmatpush1.msra.mxu0 0.0
        %1684 = vmatprep.subr.mxu0 0.0
        %1685 = vmatpush1.msra.mxu0 0.0
        %1686 = vmatprep.subr.mxu0 0.0
        %1687 = vmatpush1.msra.mxu0 0.0
        %1688 = vmatprep.subr.mxu0 0.0
        %1689 = vmatpush1.msra.mxu0 0.0
        %1690 = vmatprep.subr.mxu0 0.0
        %1691 = vmatpush1.msra.mxu0 0.0
        %1692 = vmatprep.subr.mxu0 0.0
        %1693 = vmatpush1.msra.mxu0 0.0
        %1694 = vmatprep.subr.mxu0 0.0
        %1695 = vmatpush1.msra.mxu0 0.0
        %1696 = vmatprep.subr.mxu0 0.0
        %1697 = vmatpush1.msra.mxu0 0.0
        %1698 = vmatprep.mubr.f32.mxu0 0.0
        %1699 = vmatmul.mubr.f32.gmra.mrb[0].mxu0 %v1609
        %v1700 = vpop.f32.mrb[0].mxu0
        %v1701 = vadd.f32 0.0, %v1700
        %v1702 = vpop.f32.mrb[0].mxu0
        %1703 = vmatprep.mubr.f32.mxu0 0.0
        %1704 = vmatmul.mubr.f32.gmra.mrb[0].mxu0 %v1610
        %v1705 = vpop.f32.mrb[0].mxu0
        %v1706 = vadd.f32 0.0, %v1705
        %v1707 = vpop.f32.mrb[0].mxu0
        %1708 = vmatprep.mubr.f32.mxu0 0.0
        %1709 = vmatmul.mubr.f32.gmra.mrb[0].mxu0 %v1611
        %v1710 = vpop.f32.mrb[0].mxu0
        %v1711 = vadd.f32 0.0, %v1710
        %v1712 = vpop.f32.mrb[0].mxu0
        %1713 = vmatprep.mubr.f32.mxu0 0.0
        %1714 = vmatmul.mubr.f32.gmra.mrb[0].mxu0 %v1612
        %v1715 = vpop.f32.mrb[0].mxu0
        %v1716 = vadd.f32 0.0, %v1715
        %v1717 = vpop.f32.mrb[0].mxu0
        %1718 = vmatprep.mubr.f32.mxu0 0.0
        %1719 = vmatmul.mubr.f32.gmra.mrb[0].mxu0 %v1613
        %v1720 = vpop.f32.mrb[0].mxu0
        %v1721 = vadd.f32 0.0, %v1720
        %v1722 = vpop.f32.mrb[0].mxu0
        %1723 = vmatprep.mubr.f32.mxu0 0.0
        %1724 = vmatmul.mubr.f32.gmra.mrb[0].mxu0 %v1614
        %v1725 = vpop.f32.mrb[0].mxu0
        %v1726 = vadd.f32 0.0, %v1725
        %v1727 = vpop.f32.mrb[0].mxu0
        %1728 = vmatprep.mubr.f32.mxu0 0.0
        %1729 = vmatmul.mubr.f32.gmra.mrb[0].mxu0 %v1615
        %v1730 = vpop.f32.mrb[0].mxu0
        %v1731 = vadd.f32 0.0, %v1730
        %v1732 = vpop.f32.mrb[0].mxu0
        %1733 = vmatprep.mubr.f32.mxu0 0.0
        %1734 = vmatmul.mubr.f32.gmra.mrb[0].mxu0 %v1616
        %v1735 = vpop.f32.mrb[0].mxu0
        %v1736 = vadd.f32 0.0, %v1735
        %v1737 = vpop.f32.mrb[0].mxu0
        %1738 = vdwg.mxu0
        %v1739 = vadd.f32 %v1601, %v1701
        %v1740 = vadd.f32 %v1602, %v1706
        %v1741 = vadd.f32 %v1603, %v1711
        %v1742 = vadd.f32 %v1604, %v1716
        %v1743 = vadd.f32 %v1605, %v1721
        %v1744 = vadd.f32 %v1606, %v1726
        %v1745 = vadd.f32 %v1607, %v1731
        %v1746 = vadd.f32 %v1608, %v1736
        %v1747 = vld [vmem:[%s4] sm:$0x1]
        %v1749 = vlaneseq
        %v1750 = vshrl.u32 %v1749, 7
        %v1751 = vsub.s32 0, %v1750
        %v1752 = vrot.slane %v1747, %v1751
        %v1754 = vadd.f32 %v1739, %v1752
        %v1755 = vadd.f32 %v1740, %v1752
        %v1756 = vadd.f32 %v1741, %v1752
        %v1757 = vadd.f32 %v1742, %v1752
        %v1758 = vadd.f32 %v1743, %v1752
        %v1759 = vadd.f32 %v1744, %v1752
        %v1760 = vadd.f32 %v1745, %v1752
        %v1761 = vadd.f32 %v1746, %v1752
        %v1762 = vmax.f32 %v1754, 0.0
        %v1763 = vmax.f32 %v1755, 0.0
        %v1764 = vmax.f32 %v1756, 0.0
        %v1765 = vmax.f32 %v1757, 0.0
        %v1766 = vmax.f32 %v1758, 0.0
        %v1767 = vmax.f32 %v1759, 0.0
        %v1768 = vmax.f32 %v1760, 0.0
        %v1769 = vmax.f32 %v1761, 0.0
        %v1770 = vld [vmem:[#allocation9] sm:$0xff]
        %v1771 = vld [vmem:[#allocation9 + $0x8] sm:$0xff]
        %v1772 = vld [vmem:[#allocation9 + $0x10] sm:$0xff]
        %v1773 = vld [vmem:[#allocation9 + $0x18] sm:$0xff]
        %v1774 = vld [vmem:[#allocation9 + $0x20] sm:$0xff]
        %v1775 = vld [vmem:[#allocation9 + $0x28] sm:$0xff]
        %v1776 = vld [vmem:[#allocation9 + $0x30] sm:$0xff]
        %v1777 = vld [vmem:[#allocation9 + $0x38] sm:$0xff]
        %v1778 = vld [vmem:[#allocation9 + $0x40] sm:$0xff]
        %v1779 = vld [vmem:[#allocation9 + $0x48] sm:$0xff]
        %v1780 = vld [vmem:[#allocation9 + $0x50] sm:$0xff]
        %v1781 = vld [vmem:[#allocation9 + $0x58] sm:$0xff]
        %v1782 = vld [vmem:[#allocation9 + $0x60] sm:$0xff]
        %v1783 = vld [vmem:[#allocation9 + $0x68] sm:$0xff]
        %v1784 = vld [vmem:[#allocation9 + $0x70] sm:$0xff]
        %v1785 = vld [vmem:[#allocation9 + $0x78] sm:$0xff]
        %v1786 = vld [vmem:[%s6] sm:$0x1]
        %v1788 = vlaneseq
        %v1789 = vshrl.u32 %v1788, 7
        %v1790 = vsub.s32 0, %v1789
        %v1791 = vrot.slane %v1786, %v1790
        %1793 = vmatprep.subr.mxu0 0.0
        %1794 = vmatpush1.msra.mxu0 %v1770
        %1795 = vmatprep.subr.mxu0 0.0
        %1796 = vmatpush1.msra.mxu0 %v1771
        %1797 = vmatprep.subr.mxu0 0.0
        %1798 = vmatpush1.msra.mxu0 %v1772
        %1799 = vmatprep.subr.mxu0 0.0
        %1800 = vmatpush1.msra.mxu0 %v1773
        %1801 = vmatprep.subr.mxu0 0.0
        %1802 = vmatpush1.msra.mxu0 %v1774
        %1803 = vmatprep.subr.mxu0 0.0
        %1804 = vmatpush1.msra.mxu0 %v1775
        %1805 = vmatprep.subr.mxu0 0.0
        %1806 = vmatpush1.msra.mxu0 %v1776
        %1807 = vmatprep.subr.mxu0 0.0
        %1808 = vmatpush1.msra.mxu0 %v1777
        %1809 = vmatprep.subr.mxu0 0.0
        %1810 = vmatpush1.msra.mxu0 %v1778
        %1811 = vmatprep.subr.mxu0 0.0
        %1812 = vmatpush1.msra.mxu0 %v1779
        %1813 = vmatprep.subr.mxu0 0.0
        %1814 = vmatpush1.msra.mxu0 %v1780
        %1815 = vmatprep.subr.mxu0 0.0
        %1816 = vmatpush1.msra.mxu0 %v1781
        %1817 = vmatprep.subr.mxu0 0.0
        %1818 = vmatpush1.msra.mxu0 %v1782
        %1819 = vmatprep.subr.mxu0 0.0
        %1820 = vmatpush1.msra.mxu0 %v1783
        %1821 = vmatprep.subr.mxu0 0.0
        %1822 = vmatpush1.msra.mxu0 %v1784
        %1823 = vmatprep.subr.mxu0 0.0
        %1824 = vmatpush1.msra.mxu0 %v1785
        %1825 = vmatprep.subr.mxu0 0.0
        %1826 = vmatpush1.msra.mxu0 0.0
        %1827 = vmatprep.subr.mxu0 0.0
        %1828 = vmatpush1.msra.mxu0 0.0
        %1829 = vmatprep.subr.mxu0 0.0
        %1830 = vmatpush1.msra.mxu0 0.0
        %1831 = vmatprep.subr.mxu0 0.0
        %1832 = vmatpush1.msra.mxu0 0.0
        %1833 = vmatprep.subr.mxu0 0.0
        %1834 = vmatpush1.msra.mxu0 0.0
        %1835 = vmatprep.subr.mxu0 0.0
        %1836 = vmatpush1.msra.mxu0 0.0
        %1837 = vmatprep.subr.mxu0 0.0
        %1838 = vmatpush1.msra.mxu0 0.0
        %1839 = vmatprep.subr.mxu0 0.0
        %1840 = vmatpush1.msra.mxu0 0.0
        %1841 = vmatprep.subr.mxu0 0.0
        %1842 = vmatpush1.msra.mxu0 0.0
        %1843 = vmatprep.subr.mxu0 0.0
        %1844 = vmatpush1.msra.mxu0 0.0
        %1845 = vmatprep.subr.mxu0 0.0
        %1846 = vmatpush1.msra.mxu0 0.0
        %1847 = vmatprep.subr.mxu0 0.0
        %1848 = vmatpush1.msra.mxu0 0.0
        %1849 = vmatprep.subr.mxu0 0.0
        %1850 = vmatpush1.msra.mxu0 0.0
        %1851 = vmatprep.subr.mxu0 0.0
        %1852 = vmatpush1.msra.mxu0 0.0
        %1853 = vmatprep.subr.mxu0 0.0
        %1854 = vmatpush1.msra.mxu0 0.0
        %1855 = vmatprep.subr.mxu0 0.0
        %1856 = vmatpush1.msra.mxu0 0.0
        %1857 = vmatprep.mubr.f32.mxu0 0.0
        %1858 = vmatmul.mubr.f32.gmra.mrb[0].mxu0 %v1762
        %v1859 = vpop.f32.mrb[0].mxu0
        %v1860 = vadd.f32 %v1791, %v1859
        %v1861 = vpop.f32.mrb[0].mxu0
        %1862 = vmatprep.mubr.f32.mxu0 0.0
        %1863 = vmatmul.mubr.f32.gmra.mrb[0].mxu0 %v1763
        %v1864 = vpop.f32.mrb[0].mxu0
        %v1865 = vadd.f32 %v1791, %v1864
        %v1866 = vpop.f32.mrb[0].mxu0
        %1867 = vmatprep.mubr.f32.mxu0 0.0
        %1868 = vmatmul.mubr.f32.gmra.mrb[0].mxu0 %v1764
        %v1869 = vpop.f32.mrb[0].mxu0
        %v1870 = vadd.f32 %v1791, %v1869
        %v1871 = vpop.f32.mrb[0].mxu0
        %1872 = vmatprep.mubr.f32.mxu0 0.0
        %1873 = vmatmul.mubr.f32.gmra.mrb[0].mxu0 %v1765
        %v1874 = vpop.f32.mrb[0].mxu0
        %v1875 = vadd.f32 %v1791, %v1874
        %v1876 = vpop.f32.mrb[0].mxu0
        %1877 = vmatprep.mubr.f32.mxu0 0.0
        %1878 = vmatmul.mubr.f32.gmra.mrb[0].mxu0 %v1766
        %v1879 = vpop.f32.mrb[0].mxu0
        %v1880 = vadd.f32 %v1791, %v1879
        %v1881 = vpop.f32.mrb[0].mxu0
        %1882 = vmatprep.mubr.f32.mxu0 0.0
        %1883 = vmatmul.mubr.f32.gmra.mrb[0].mxu0 %v1767
        %v1884 = vpop.f32.mrb[0].mxu0
        %v1885 = vadd.f32 %v1791, %v1884
        %v1886 = vpop.f32.mrb[0].mxu0
        %1887 = vmatprep.mubr.f32.mxu0 0.0
        %1888 = vmatmul.mubr.f32.gmra.mrb[0].mxu0 %v1768
        %v1889 = vpop.f32.mrb[0].mxu0
        %v1890 = vadd.f32 %v1791, %v1889
        %v1891 = vpop.f32.mrb[0].mxu0
        %1892 = vmatprep.mubr.f32.mxu0 0.0
        %1893 = vmatmul.mubr.f32.gmra.mrb[0].mxu0 %v1769
        %v1894 = vpop.f32.mrb[0].mxu0
        %v1895 = vadd.f32 %v1791, %v1894
        %v1896 = vpop.f32.mrb[0].mxu0
        %1897 = vdwg.mxu0
        %v1898 = vld [vmem:[%s298] sm:$0xff]
        %v1899 = vld [vmem:[%s298 + $0x8] sm:$0xff]
        %v1900 = vld [vmem:[%s298 + $0x10] sm:$0xff]
        %v1901 = vld [vmem:[%s298 + $0x18] sm:$0xff]
        %v1902 = vld [vmem:[%s298 + $0x20] sm:$0xff]
        %v1903 = vld [vmem:[%s298 + $0x28] sm:$0xff]
        %v1904 = vld [vmem:[%s298 + $0x30] sm:$0xff]
        %v1905 = vld [vmem:[%s298 + $0x38] sm:$0xff]
        %v1906 = vadd.f32 %v1860, %v1898
        %v1907 = vadd.f32 %v1865, %v1899
        %v1908 = vadd.f32 %v1870, %v1900
        %v1909 = vadd.f32 %v1875, %v1901
        %v1910 = vadd.f32 %v1880, %v1902
        %v1911 = vadd.f32 %v1885, %v1903
        %v1912 = vadd.f32 %v1890, %v1904
        %v1913 = vadd.f32 %v1895, %v1905
        %v1914 = vmax.f32 %v1906, 0.0
        %v1915 = vmax.f32 %v1907, 0.0
        %v1916 = vmax.f32 %v1908, 0.0
        %v1917 = vmax.f32 %v1909, 0.0
        %v1918 = vmax.f32 %v1910, 0.0
        %v1919 = vmax.f32 %v1911, 0.0
        %v1920 = vmax.f32 %v1912, 0.0
        %v1921 = vmax.f32 %v1913, 0.0
        %1922 = vst [vmem:[%s340] sm:$0xff] %v1914
        %1923 = vst [vmem:[%s340 + $0x8] sm:$0xff] %v1915
        %1924 = vst [vmem:[%s340 + $0x10] sm:$0xff] %v1916
        %1925 = vst [vmem:[%s340 + $0x18] sm:$0xff] %v1917
        %1926 = vst [vmem:[%s340 + $0x20] sm:$0xff] %v1918
        %1927 = vst [vmem:[%s340 + $0x28] sm:$0xff] %v1919
        %1928 = vst [vmem:[%s340 + $0x30] sm:$0xff] %v1920
        %1929 = vst [vmem:[%s340 + $0x38] sm:$0xff] %v1921
        %s1930 = sand.u32 %s186, 1
        %s1931 = scalar_lea.sflag [#allocation5], %s1930
        %s1932 = sand.u32 %s186, 1
        %s1933 = smul.addr %s1932, 64
        %s1934 = scalar_lea.vmem [#allocation11], %s1933
        // Predicated region
        $region65: #{tpu_custom_call.1} parent=47 // pred_check
          %p1935 = pneg %p196
        $region66: #{tpu_custom_call.1} parent=47 // pred_check_branch
          %1937 = sbr.rel (%p1935) target = $region68
        $region67: #{tpu_custom_call.1} parent=47 // pred_region
          %s1939 = ssub.s32 1024, 1024
          %1940 = vsyncadd %s1931, %s1939
          %s1941 = smul.addr %s26, 8
          %s1942 = smul.addr %s1941, 128
          %s1943 = scalar_lea.hbm %s7, %s1942
          %s1944 = sshll.u32 %s1934, 4
          %s1945 = int_to_ptr.vmem [resolvable:$true] %s1944
          %1950 = dma.vmem_to_hbm [thread:$0]  %s1945, 1024, %s1943, %s1931, 128, 128, 8
        $region68: #{tpu_custom_call.1} parent=47 // pred_fallthru
          _
      $region48: #{tpu_custom_call.1} parent=5 // pred_fallthru
        _
      %p1951 = scmp.le.s32.totalorder 2, %s21
      // Predicated region
      $region69: #{tpu_custom_call.1} parent=5 // pred_check
        %p1952 = pneg %p1951
      $region70: #{tpu_custom_call.1} parent=5 // pred_check_branch
        %1954 = sbr.rel (%p1952) target = $region72
      $region71: #{tpu_custom_call.1} parent=5 // pred_region
        %s1955 = ssub.s32 %s21, 2
        // Predicated region
        $region73: #{tpu_custom_call.1} parent=71 // pred_check
          %p1956 = pneg %p202
        $region74: #{tpu_custom_call.1} parent=71 // pred_check_branch
          %1958 = sbr.rel (%p1956) target = $region76
        $region75: #{tpu_custom_call.1} parent=71 // pred_region
          %s1959 = sand.u32 %s187, 1
          %s1960 = scalar_lea.sflag [#allocation5], %s1959
          %s1961 = sand.u32 %s187, 1
          %s1962 = smul.addr %s1961, 64
          %s1963 = scalar_lea.vmem [#allocation11], %s1962
          %1964 = dma.done %s1960, 1024
        $region76: #{tpu_custom_call.1} parent=71 // pred_fallthru
          _
      $region72: #{tpu_custom_call.1} parent=5 // pred_fallthru
        _
    $region6: #{tpu_custom_call.1} parent=1 // loop_footer
      %s25 = sadd.s32 1, %s21
    $region7: #{tpu_custom_call.1} parent=1 // loop_footer_branch
      %20 = sbr.rel target = $region3
    $region8: #{tpu_custom_call.1} parent=1 // loop_exit
      _
    %1965 = vsyncpa [#allocation4], 1
    %s1966 = scalar_lea.sflag [#allocation4], 1
    %1967 = vsyncpa %s1966, 1
    %1968 = vsyncpa [#allocation7], 1
    %1969 = vsyncpa [#allocation10], 1
    %1970 = vsyncpa [#allocation5], 1
    %s1971 = scalar_lea.sflag [#allocation5], 1
    %1972 = vsyncpa %s1971, 1

</llo_original>
